<compile_context>
chip_gen: v7x
topology: tpu7x:2x2x1
jax: 0.10.0
libtpu: 0.0.40
codegen_flags: <defaults>
</compile_context>

<pallas_src>
import functools

import jax
import jax.numpy as jnp
from jax.experimental import pallas as pl
from jax.experimental.pallas import tpu as pltpu


def _round_up(x, m):
    return ((x + m - 1) // m) * m


# ---------------------------------------------------------------------------
# Single fused kernel: LSTM recurrence + 1x1 conv (+ReLU) + action/value head.
# ---------------------------------------------------------------------------
def _policy_fused_kernel(lens_ref, x_ref, wih_ref, whh_ref, bl_ref,
                         ximg_ref, wconv_ref, bconv_ref,
                         wimg_ref, wtxt_ref, bh_ref,
                         head_ref, h_out_ref, c_out_ref,
                         *, T, B, H, NPIX, NFP):
    f32 = jnp.float32
    lens = lens_ref[...]                                    # (B, 1) int32

    # ---- LSTM: hoisted input projection (one matmul for all T steps) ----
    zx = jnp.dot(x_ref[...], wih_ref[...],
                 preferred_element_type=f32) + bl_ref[...]  # (T*B, 4H)

    whh = whh_ref[...]                                      # (H, 4H)
    h = jnp.zeros((B, H), f32)
    c = jnp.zeros((B, H), f32)

    # Fully unrolled time recurrence inside one grid point (T is a compile-time
    # constant), so there is no per-step pipeline/DMA overhead.
    for t in range(T):
        z = zx[t * B:(t + 1) * B, :] + jnp.dot(
            h.astype(whh.dtype), whh, preferred_element_type=f32)     # (B, 4H)
        # gate order pre-permuted to [i, f, o, g]: one sigmoid + one tanh pass
        sg = jax.nn.sigmoid(z[:, :3 * H])
        g = jnp.tanh(z[:, 3 * H:])
        i_g = sg[:, :H]
        f_g = sg[:, H:2 * H]
        o_g = sg[:, 2 * H:3 * H]
        c_new = f_g * c + i_g * g
        h_new = o_g * jnp.tanh(c_new)
        # pack_padded_sequence semantics: h/c stop updating once t >= length, so
        # the final (h, c) equal nn.LSTM's (ht[-1], ct) on the packed sequence.
        live = lens > t                                     # (B, 1) bool
        h = jnp.where(live, h_new, h)
        c = jnp.where(live, c_new, c)

    # ---- F.relu(Conv2d(1024, nf, k=1, stride)) as a channels-last matmul ----
    # ximg rows are (pixel-major, batch-minor); filter axis padded to NFP lanes.
    conv = jnp.dot(ximg_ref[...], wconv_ref[...],
                   preferred_element_type=f32) + bconv_ref[...]       # (NPIX*B, NFP)
    conv = jnp.maximum(conv, 0.0)

    # ---- split action/value head (no concat, no T/B broadcast) ----
    # head = h @ W_txt + sum_p conv_p @ W_img_p + b ; columns = [logits | value | pad->128]
    wtxt = wtxt_ref[...]
    wimg = wimg_ref[...]
    head = jnp.dot(h.astype(wtxt.dtype), wtxt,
                   preferred_element_type=f32) + bh_ref[...]          # (B, N_pad)
    for p in range(NPIX):
        head = head + jnp.dot(conv[p * B:(p + 1) * B, :].astype(wimg.dtype),
                              wimg[p * NFP:(p + 1) * NFP, :],
                              preferred_element_type=f32)

    head_ref[...] = head           # lane-dense (B, 128·k) store
    h_out_ref[...] = h             # embed_text  (== ht[-1])
    c_out_ref[...] = c             # cell state  (== ct)


# ---------------------------------------------------------------------------
# Model wrapper
# ---------------------------------------------------------------------------
class PolicyLSTMBatchPallas:
    """Forward pass of PolicyLSTMBatch (fusion='cat', condition_answer='none')."""

    def __init__(self, num_tokens, word_emb_size, hidden_size,
                 num_filters=3, kernel_size=1, stride=5,
                 num_tokens_answer=32, mxu_dtype=jnp.float32,
                 key=jax.random.PRNGKey(42)):
        # TODO(synk): kernel_size != 1 would need an im2col gather; module default is 1.
        if kernel_size != 1:
            raise NotImplementedError("only kernel_size=1 (module default) is supported")

        V, E, H, nf = num_tokens, word_emb_size, hidden_size, num_filters
        self.num_tokens = V
        self.word_emb_size = E
        self.hidden_size = H
        self.num_filters = nf
        self.kernel_size = kernel_size
        self.stride = stride
        # mxu_dtype=jnp.bfloat16 recommended on v6e/v7x (f32 accumulation kept);
        # keep f32 on v5e (no bf16 VPU/EUP) and for exact reference numerics.
        self.mxu_dtype = mxu_dtype

        h_out = int((14 + 2 * 0 - 1 * (kernel_size - 1) - 1) / stride + 1)
        self.h_out = h_out
        self.n_pix = h_out * h_out
        self.fusion_dim = nf * self.n_pix + H
        self.nf_pad = _round_up(nf, 8)                 # sublane-aligned filter axis
        self.n_head_pad = _round_up(V + 1, 128)        # lane-dense head output

        ks = jax.random.split(key, 12)
        s = 0.05

        # nn.Embedding(num_tokens, E, padding_idx=0)
        emb = s * jax.random.normal(ks[0], (V, E), jnp.float32)
        self.word_embedding = emb.at[0].set(0.0)
        # nn.Embedding(len_vocab_answer, E) -- unused for condition_answer='none'
        self.answer_embedding = s * jax.random.normal(ks[1], (num_tokens_answer, E),
                                                      jnp.float32)

        # nn.LSTM(E, H): PyTorch gate order [i, f, g, o]; stored transposed (x @ W).
        w_ih_t = s * jax.random.normal(ks[2], (E, 4 * H), jnp.float32)
        w_hh_t = s * jax.random.normal(ks[3], (H, 4 * H), jnp.float32)
        b_lstm = (s * jax.random.normal(ks[4], (4 * H,), jnp.float32)
                  + s * jax.random.normal(ks[5], (4 * H,), jnp.float32))

        # nn.Conv2d(1024, nf, 1, stride): weight (nf, 1024, 1, 1) stored as (1024, nf).
        w_conv = s * jax.random.normal(ks[6], (1024, nf), jnp.float32)
        b_conv = s * jax.random.normal(ks[7], (nf,), jnp.float32)

        # action_head (fusion_dim -> V) and value_head (fusion_dim -> 1), stored transposed.
        # fusion rows: [0, nf*n_pix) = image part in NCHW-flatten order (c*n_pix + p),
        #              [nf*n_pix, fusion_dim) = text (hidden state) part.
        w_act = s * jax.random.normal(ks[8], (self.fusion_dim, V), jnp.float32)
        b_act = s * jax.random.normal(ks[9], (V,), jnp.float32)
        w_val = s * jax.random.normal(ks[10], (self.fusion_dim, 1), jnp.float32)
        b_val = s * jax.random.normal(ks[11], (1,), jnp.float32)

        # ------------- kernel-ready parameter layouts (built once) -------------
        def reorder_gates(w):          # columns [i,f,g,o] -> [i,f,o,g]
            i, f, g, o = jnp.split(w, 4, axis=-1)
            return jnp.concatenate([i, f, o, g], axis=-1)

        md = mxu_dtype
        self.k_wih = reorder_gates(w_ih_t).astype(md)                        # (E, 4H)
        self.k_whh = reorder_gates(w_hh_t).astype(md)                        # (H, 4H)
        self.k_bl = reorder_gates(b_lstm.reshape(1, 4 * H)).astype(jnp.float32)

        self.k_wconv = jnp.pad(w_conv, ((0, 0), (0, self.nf_pad - nf))).astype(md)
        self.k_bconv = jnp.pad(b_conv.reshape(1, nf),
                               ((0, 0), (0, self.nf_pad - nf))).astype(jnp.float32)

        n_img = nf * self.n_pix
        # image rows of the fused [action|value] head, reordered from NCHW-flatten
        # (c*n_pix + p) to pixel-major (p*nf_pad + c), filter axis padded to nf_pad,
        # column axis padded to a multiple of 128 lanes.
        w_img = jnp.concatenate([w_act[:n_img], w_val[:n_img]], axis=1)      # (n_img, V+1)
        w_img = w_img.reshape(nf, self.n_pix, V + 1).transpose(1, 0, 2)      # (n_pix, nf, V+1)
        w_img = jnp.pad(w_img, ((0, 0), (0, self.nf_pad - nf),
                                (0, self.n_head_pad - (V + 1))))
        self.k_wimg = w_img.reshape(self.n_pix * self.nf_pad,
                                    self.n_head_pad).astype(md)

        w_txt = jnp.concatenate([w_act[n_img:], w_val[n_img:]], axis=1)      # (H, V+1)
        self.k_wtxt = jnp.pad(w_txt,
                              ((0, 0), (0, self.n_head_pad - (V + 1)))).astype(md)
        b_head = jnp.concatenate([b_act, b_val]).reshape(1, V + 1)
        self.k_bhead = jnp.pad(b_head,
                               ((0, 0), (0, self.n_head_pad - (V + 1)))).astype(jnp.float32)

        self._fwd = jax.jit(self._forward_impl)

    # -------------------------- jitted core --------------------------
    def _forward_impl(self, state_text, state_img):
        B, T = state_text.shape
        H, E, V = self.hidden_size, self.word_emb_size, self.num_tokens
        Bp = _round_up(max(B, 8), 8)          # pad batch to full sublane groups

        lens = (state_text != 0).sum(axis=1).astype(jnp.int32)               # (B,)
        lens_p = jnp.pad(lens, (0, Bp - B)).reshape(Bp, 1)

        # word embedding gather (padding_idx row is zero) -> time-major, batch-padded
        emb = jnp.take(self.word_embedding, state_text, axis=0)              # (B, T, E)
        x_tbe = jnp.transpose(emb, (1, 0, 2))                                # (T, B, E)
        x_tbe = jnp.pad(x_tbe, ((0, 0), (0, Bp - B), (0, 0)))
        x_flat = x_tbe.reshape(T * Bp, E).astype(self.mxu_dtype)             # (T*Bp, E)

        # image: NCHW -> channels-last, the stride-sampled 1x1-conv pixels,
        # rows ordered (pixel-major, batch-minor) so conv rows slice per pixel.
        stride, h_out = self.stride, self.h_out
        img_nhwc = jnp.transpose(state_img, (0, 2, 3, 1))                    # (B, 14, 14, 1024)
        lim = (h_out - 1) * stride + 1
        sub = img_nhwc[:, :lim:stride, :lim:stride, :]                       # (B, h, w, 1024)
        ximg = sub.reshape(B, self.n_pix, 1024).transpose(1, 0, 2)           # (n_pix, B, 1024)
        ximg = jnp.pad(ximg, ((0, 0), (0, Bp - B), (0, 0)))
        ximg = ximg.reshape(self.n_pix * Bp, 1024).astype(self.mxu_dtype)

        kernel = functools.partial(_policy_fused_kernel, T=T, B=Bp, H=H,
                                   NPIX=self.n_pix, NFP=self.nf_pad)
        vmem = pl.BlockSpec(memory_space=pltpu.MemorySpace.VMEM)
        head, h_last, c_last = pl.pallas_call(
            kernel,
            out_shape=(jax.ShapeDtypeStruct((Bp, self.n_head_pad), jnp.float32),
                       jax.ShapeDtypeStruct((Bp, H), jnp.float32),
                       jax.ShapeDtypeStruct((Bp, H), jnp.float32)),
            in_specs=[vmem] * 11,
            out_specs=(vmem, vmem, vmem),
        )(lens_p, x_flat, self.k_wih, self.k_whh, self.k_bl,
          ximg, self.k_wconv, self.k_bconv,
          self.k_wimg, self.k_wtxt, self.k_bhead)

        logits = head[:B, :V]                 # action_head(embedding)
        value = head[:B, V:V + 1]             # value_head(embedding)
        embed_text = h_last[:B]               # ht[-1] of packed-sequence LSTM
        ct = c_last[:B][None]                 # (1, B, H), like nn.LSTM's ct
        return logits, value, embed_text, ct

    # -------------------------- public API --------------------------
    def forward(self, state_text, state_img, state_answer=None,
                valid_actions=None, logits_lm=0.0, alpha=0.0, ht=None, ct=None):
        logits, value, embed_text, ct_out = self._fwd(state_text, state_img)
        logits_exploration = (1.0 - alpha) * logits + alpha * logits_lm
        probs = jax.nn.softmax(logits_exploration, axis=-1)
        policy_dist = probs                   # Categorical(probs) -> probabilities
        if valid_actions is not None:
            # TODO(synk): mask_inf_truncature over valid_actions not implemented.
            policy_dist_truncated = probs
        else:
            policy_dist_truncated = probs
        return policy_dist, policy_dist_truncated, value, embed_text, ct_out


# --------------------------------- main --------------------------------------
if __name__ == "__main__":
    key = jax.random.PRNGKey(0)
    k_txt, k_img, k_ans = jax.random.split(key, 3)

    B, T = 2, 8
    num_tokens = 32
    word_emb_size = 32
    hidden_size = 32

    # tokens: non-zero prefix, trailing zero padding (lens = [8, 5])
    tokens = jax.random.randint(k_txt, (B, T), 1, num_tokens, dtype=jnp.int32)
    lengths = jnp.array([8, 5], dtype=jnp.int32)
    pos = jnp.arange(T)[None, :]
    state_text = jnp.where(pos < lengths[:, None], tokens, 0)

    state_img = jax.random.normal(k_img, (B, 1024, 14, 14), jnp.float32)
    state_answer = jax.random.randint(k_ans, (B,), 0, 32, dtype=jnp.int32)

    model = PolicyLSTMBatchPallas(num_tokens, word_emb_size, hidden_size)

    policy_dist, policy_dist_trunc, value, embed_text, ct = model.forward(
        state_text, state_img, state_answer)
    policy_dist = jax.block_until_ready(policy_dist)
    value = jax.block_until_ready(value)

    assert policy_dist.shape == (B, num_tokens), policy_dist.shape
    assert policy_dist_trunc.shape == (B, num_tokens), policy_dist_trunc.shape
    assert value.shape == (B, 1), value.shape
    assert embed_text.shape == (B, hidden_size), embed_text.shape
    assert ct.shape == (1, B, hidden_size), ct.shape
    assert bool(jnp.all(jnp.isfinite(policy_dist)))
    assert bool(jnp.all(jnp.isfinite(value)))
    print("KERNEL_OK")
</pallas_src>

<mosaic_0001>
module attributes {stable_mosaic.version = 11 : i64} {
  func.func @_policy_fused_kernel(%arg0: memref<8x1xi32, #tpu.memory_space<vmem>>, %arg1: memref<64x32xf32, #tpu.memory_space<vmem>>, %arg2: memref<32x128xf32, #tpu.memory_space<vmem>>, %arg3: memref<32x128xf32, #tpu.memory_space<vmem>>, %arg4: memref<1x128xf32, #tpu.memory_space<vmem>>, %arg5: memref<72x1024xf32, #tpu.memory_space<vmem>>, %arg6: memref<1024x8xf32, #tpu.memory_space<vmem>>, %arg7: memref<1x8xf32, #tpu.memory_space<vmem>>, %arg8: memref<72x128xf32, #tpu.memory_space<vmem>>, %arg9: memref<32x128xf32, #tpu.memory_space<vmem>>, %arg10: memref<1x128xf32, #tpu.memory_space<vmem>>, %arg11: memref<8x128xf32, #tpu.memory_space<vmem>>, %arg12: memref<8x32xf32, #tpu.memory_space<vmem>>, %arg13: memref<8x32xf32, #tpu.memory_space<vmem>>) attributes {dimension_semantics = [], scalar_prefetch = 0 : i64, scratch_operands = 0 : i64, tpu.core_type = #tpu.core_type<tc>} {
    %c0 = arith.constant 0 : index
    %c0_0 = arith.constant 0 : index
    %0 = vector.load %arg0[%c0, %c0_0] : memref<8x1xi32, #tpu.memory_space<vmem>>, vector<8x1xi32>
    %c0_1 = arith.constant 0 : index
    %c0_2 = arith.constant 0 : index
    %1 = vector.load %arg1[%c0_1, %c0_2] : memref<64x32xf32, #tpu.memory_space<vmem>>, vector<64x32xf32>
    %c0_3 = arith.constant 0 : index
    %c0_4 = arith.constant 0 : index
    %2 = vector.load %arg2[%c0_3, %c0_4] : memref<32x128xf32, #tpu.memory_space<vmem>>, vector<32x128xf32>
    %cst = arith.constant dense<0.000000e+00> : vector<64x128xf32>
    %3 = tpu.matmul %1, %2, %cst {dimension_numbers = #tpu.dot_dimension_numbers<[1], [0], [0], [1], [0, 0, 1, 1], [], []>} : vector<64x32xf32>, vector<32x128xf32>, vector<64x128xf32> -> vector<64x128xf32>
    %c0_5 = arith.constant 0 : index
    %c0_6 = arith.constant 0 : index
    %4 = vector.load %arg4[%c0_5, %c0_6] : memref<1x128xf32, #tpu.memory_space<vmem>>, vector<1x128xf32>
    %5 = vector.broadcast %4 : vector<1x128xf32> to vector<64x128xf32>
    %6 = arith.addf %3, %5 : vector<64x128xf32>
    %c0_7 = arith.constant 0 : index
    %c0_8 = arith.constant 0 : index
    %7 = vector.load %arg3[%c0_7, %c0_8] : memref<32x128xf32, #tpu.memory_space<vmem>>, vector<32x128xf32>
    %cst_9 = arith.constant 0.000000e+00 : f32
    %8 = vector.broadcast %cst_9 : f32 to vector<8x32xf32>
    %cst_10 = arith.constant 0.000000e+00 : f32
    %9 = vector.broadcast %cst_10 : f32 to vector<8x32xf32>
    %10 = vector.extract_strided_slice %6 {offsets = [0, 0], sizes = [8, 128], strides = [1, 1]} : vector<64x128xf32> to vector<8x128xf32>
    %cst_11 = arith.constant dense<0.000000e+00> : vector<8x128xf32>
    %11 = tpu.matmul %8, %7, %cst_11 {dimension_numbers = #tpu.dot_dimension_numbers<[1], [0], [0], [1], [0, 0, 1, 1], [], []>} : vector<8x32xf32>, vector<32x128xf32>, vector<8x128xf32> -> vector<8x128xf32>
    %12 = arith.addf %10, %11 : vector<8x128xf32>
    %13 = vector.extract_strided_slice %12 {offsets = [0, 0], sizes = [8, 96], strides = [1, 1]} : vector<8x128xf32> to vector<8x96xf32>
    %14 = arith.negf %13 : vector<8x96xf32>
    %15 = math.exp %14 : vector<8x96xf32>
    %cst_12 = arith.constant 1.000000e+00 : f32
    %16 = vector.broadcast %cst_12 : f32 to vector<8x96xf32>
    %17 = arith.addf %16, %15 : vector<8x96xf32>
    %18 = arith.divf %16, %17 : vector<8x96xf32>
    %19 = vector.extract_strided_slice %12 {offsets = [0, 96], sizes = [8, 32], strides = [1, 1]} : vector<8x128xf32> to vector<8x32xf32>
    %20 = math.tanh %19 : vector<8x32xf32>
    %21 = vector.extract_strided_slice %18 {offsets = [0, 0], sizes = [8, 32], strides = [1, 1]} : vector<8x96xf32> to vector<8x32xf32>
    %22 = vector.extract_strided_slice %18 {offsets = [0, 32], sizes = [8, 32], strides = [1, 1]} : vector<8x96xf32> to vector<8x32xf32>
    %23 = vector.extract_strided_slice %18 {offsets = [0, 64], sizes = [8, 32], strides = [1, 1]} : vector<8x96xf32> to vector<8x32xf32>
    %24 = arith.mulf %22, %9 : vector<8x32xf32>
    %25 = arith.mulf %21, %20 : vector<8x32xf32>
    %26 = arith.addf %24, %25 : vector<8x32xf32>
    %27 = math.tanh %26 : vector<8x32xf32>
    %28 = arith.mulf %23, %27 : vector<8x32xf32>
    %c0_i32 = arith.constant 0 : i32
    %29 = vector.broadcast %c0_i32 : i32 to vector<8x1xi32>
    %30 = arith.cmpi sgt, %0, %29 : vector<8x1xi32>
    %31 = vector.shape_cast %30 : vector<8x1xi1> to vector<8x1xi1>
    %32 = vector.broadcast %31 : vector<8x1xi1> to vector<8x32xi1>
    %33 = arith.select %32, %28, %8 : vector<8x32xi1>, vector<8x32xf32>
    %34 = vector.shape_cast %30 : vector<8x1xi1> to vector<8x1xi1>
    %35 = vector.broadcast %34 : vector<8x1xi1> to vector<8x32xi1>
    %36 = arith.select %35, %26, %9 : vector<8x32xi1>, vector<8x32xf32>
    %37 = vector.extract_strided_slice %6 {offsets = [8, 0], sizes = [8, 128], strides = [1, 1]} : vector<64x128xf32> to vector<8x128xf32>
    %cst_13 = arith.constant dense<0.000000e+00> : vector<8x128xf32>
    %38 = tpu.matmul %33, %7, %cst_13 {dimension_numbers = #tpu.dot_dimension_numbers<[1], [0], [0], [1], [0, 0, 1, 1], [], []>} : vector<8x32xf32>, vector<32x128xf32>, vector<8x128xf32> -> vector<8x128xf32>
    %39 = arith.addf %37, %38 : vector<8x128xf32>
    %40 = vector.extract_strided_slice %39 {offsets = [0, 0], sizes = [8, 96], strides = [1, 1]} : vector<8x128xf32> to vector<8x96xf32>
    %41 = arith.negf %40 : vector<8x96xf32>
    %42 = math.exp %41 : vector<8x96xf32>
    %cst_14 = arith.constant 1.000000e+00 : f32
    %43 = vector.broadcast %cst_14 : f32 to vector<8x96xf32>
    %44 = arith.addf %43, %42 : vector<8x96xf32>
    %45 = arith.divf %43, %44 : vector<8x96xf32>
    %46 = vector.extract_strided_slice %39 {offsets = [0, 96], sizes = [8, 32], strides = [1, 1]} : vector<8x128xf32> to vector<8x32xf32>
    %47 = math.tanh %46 : vector<8x32xf32>
    %48 = vector.extract_strided_slice %45 {offsets = [0, 0], sizes = [8, 32], strides = [1, 1]} : vector<8x96xf32> to vector<8x32xf32>
    %49 = vector.extract_strided_slice %45 {offsets = [0, 32], sizes = [8, 32], strides = [1, 1]} : vector<8x96xf32> to vector<8x32xf32>
    %50 = vector.extract_strided_slice %45 {offsets = [0, 64], sizes = [8, 32], strides = [1, 1]} : vector<8x96xf32> to vector<8x32xf32>
    %51 = arith.mulf %49, %36 : vector<8x32xf32>
    %52 = arith.mulf %48, %47 : vector<8x32xf32>
    %53 = arith.addf %51, %52 : vector<8x32xf32>
    %54 = math.tanh %53 : vector<8x32xf32>
    %55 = arith.mulf %50, %54 : vector<8x32xf32>
    %c1_i32 = arith.constant 1 : i32
    %56 = vector.broadcast %c1_i32 : i32 to vector<8x1xi32>
    %57 = arith.cmpi sgt, %0, %56 : vector<8x1xi32>
    %58 = vector.shape_cast %57 : vector<8x1xi1> to vector<8x1xi1>
    %59 = vector.broadcast %58 : vector<8x1xi1> to vector<8x32xi1>
    %60 = arith.select %59, %55, %33 : vector<8x32xi1>, vector<8x32xf32>
    %61 = vector.shape_cast %57 : vector<8x1xi1> to vector<8x1xi1>
    %62 = vector.broadcast %61 : vector<8x1xi1> to vector<8x32xi1>
    %63 = arith.select %62, %53, %36 : vector<8x32xi1>, vector<8x32xf32>
    %64 = vector.extract_strided_slice %6 {offsets = [16, 0], sizes = [8, 128], strides = [1, 1]} : vector<64x128xf32> to vector<8x128xf32>
    %cst_15 = arith.constant dense<0.000000e+00> : vector<8x128xf32>
    %65 = tpu.matmul %60, %7, %cst_15 {dimension_numbers = #tpu.dot_dimension_numbers<[1], [0], [0], [1], [0, 0, 1, 1], [], []>} : vector<8x32xf32>, vector<32x128xf32>, vector<8x128xf32> -> vector<8x128xf32>
    %66 = arith.addf %64, %65 : vector<8x128xf32>
    %67 = vector.extract_strided_slice %66 {offsets = [0, 0], sizes = [8, 96], strides = [1, 1]} : vector<8x128xf32> to vector<8x96xf32>
    %68 = arith.negf %67 : vector<8x96xf32>
    %69 = math.exp %68 : vector<8x96xf32>
    %cst_16 = arith.constant 1.000000e+00 : f32
    %70 = vector.broadcast %cst_16 : f32 to vector<8x96xf32>
    %71 = arith.addf %70, %69 : vector<8x96xf32>
    %72 = arith.divf %70, %71 : vector<8x96xf32>
    %73 = vector.extract_strided_slice %66 {offsets = [0, 96], sizes = [8, 32], strides = [1, 1]} : vector<8x128xf32> to vector<8x32xf32>
    %74 = math.tanh %73 : vector<8x32xf32>
    %75 = vector.extract_strided_slice %72 {offsets = [0, 0], sizes = [8, 32], strides = [1, 1]} : vector<8x96xf32> to vector<8x32xf32>
    %76 = vector.extract_strided_slice %72 {offsets = [0, 32], sizes = [8, 32], strides = [1, 1]} : vector<8x96xf32> to vector<8x32xf32>
    %77 = vector.extract_strided_slice %72 {offsets = [0, 64], sizes = [8, 32], strides = [1, 1]} : vector<8x96xf32> to vector<8x32xf32>
    %78 = arith.mulf %76, %63 : vector<8x32xf32>
    %79 = arith.mulf %75, %74 : vector<8x32xf32>
    %80 = arith.addf %78, %79 : vector<8x32xf32>
    %81 = math.tanh %80 : vector<8x32xf32>
    %82 = arith.mulf %77, %81 : vector<8x32xf32>
    %c2_i32 = arith.constant 2 : i32
    %83 = vector.broadcast %c2_i32 : i32 to vector<8x1xi32>
    %84 = arith.cmpi sgt, %0, %83 : vector<8x1xi32>
    %85 = vector.shape_cast %84 : vector<8x1xi1> to vector<8x1xi1>
    %86 = vector.broadcast %85 : vector<8x1xi1> to vector<8x32xi1>
    %87 = arith.select %86, %82, %60 : vector<8x32xi1>, vector<8x32xf32>
    %88 = vector.shape_cast %84 : vector<8x1xi1> to vector<8x1xi1>
    %89 = vector.broadcast %88 : vector<8x1xi1> to vector<8x32xi1>
    %90 = arith.select %89, %80, %63 : vector<8x32xi1>, vector<8x32xf32>
    %91 = vector.extract_strided_slice %6 {offsets = [24, 0], sizes = [8, 128], strides = [1, 1]} : vector<64x128xf32> to vector<8x128xf32>
    %cst_17 = arith.constant dense<0.000000e+00> : vector<8x128xf32>
    %92 = tpu.matmul %87, %7, %cst_17 {dimension_numbers = #tpu.dot_dimension_numbers<[1], [0], [0], [1], [0, 0, 1, 1], [], []>} : vector<8x32xf32>, vector<32x128xf32>, vector<8x128xf32> -> vector<8x128xf32>
    %93 = arith.addf %91, %92 : vector<8x128xf32>
    %94 = vector.extract_strided_slice %93 {offsets = [0, 0], sizes = [8, 96], strides = [1, 1]} : vector<8x128xf32> to vector<8x96xf32>
    %95 = arith.negf %94 : vector<8x96xf32>
    %96 = math.exp %95 : vector<8x96xf32>
    %cst_18 = arith.constant 1.000000e+00 : f32
    %97 = vector.broadcast %cst_18 : f32 to vector<8x96xf32>
    %98 = arith.addf %97, %96 : vector<8x96xf32>
    %99 = arith.divf %97, %98 : vector<8x96xf32>
    %100 = vector.extract_strided_slice %93 {offsets = [0, 96], sizes = [8, 32], strides = [1, 1]} : vector<8x128xf32> to vector<8x32xf32>
    %101 = math.tanh %100 : vector<8x32xf32>
    %102 = vector.extract_strided_slice %99 {offsets = [0, 0], sizes = [8, 32], strides = [1, 1]} : vector<8x96xf32> to vector<8x32xf32>
    %103 = vector.extract_strided_slice %99 {offsets = [0, 32], sizes = [8, 32], strides = [1, 1]} : vector<8x96xf32> to vector<8x32xf32>
    %104 = vector.extract_strided_slice %99 {offsets = [0, 64], sizes = [8, 32], strides = [1, 1]} : vector<8x96xf32> to vector<8x32xf32>
    %105 = arith.mulf %103, %90 : vector<8x32xf32>
    %106 = arith.mulf %102, %101 : vector<8x32xf32>
    %107 = arith.addf %105, %106 : vector<8x32xf32>
    %108 = math.tanh %107 : vector<8x32xf32>
    %109 = arith.mulf %104, %108 : vector<8x32xf32>
    %c3_i32 = arith.constant 3 : i32
    %110 = vector.broadcast %c3_i32 : i32 to vector<8x1xi32>
    %111 = arith.cmpi sgt, %0, %110 : vector<8x1xi32>
    %112 = vector.shape_cast %111 : vector<8x1xi1> to vector<8x1xi1>
    %113 = vector.broadcast %112 : vector<8x1xi1> to vector<8x32xi1>
    %114 = arith.select %113, %109, %87 : vector<8x32xi1>, vector<8x32xf32>
    %115 = vector.shape_cast %111 : vector<8x1xi1> to vector<8x1xi1>
    %116 = vector.broadcast %115 : vector<8x1xi1> to vector<8x32xi1>
    %117 = arith.select %116, %107, %90 : vector<8x32xi1>, vector<8x32xf32>
    %118 = vector.extract_strided_slice %6 {offsets = [32, 0], sizes = [8, 128], strides = [1, 1]} : vector<64x128xf32> to vector<8x128xf32>
    %cst_19 = arith.constant dense<0.000000e+00> : vector<8x128xf32>
    %119 = tpu.matmul %114, %7, %cst_19 {dimension_numbers = #tpu.dot_dimension_numbers<[1], [0], [0], [1], [0, 0, 1, 1], [], []>} : vector<8x32xf32>, vector<32x128xf32>, vector<8x128xf32> -> vector<8x128xf32>
    %120 = arith.addf %118, %119 : vector<8x128xf32>
    %121 = vector.extract_strided_slice %120 {offsets = [0, 0], sizes = [8, 96], strides = [1, 1]} : vector<8x128xf32> to vector<8x96xf32>
    %122 = arith.negf %121 : vector<8x96xf32>
    %123 = math.exp %122 : vector<8x96xf32>
    %cst_20 = arith.constant 1.000000e+00 : f32
    %124 = vector.broadcast %cst_20 : f32 to vector<8x96xf32>
    %125 = arith.addf %124, %123 : vector<8x96xf32>
    %126 = arith.divf %124, %125 : vector<8x96xf32>
    %127 = vector.extract_strided_slice %120 {offsets = [0, 96], sizes = [8, 32], strides = [1, 1]} : vector<8x128xf32> to vector<8x32xf32>
    %128 = math.tanh %127 : vector<8x32xf32>
    %129 = vector.extract_strided_slice %126 {offsets = [0, 0], sizes = [8, 32], strides = [1, 1]} : vector<8x96xf32> to vector<8x32xf32>
    %130 = vector.extract_strided_slice %126 {offsets = [0, 32], sizes = [8, 32], strides = [1, 1]} : vector<8x96xf32> to vector<8x32xf32>
    %131 = vector.extract_strided_slice %126 {offsets = [0, 64], sizes = [8, 32], strides = [1, 1]} : vector<8x96xf32> to vector<8x32xf32>
    %132 = arith.mulf %130, %117 : vector<8x32xf32>
    %133 = arith.mulf %129, %128 : vector<8x32xf32>
    %134 = arith.addf %132, %133 : vector<8x32xf32>
    %135 = math.tanh %134 : vector<8x32xf32>
    %136 = arith.mulf %131, %135 : vector<8x32xf32>
    %c4_i32 = arith.constant 4 : i32
    %137 = vector.broadcast %c4_i32 : i32 to vector<8x1xi32>
    %138 = arith.cmpi sgt, %0, %137 : vector<8x1xi32>
    %139 = vector.shape_cast %138 : vector<8x1xi1> to vector<8x1xi1>
    %140 = vector.broadcast %139 : vector<8x1xi1> to vector<8x32xi1>
    %141 = arith.select %140, %136, %114 : vector<8x32xi1>, vector<8x32xf32>
    %142 = vector.shape_cast %138 : vector<8x1xi1> to vector<8x1xi1>
    %143 = vector.broadcast %142 : vector<8x1xi1> to vector<8x32xi1>
    %144 = arith.select %143, %134, %117 : vector<8x32xi1>, vector<8x32xf32>
    %145 = vector.extract_strided_slice %6 {offsets = [40, 0], sizes = [8, 128], strides = [1, 1]} : vector<64x128xf32> to vector<8x128xf32>
    %cst_21 = arith.constant dense<0.000000e+00> : vector<8x128xf32>
    %146 = tpu.matmul %141, %7, %cst_21 {dimension_numbers = #tpu.dot_dimension_numbers<[1], [0], [0], [1], [0, 0, 1, 1], [], []>} : vector<8x32xf32>, vector<32x128xf32>, vector<8x128xf32> -> vector<8x128xf32>
    %147 = arith.addf %145, %146 : vector<8x128xf32>
    %148 = vector.extract_strided_slice %147 {offsets = [0, 0], sizes = [8, 96], strides = [1, 1]} : vector<8x128xf32> to vector<8x96xf32>
    %149 = arith.negf %148 : vector<8x96xf32>
    %150 = math.exp %149 : vector<8x96xf32>
    %cst_22 = arith.constant 1.000000e+00 : f32
    %151 = vector.broadcast %cst_22 : f32 to vector<8x96xf32>
    %152 = arith.addf %151, %150 : vector<8x96xf32>
    %153 = arith.divf %151, %152 : vector<8x96xf32>
    %154 = vector.extract_strided_slice %147 {offsets = [0, 96], sizes = [8, 32], strides = [1, 1]} : vector<8x128xf32> to vector<8x32xf32>
    %155 = math.tanh %154 : vector<8x32xf32>
    %156 = vector.extract_strided_slice %153 {offsets = [0, 0], sizes = [8, 32], strides = [1, 1]} : vector<8x96xf32> to vector<8x32xf32>
    %157 = vector.extract_strided_slice %153 {offsets = [0, 32], sizes = [8, 32], strides = [1, 1]} : vector<8x96xf32> to vector<8x32xf32>
    %158 = vector.extract_strided_slice %153 {offsets = [0, 64], sizes = [8, 32], strides = [1, 1]} : vector<8x96xf32> to vector<8x32xf32>
    %159 = arith.mulf %157, %144 : vector<8x32xf32>
    %160 = arith.mulf %156, %155 : vector<8x32xf32>
    %161 = arith.addf %159, %160 : vector<8x32xf32>
    %162 = math.tanh %161 : vector<8x32xf32>
    %163 = arith.mulf %158, %162 : vector<8x32xf32>
    %c5_i32 = arith.constant 5 : i32
    %164 = vector.broadcast %c5_i32 : i32 to vector<8x1xi32>
    %165 = arith.cmpi sgt, %0, %164 : vector<8x1xi32>
    %166 = vector.shape_cast %165 : vector<8x1xi1> to vector<8x1xi1>
    %167 = vector.broadcast %166 : vector<8x1xi1> to vector<8x32xi1>
    %168 = arith.select %167, %163, %141 : vector<8x32xi1>, vector<8x32xf32>
    %169 = vector.shape_cast %165 : vector<8x1xi1> to vector<8x1xi1>
    %170 = vector.broadcast %169 : vector<8x1xi1> to vector<8x32xi1>
    %171 = arith.select %170, %161, %144 : vector<8x32xi1>, vector<8x32xf32>
    %172 = vector.extract_strided_slice %6 {offsets = [48, 0], sizes = [8, 128], strides = [1, 1]} : vector<64x128xf32> to vector<8x128xf32>
    %cst_23 = arith.constant dense<0.000000e+00> : vector<8x128xf32>
    %173 = tpu.matmul %168, %7, %cst_23 {dimension_numbers = #tpu.dot_dimension_numbers<[1], [0], [0], [1], [0, 0, 1, 1], [], []>} : vector<8x32xf32>, vector<32x128xf32>, vector<8x128xf32> -> vector<8x128xf32>
    %174 = arith.addf %172, %173 : vector<8x128xf32>
    %175 = vector.extract_strided_slice %174 {offsets = [0, 0], sizes = [8, 96], strides = [1, 1]} : vector<8x128xf32> to vector<8x96xf32>
    %176 = arith.negf %175 : vector<8x96xf32>
    %177 = math.exp %176 : vector<8x96xf32>
    %cst_24 = arith.constant 1.000000e+00 : f32
    %178 = vector.broadcast %cst_24 : f32 to vector<8x96xf32>
    %179 = arith.addf %178, %177 : vector<8x96xf32>
    %180 = arith.divf %178, %179 : vector<8x96xf32>
    %181 = vector.extract_strided_slice %174 {offsets = [0, 96], sizes = [8, 32], strides = [1, 1]} : vector<8x128xf32> to vector<8x32xf32>
    %182 = math.tanh %181 : vector<8x32xf32>
    %183 = vector.extract_strided_slice %180 {offsets = [0, 0], sizes = [8, 32], strides = [1, 1]} : vector<8x96xf32> to vector<8x32xf32>
    %184 = vector.extract_strided_slice %180 {offsets = [0, 32], sizes = [8, 32], strides = [1, 1]} : vector<8x96xf32> to vector<8x32xf32>
    %185 = vector.extract_strided_slice %180 {offsets = [0, 64], sizes = [8, 32], strides = [1, 1]} : vector<8x96xf32> to vector<8x32xf32>
    %186 = arith.mulf %184, %171 : vector<8x32xf32>
    %187 = arith.mulf %183, %182 : vector<8x32xf32>
    %188 = arith.addf %186, %187 : vector<8x32xf32>
    %189 = math.tanh %188 : vector<8x32xf32>
    %190 = arith.mulf %185, %189 : vector<8x32xf32>
    %c6_i32 = arith.constant 6 : i32
    %191 = vector.broadcast %c6_i32 : i32 to vector<8x1xi32>
    %192 = arith.cmpi sgt, %0, %191 : vector<8x1xi32>
    %193 = vector.shape_cast %192 : vector<8x1xi1> to vector<8x1xi1>
    %194 = vector.broadcast %193 : vector<8x1xi1> to vector<8x32xi1>
    %195 = arith.select %194, %190, %168 : vector<8x32xi1>, vector<8x32xf32>
    %196 = vector.shape_cast %192 : vector<8x1xi1> to vector<8x1xi1>
    %197 = vector.broadcast %196 : vector<8x1xi1> to vector<8x32xi1>
    %198 = arith.select %197, %188, %171 : vector<8x32xi1>, vector<8x32xf32>
    %199 = vector.extract_strided_slice %6 {offsets = [56, 0], sizes = [8, 128], strides = [1, 1]} : vector<64x128xf32> to vector<8x128xf32>
    %cst_25 = arith.constant dense<0.000000e+00> : vector<8x128xf32>
    %200 = tpu.matmul %195, %7, %cst_25 {dimension_numbers = #tpu.dot_dimension_numbers<[1], [0], [0], [1], [0, 0, 1, 1], [], []>} : vector<8x32xf32>, vector<32x128xf32>, vector<8x128xf32> -> vector<8x128xf32>
    %201 = arith.addf %199, %200 : vector<8x128xf32>
    %202 = vector.extract_strided_slice %201 {offsets = [0, 0], sizes = [8, 96], strides = [1, 1]} : vector<8x128xf32> to vector<8x96xf32>
    %203 = arith.negf %202 : vector<8x96xf32>
    %204 = math.exp %203 : vector<8x96xf32>
    %cst_26 = arith.constant 1.000000e+00 : f32
    %205 = vector.broadcast %cst_26 : f32 to vector<8x96xf32>
    %206 = arith.addf %205, %204 : vector<8x96xf32>
    %207 = arith.divf %205, %206 : vector<8x96xf32>
    %208 = vector.extract_strided_slice %201 {offsets = [0, 96], sizes = [8, 32], strides = [1, 1]} : vector<8x128xf32> to vector<8x32xf32>
    %209 = math.tanh %208 : vector<8x32xf32>
    %210 = vector.extract_strided_slice %207 {offsets = [0, 0], sizes = [8, 32], strides = [1, 1]} : vector<8x96xf32> to vector<8x32xf32>
    %211 = vector.extract_strided_slice %207 {offsets = [0, 32], sizes = [8, 32], strides = [1, 1]} : vector<8x96xf32> to vector<8x32xf32>
    %212 = vector.extract_strided_slice %207 {offsets = [0, 64], sizes = [8, 32], strides = [1, 1]} : vector<8x96xf32> to vector<8x32xf32>
    %213 = arith.mulf %211, %198 : vector<8x32xf32>
    %214 = arith.mulf %210, %209 : vector<8x32xf32>
    %215 = arith.addf %213, %214 : vector<8x32xf32>
    %216 = math.tanh %215 : vector<8x32xf32>
    %217 = arith.mulf %212, %216 : vector<8x32xf32>
    %c7_i32 = arith.constant 7 : i32
    %218 = vector.broadcast %c7_i32 : i32 to vector<8x1xi32>
    %219 = arith.cmpi sgt, %0, %218 : vector<8x1xi32>
    %220 = vector.shape_cast %219 : vector<8x1xi1> to vector<8x1xi1>
    %221 = vector.broadcast %220 : vector<8x1xi1> to vector<8x32xi1>
    %222 = arith.select %221, %217, %195 : vector<8x32xi1>, vector<8x32xf32>
    %223 = vector.shape_cast %219 : vector<8x1xi1> to vector<8x1xi1>
    %224 = vector.broadcast %223 : vector<8x1xi1> to vector<8x32xi1>
    %225 = arith.select %224, %215, %198 : vector<8x32xi1>, vector<8x32xf32>
    %c0_27 = arith.constant 0 : index
    %c0_28 = arith.constant 0 : index
    %226 = vector.load %arg5[%c0_27, %c0_28] : memref<72x1024xf32, #tpu.memory_space<vmem>>, vector<72x1024xf32>
    %c0_29 = arith.constant 0 : index
    %c0_30 = arith.constant 0 : index
    %227 = vector.load %arg6[%c0_29, %c0_30] : memref<1024x8xf32, #tpu.memory_space<vmem>>, vector<1024x8xf32>
    %cst_31 = arith.constant dense<0.000000e+00> : vector<72x8xf32>
    %228 = tpu.matmul %226, %227, %cst_31 {dimension_numbers = #tpu.dot_dimension_numbers<[1], [0], [0], [1], [0, 0, 1, 1], [], []>} : vector<72x1024xf32>, vector<1024x8xf32>, vector<72x8xf32> -> vector<72x8xf32>
    %c0_32 = arith.constant 0 : index
    %c0_33 = arith.constant 0 : index
    %229 = vector.load %arg7[%c0_32, %c0_33] : memref<1x8xf32, #tpu.memory_space<vmem>>, vector<1x8xf32>
    %230 = vector.broadcast %229 : vector<1x8xf32> to vector<72x8xf32>
    %231 = arith.addf %228, %230 : vector<72x8xf32>
    %cst_34 = arith.constant 0.000000e+00 : f32
    %232 = vector.broadcast %cst_34 : f32 to vector<72x8xf32>
    %233 = arith.maximumf %231, %232 : vector<72x8xf32>
    %c0_35 = arith.constant 0 : index
    %c0_36 = arith.constant 0 : index
    %234 = vector.load %arg9[%c0_35, %c0_36] : memref<32x128xf32, #tpu.memory_space<vmem>>, vector<32x128xf32>
    %c0_37 = arith.constant 0 : index
    %c0_38 = arith.constant 0 : index
    %235 = vector.load %arg8[%c0_37, %c0_38] : memref<72x128xf32, #tpu.memory_space<vmem>>, vector<72x128xf32>
    %cst_39 = arith.constant dense<0.000000e+00> : vector<8x128xf32>
    %236 = tpu.matmul %222, %234, %cst_39 {dimension_numbers = #tpu.dot_dimension_numbers<[1], [0], [0], [1], [0, 0, 1, 1], [], []>} : vector<8x32xf32>, vector<32x128xf32>, vector<8x128xf32> -> vector<8x128xf32>
    %c0_40 = arith.constant 0 : index
    %c0_41 = arith.constant 0 : index
    %237 = vector.load %arg10[%c0_40, %c0_41] : memref<1x128xf32, #tpu.memory_space<vmem>>, vector<1x128xf32>
    %238 = vector.broadcast %237 : vector<1x128xf32> to vector<8x128xf32>
    %239 = arith.addf %236, %238 : vector<8x128xf32>
    %240 = vector.extract_strided_slice %233 {offsets = [0, 0], sizes = [8, 8], strides = [1, 1]} : vector<72x8xf32> to vector<8x8xf32>
    %241 = vector.extract_strided_slice %235 {offsets = [0, 0], sizes = [8, 128], strides = [1, 1]} : vector<72x128xf32> to vector<8x128xf32>
    %cst_42 = arith.constant dense<0.000000e+00> : vector<8x128xf32>
    %242 = tpu.matmul %240, %241, %cst_42 {dimension_numbers = #tpu.dot_dimension_numbers<[1], [0], [0], [1], [0, 0, 1, 1], [], []>} : vector<8x8xf32>, vector<8x128xf32>, vector<8x128xf32> -> vector<8x128xf32>
    %243 = arith.addf %239, %242 : vector<8x128xf32>
    %244 = vector.extract_strided_slice %233 {offsets = [8, 0], sizes = [8, 8], strides = [1, 1]} : vector<72x8xf32> to vector<8x8xf32>
    %245 = vector.extract_strided_slice %235 {offsets = [8, 0], sizes = [8, 128], strides = [1, 1]} : vector<72x128xf32> to vector<8x128xf32>
    %cst_43 = arith.constant dense<0.000000e+00> : vector<8x128xf32>
    %246 = tpu.matmul %244, %245, %cst_43 {dimension_numbers = #tpu.dot_dimension_numbers<[1], [0], [0], [1], [0, 0, 1, 1], [], []>} : vector<8x8xf32>, vector<8x128xf32>, vector<8x128xf32> -> vector<8x128xf32>
    %247 = arith.addf %243, %246 : vector<8x128xf32>
    %248 = vector.extract_strided_slice %233 {offsets = [16, 0], sizes = [8, 8], strides = [1, 1]} : vector<72x8xf32> to vector<8x8xf32>
    %249 = vector.extract_strided_slice %235 {offsets = [16, 0], sizes = [8, 128], strides = [1, 1]} : vector<72x128xf32> to vector<8x128xf32>
    %cst_44 = arith.constant dense<0.000000e+00> : vector<8x128xf32>
    %250 = tpu.matmul %248, %249, %cst_44 {dimension_numbers = #tpu.dot_dimension_numbers<[1], [0], [0], [1], [0, 0, 1, 1], [], []>} : vector<8x8xf32>, vector<8x128xf32>, vector<8x128xf32> -> vector<8x128xf32>
    %251 = arith.addf %247, %250 : vector<8x128xf32>
    %252 = vector.extract_strided_slice %233 {offsets = [24, 0], sizes = [8, 8], strides = [1, 1]} : vector<72x8xf32> to vector<8x8xf32>
    %253 = vector.extract_strided_slice %235 {offsets = [24, 0], sizes = [8, 128], strides = [1, 1]} : vector<72x128xf32> to vector<8x128xf32>
    %cst_45 = arith.constant dense<0.000000e+00> : vector<8x128xf32>
    %254 = tpu.matmul %252, %253, %cst_45 {dimension_numbers = #tpu.dot_dimension_numbers<[1], [0], [0], [1], [0, 0, 1, 1], [], []>} : vector<8x8xf32>, vector<8x128xf32>, vector<8x128xf32> -> vector<8x128xf32>
    %255 = arith.addf %251, %254 : vector<8x128xf32>
    %256 = vector.extract_strided_slice %233 {offsets = [32, 0], sizes = [8, 8], strides = [1, 1]} : vector<72x8xf32> to vector<8x8xf32>
    %257 = vector.extract_strided_slice %235 {offsets = [32, 0], sizes = [8, 128], strides = [1, 1]} : vector<72x128xf32> to vector<8x128xf32>
    %cst_46 = arith.constant dense<0.000000e+00> : vector<8x128xf32>
    %258 = tpu.matmul %256, %257, %cst_46 {dimension_numbers = #tpu.dot_dimension_numbers<[1], [0], [0], [1], [0, 0, 1, 1], [], []>} : vector<8x8xf32>, vector<8x128xf32>, vector<8x128xf32> -> vector<8x128xf32>
    %259 = arith.addf %255, %258 : vector<8x128xf32>
    %260 = vector.extract_strided_slice %233 {offsets = [40, 0], sizes = [8, 8], strides = [1, 1]} : vector<72x8xf32> to vector<8x8xf32>
    %261 = vector.extract_strided_slice %235 {offsets = [40, 0], sizes = [8, 128], strides = [1, 1]} : vector<72x128xf32> to vector<8x128xf32>
    %cst_47 = arith.constant dense<0.000000e+00> : vector<8x128xf32>
    %262 = tpu.matmul %260, %261, %cst_47 {dimension_numbers = #tpu.dot_dimension_numbers<[1], [0], [0], [1], [0, 0, 1, 1], [], []>} : vector<8x8xf32>, vector<8x128xf32>, vector<8x128xf32> -> vector<8x128xf32>
    %263 = arith.addf %259, %262 : vector<8x128xf32>
    %264 = vector.extract_strided_slice %233 {offsets = [48, 0], sizes = [8, 8], strides = [1, 1]} : vector<72x8xf32> to vector<8x8xf32>
    %265 = vector.extract_strided_slice %235 {offsets = [48, 0], sizes = [8, 128], strides = [1, 1]} : vector<72x128xf32> to vector<8x128xf32>
    %cst_48 = arith.constant dense<0.000000e+00> : vector<8x128xf32>
    %266 = tpu.matmul %264, %265, %cst_48 {dimension_numbers = #tpu.dot_dimension_numbers<[1], [0], [0], [1], [0, 0, 1, 1], [], []>} : vector<8x8xf32>, vector<8x128xf32>, vector<8x128xf32> -> vector<8x128xf32>
    %267 = arith.addf %263, %266 : vector<8x128xf32>
    %268 = vector.extract_strided_slice %233 {offsets = [56, 0], sizes = [8, 8], strides = [1, 1]} : vector<72x8xf32> to vector<8x8xf32>
    %269 = vector.extract_strided_slice %235 {offsets = [56, 0], sizes = [8, 128], strides = [1, 1]} : vector<72x128xf32> to vector<8x128xf32>
    %cst_49 = arith.constant dense<0.000000e+00> : vector<8x128xf32>
    %270 = tpu.matmul %268, %269, %cst_49 {dimension_numbers = #tpu.dot_dimension_numbers<[1], [0], [0], [1], [0, 0, 1, 1], [], []>} : vector<8x8xf32>, vector<8x128xf32>, vector<8x128xf32> -> vector<8x128xf32>
    %271 = arith.addf %267, %270 : vector<8x128xf32>
    %272 = vector.extract_strided_slice %233 {offsets = [64, 0], sizes = [8, 8], strides = [1, 1]} : vector<72x8xf32> to vector<8x8xf32>
    %273 = vector.extract_strided_slice %235 {offsets = [64, 0], sizes = [8, 128], strides = [1, 1]} : vector<72x128xf32> to vector<8x128xf32>
    %cst_50 = arith.constant dense<0.000000e+00> : vector<8x128xf32>
    %274 = tpu.matmul %272, %273, %cst_50 {dimension_numbers = #tpu.dot_dimension_numbers<[1], [0], [0], [1], [0, 0, 1, 1], [], []>} : vector<8x8xf32>, vector<8x128xf32>, vector<8x128xf32> -> vector<8x128xf32>
    %275 = arith.addf %271, %274 : vector<8x128xf32>
    %c0_51 = arith.constant 0 : index
    %c0_52 = arith.constant 0 : index
    %276 = vector.load %arg11[%c0_51, %c0_52] : memref<8x128xf32, #tpu.memory_space<vmem>>, vector<8x128xf32>
    tpu.vector_store %arg11[%c0_51, %c0_52], %275 {strides = array<i32>} : memref<8x128xf32, #tpu.memory_space<vmem>>, vector<8x128xf32>,
    %c0_53 = arith.constant 0 : index
    %c0_54 = arith.constant 0 : index
    %277 = vector.load %arg12[%c0_53, %c0_54] : memref<8x32xf32, #tpu.memory_space<vmem>>, vector<8x32xf32>
    tpu.vector_store %arg12[%c0_53, %c0_54], %222 {strides = array<i32>} : memref<8x32xf32, #tpu.memory_space<vmem>>, vector<8x32xf32>,
    %c0_55 = arith.constant 0 : index
    %c0_56 = arith.constant 0 : index
    %278 = vector.load %arg13[%c0_55, %c0_56] : memref<8x32xf32, #tpu.memory_space<vmem>>, vector<8x32xf32>
    tpu.vector_store %arg13[%c0_55, %c0_56], %225 {strides = array<i32>} : memref<8x32xf32, #tpu.memory_space<vmem>>, vector<8x32xf32>,
    return
  }
}

</mosaic_0001>

<llo_original>
// kernel: _forward_impl.1
$region0: #{_forward_impl.1}
  #allocation0 [shape = 'u32[]', space=smem, size = 0x4, offset = 0x4, fixed_abs, tag = 'smem constant byte address 0x4 - core index']
  #allocation1 [shape = 'u32[144,128]{1,0:T(1,128)}', space=vmem, size = 0x12000, scoped, tag = 'internal scratch']
  %s0 = inlined_call_operand.vmem [shape: s32[8,1], index: 0, kind: input, shape index: {}]
  %s1 = inlined_call_operand.vmem [shape: f32[64,32], index: 1, kind: input, shape index: {}]
  %s2 = inlined_call_operand.hbm [shape: f32[32,128], index: 2, kind: input, shape index: {}]
  %s3 = inlined_call_operand.hbm [shape: f32[32,128], index: 3, kind: input, shape index: {}]
  %s4 = inlined_call_operand.hbm [shape: f32[1,128], index: 4, kind: input, shape index: {}]
  %s5 = inlined_call_operand.vmem [shape: f32[72,1024], index: 5, kind: input, shape index: {}]
  %s6 = inlined_call_operand.hbm [shape: f32[1024,8], index: 6, kind: input, shape index: {}]
  %s7 = inlined_call_operand.hbm [shape: f32[1,8], index: 7, kind: input, shape index: {}]
  %s8 = inlined_call_operand.hbm [shape: f32[72,128], index: 8, kind: input, shape index: {}]
  %s9 = inlined_call_operand.hbm [shape: f32[32,128], index: 9, kind: input, shape index: {}]
  %s10 = inlined_call_operand.hbm [shape: f32[1,128], index: 10, kind: input, shape index: {}]
  %s11 = inlined_call_operand.vmem [shape: f32[8,128], index: 11, kind: output, shape index: {0}]
  %s12 = inlined_call_operand.vmem [shape: f32[8,32], index: 12, kind: output, shape index: {1}]
  %s13 = inlined_call_operand.vmem [shape: f32[8,32], index: 13, kind: output, shape index: {2}]
  %14 = xla_tuple %s11, %s12, %s13
  %s15 = sld [smem:[#allocation0]]
  $region102: #{_forward_impl.1} parent=0
    _
  %s17 = ssub.s32 1, %s15
  %s18 = scalar_select 0, %s17, %s15
  $region1: #{_forward_impl.1} parent=0
    #allocation2 [shape = 'u8[16384]{0}', space=vmem, size = 0x4000, scoped, tag = 'input window, operand 2, single buffered']
    #allocation3 [shape = 's32[1]{0}', space=sflag, size = 0x4, scoped, tag = 'scoped memory for _forward_impl.1']
    #allocation4 [shape = 'u8[16384]{0}', space=vmem, size = 0x4000, scoped, tag = 'input window, operand 3, single buffered']
    #allocation5 [shape = 's32[1]{0}', space=sflag, size = 0x4, scoped, tag = 'scoped memory for _forward_impl.1']
    #allocation6 [shape = 'u8[512]{0}', space=vmem, size = 0x400, scoped, tag = 'input window, operand 4, single buffered']
    #allocation7 [shape = 'u8[524288]{0}', space=vmem, size = 0x80000, scoped, tag = 'input window, operand 6, single buffered']
    #allocation8 [shape = 's32[1]{0}', space=sflag, size = 0x4, scoped, tag = 'scoped memory for _forward_impl.1']
    #allocation9 [shape = 'u8[512]{0}', space=vmem, size = 0x400, scoped, tag = 'input window, operand 7, single buffered']
    #allocation10 [shape = 'u8[36864]{0}', space=vmem, size = 0x9000, scoped, tag = 'input window, operand 8, single buffered']
    #allocation11 [shape = 's32[1]{0}', space=sflag, size = 0x4, scoped, tag = 'scoped memory for _forward_impl.1']
    #allocation12 [shape = 'u8[16384]{0}', space=vmem, size = 0x4000, scoped, tag = 'input window, operand 9, single buffered']
    #allocation13 [shape = 'u8[512]{0}', space=vmem, size = 0x400, scoped, tag = 'input window, operand 10, single buffered']
    #allocation14 [shape = 's32[1]{0}', space=sflag, size = 0x4, scoped, tag = 'scoped memory for _forward_impl.1']
    %19 = vsyncpa [#allocation3], 0
    %20 = vsyncpa [#allocation5], 0
    %21 = vsyncpa [#allocation8], 0
    %22 = vsyncpa [#allocation11], 0
    %23 = vsyncpa [#allocation14], 0
    // Predicated region
    $region2: #{_forward_impl.1} parent=1 // pred_check
      _
    $region3: #{_forward_impl.1} parent=1 // pred_check_branch
      %25 = sbr.rel (0) target = $region5
    $region4: #{_forward_impl.1} parent=1 // pred_region
      _
    $region5: #{_forward_impl.1} parent=1 // pred_fallthru
      _
    // Predicated region
    $region6: #{_forward_impl.1} parent=1 // pred_check
      _
    $region7: #{_forward_impl.1} parent=1 // pred_check_branch
      %27 = sbr.rel (0) target = $region9
    $region8: #{_forward_impl.1} parent=1 // pred_region
      _
    $region9: #{_forward_impl.1} parent=1 // pred_fallthru
      _
    // Predicated region
    $region10: #{_forward_impl.1} parent=1 // pred_check
      _
    $region11: #{_forward_impl.1} parent=1 // pred_check_branch
      %29 = sbr.rel (0) target = $region13
    $region12: #{_forward_impl.1} parent=1 // pred_region
      %s31 = ssub.s32 512, 512
      %32 = vsyncadd [#allocation3], %s31
      %s33 = sshll.u32 [#allocation2], 4
      %s34 = int_to_ptr.vmem [resolvable:$true] %s33
      %39 = dma.hbm_to_vmem [thread:$0]  %s2, 512, %s34, [#allocation3], 128, 128, 8
    $region13: #{_forward_impl.1} parent=1 // pred_fallthru
      _
    // Predicated region
    $region14: #{_forward_impl.1} parent=1 // pred_check
      _
    $region15: #{_forward_impl.1} parent=1 // pred_check_branch
      %41 = sbr.rel (0) target = $region17
    $region16: #{_forward_impl.1} parent=1 // pred_region
      %s43 = ssub.s32 512, 512
      %44 = vsyncadd [#allocation5], %s43
      %s45 = sshll.u32 [#allocation4], 4
      %s46 = int_to_ptr.vmem [resolvable:$true] %s45
      %51 = dma.hbm_to_vmem [thread:$0]  %s3, 512, %s46, [#allocation5], 128, 128, 8
    $region17: #{_forward_impl.1} parent=1 // pred_fallthru
      _
    // Predicated region
    $region18: #{_forward_impl.1} parent=1 // pred_check
      _
    $region19: #{_forward_impl.1} parent=1 // pred_check_branch
      %53 = sbr.rel (0) target = $region21
    $region20: #{_forward_impl.1} parent=1 // pred_region
      %s55 = ssub.s32 16, 16
      %56 = vsyncadd [#allocation5], %s55
      %s58 = sshll.u32 [#allocation6], 4
      %s59 = int_to_ptr.vmem [resolvable:$true] %s58
      %61 = dma.hbm_to_vmem [thread:$0]  %s4, 16, %s59, [#allocation5]
    $region21: #{_forward_impl.1} parent=1 // pred_fallthru
      _
    // Predicated region
    $region22: #{_forward_impl.1} parent=1 // pred_check
      _
    $region23: #{_forward_impl.1} parent=1 // pred_check_branch
      %63 = sbr.rel (0) target = $region25
    $region24: #{_forward_impl.1} parent=1 // pred_region
      _
    $region25: #{_forward_impl.1} parent=1 // pred_fallthru
      _
    // Predicated region
    $region26: #{_forward_impl.1} parent=1 // pred_check
      _
    $region27: #{_forward_impl.1} parent=1 // pred_check_branch
      %65 = sbr.rel (0) target = $region29
    $region28: #{_forward_impl.1} parent=1 // pred_region
      %s67 = ssub.s32 16384, 16384
      %68 = vsyncadd [#allocation8], %s67
      %s69 = sshll.u32 [#allocation7], 4
      %s70 = int_to_ptr.vmem [resolvable:$true] %s69
      %75 = dma.hbm_to_vmem [thread:$0]  %s6, 16384, %s70, [#allocation8], 128, 128, 8
    $region29: #{_forward_impl.1} parent=1 // pred_fallthru
      _
    // Predicated region
    $region30: #{_forward_impl.1} parent=1 // pred_check
      _
    $region31: #{_forward_impl.1} parent=1 // pred_check_branch
      %77 = sbr.rel (0) target = $region33
    $region32: #{_forward_impl.1} parent=1 // pred_region
      %s79 = ssub.s32 16, 16
      %80 = vsyncadd [#allocation8], %s79
      %s82 = sshll.u32 [#allocation9], 4
      %s83 = int_to_ptr.vmem [resolvable:$true] %s82
      %85 = dma.hbm_to_vmem [thread:$0]  %s7, 16, %s83, [#allocation8]
    $region33: #{_forward_impl.1} parent=1 // pred_fallthru
      _
    // Predicated region
    $region34: #{_forward_impl.1} parent=1 // pred_check
      _
    $region35: #{_forward_impl.1} parent=1 // pred_check_branch
      %87 = sbr.rel (0) target = $region37
    $region36: #{_forward_impl.1} parent=1 // pred_region
      %s89 = ssub.s32 1152, 1152
      %90 = vsyncadd [#allocation11], %s89
      %s91 = sshll.u32 [#allocation10], 4
      %s92 = int_to_ptr.vmem [resolvable:$true] %s91
      %97 = dma.hbm_to_vmem [thread:$0]  %s8, 1152, %s92, [#allocation11], 128, 128, 8
    $region37: #{_forward_impl.1} parent=1 // pred_fallthru
      _
    // Predicated region
    $region38: #{_forward_impl.1} parent=1 // pred_check
      _
    $region39: #{_forward_impl.1} parent=1 // pred_check_branch
      %99 = sbr.rel (0) target = $region41
    $region40: #{_forward_impl.1} parent=1 // pred_region
      %s101 = ssub.s32 512, 512
      %102 = vsyncadd [#allocation11], %s101
      %s103 = sshll.u32 [#allocation12], 4
      %s104 = int_to_ptr.vmem [resolvable:$true] %s103
      %109 = dma.hbm_to_vmem [thread:$0]  %s9, 512, %s104, [#allocation11], 128, 128, 8
    $region41: #{_forward_impl.1} parent=1 // pred_fallthru
      _
    // Predicated region
    $region42: #{_forward_impl.1} parent=1 // pred_check
      _
    $region43: #{_forward_impl.1} parent=1 // pred_check_branch
      %111 = sbr.rel (0) target = $region45
    $region44: #{_forward_impl.1} parent=1 // pred_region
      %s113 = ssub.s32 16, 16
      %114 = vsyncadd [#allocation14], %s113
      %s116 = sshll.u32 [#allocation13], 4
      %s117 = int_to_ptr.vmem [resolvable:$true] %s116
      %119 = dma.hbm_to_vmem [thread:$0]  %s10, 16, %s117, [#allocation14]
    $region45: #{_forward_impl.1} parent=1 // pred_fallthru
      _
    // Predicated region
    $region46: #{_forward_impl.1} parent=1 // pred_check
      _
    $region47: #{_forward_impl.1} parent=1 // pred_check_branch
      %121 = sbr.rel (0) target = $region49
    $region48: #{_forward_impl.1} parent=1 // pred_region
      %122 = dma.done [#allocation3], 512
    $region49: #{_forward_impl.1} parent=1 // pred_fallthru
      _
    // Predicated region
    $region50: #{_forward_impl.1} parent=1 // pred_check
      _
    $region51: #{_forward_impl.1} parent=1 // pred_check_branch
      %124 = sbr.rel (0) target = $region53
    $region52: #{_forward_impl.1} parent=1 // pred_region
      %125 = dma.done [#allocation5], 512
    $region53: #{_forward_impl.1} parent=1 // pred_fallthru
      _
    // Predicated region
    $region54: #{_forward_impl.1} parent=1 // pred_check
      _
    $region55: #{_forward_impl.1} parent=1 // pred_check_branch
      %127 = sbr.rel (0) target = $region57
    $region56: #{_forward_impl.1} parent=1 // pred_region
      %128 = dma.done [#allocation5], 16
    $region57: #{_forward_impl.1} parent=1 // pred_fallthru
      _
    // Predicated region
    $region58: #{_forward_impl.1} parent=1 // pred_check
      _
    $region59: #{_forward_impl.1} parent=1 // pred_check_branch
      %130 = sbr.rel (0) target = $region61
    $region60: #{_forward_impl.1} parent=1 // pred_region
      %131 = dma.done [#allocation8], 16384
    $region61: #{_forward_impl.1} parent=1 // pred_fallthru
      _
    // Predicated region
    $region62: #{_forward_impl.1} parent=1 // pred_check
      _
    $region63: #{_forward_impl.1} parent=1 // pred_check_branch
      %133 = sbr.rel (0) target = $region65
    $region64: #{_forward_impl.1} parent=1 // pred_region
      %134 = dma.done [#allocation8], 16
    $region65: #{_forward_impl.1} parent=1 // pred_fallthru
      _
    // Predicated region
    $region66: #{_forward_impl.1} parent=1 // pred_check
      _
    $region67: #{_forward_impl.1} parent=1 // pred_check_branch
      %136 = sbr.rel (0) target = $region69
    $region68: #{_forward_impl.1} parent=1 // pred_region
      %137 = dma.done [#allocation11], 1152
    $region69: #{_forward_impl.1} parent=1 // pred_fallthru
      _
    // Predicated region
    $region70: #{_forward_impl.1} parent=1 // pred_check
      _
    $region71: #{_forward_impl.1} parent=1 // pred_check_branch
      %139 = sbr.rel (0) target = $region73
    $region72: #{_forward_impl.1} parent=1 // pred_region
      %140 = dma.done [#allocation11], 512
    $region73: #{_forward_impl.1} parent=1 // pred_fallthru
      _
    // Predicated region
    $region74: #{_forward_impl.1} parent=1 // pred_check
      _
    $region75: #{_forward_impl.1} parent=1 // pred_check_branch
      %142 = sbr.rel (0) target = $region77
    $region76: #{_forward_impl.1} parent=1 // pred_region
      %143 = dma.done [#allocation14], 16
    $region77: #{_forward_impl.1} parent=1 // pred_fallthru
      _
    %v144 = vld [vmem:[%s0] sm:$0xff]
    %v145 = vld [vmem:[%s1] sm:$0xff]
    %v146 = vld [vmem:[%s1 + $0x8] sm:$0xff]
    %v147 = vld [vmem:[%s1 + $0x10] sm:$0xff]
    %v148 = vld [vmem:[%s1 + $0x18] sm:$0xff]
    %v149 = vld [vmem:[%s1 + $0x20] sm:$0xff]
    %v150 = vld [vmem:[%s1 + $0x28] sm:$0xff]
    %v151 = vld [vmem:[%s1 + $0x30] sm:$0xff]
    %v152 = vld [vmem:[%s1 + $0x38] sm:$0xff]
    %v153 = vld [vmem:[#allocation2] sm:$0xff]
    %v154 = vld [vmem:[#allocation2 + $0x8] sm:$0xff]
    %v155 = vld [vmem:[#allocation2 + $0x10] sm:$0xff]
    %v156 = vld [vmem:[#allocation2 + $0x18] sm:$0xff]
    %v157 = vld [vmem:[#allocation6] sm:$0x1]
    %v159 = vlaneseq
    %v160 = vshrl.u32 %v159, 7
    %v161 = vsub.s32 0, %v160
    %v162 = vrot.slane %v157, %v161
    %vm164 = vcmask 261120
    %v166 = vsel %vm164, %v145, 0
    %v169 = vsel %vm164, %v146, 0
    %v172 = vsel %vm164, %v147, 0
    %v175 = vsel %vm164, %v148, 0
    %v178 = vsel %vm164, %v149, 0
    %v181 = vsel %vm164, %v150, 0
    %v184 = vsel %vm164, %v151, 0
    %v187 = vsel %vm164, %v152, 0
    %189 = vmatprep.subr.mxu0 0.0
    %190 = vmatpush1.msra.mxu0 %v153
    %191 = vmatprep.subr.mxu0 0.0
    %192 = vmatpush1.msra.mxu0 %v154
    %193 = vmatprep.subr.mxu0 0.0
    %194 = vmatpush1.msra.mxu0 %v155
    %195 = vmatprep.subr.mxu0 0.0
    %196 = vmatpush1.msra.mxu0 %v156
    %197 = vmatprep.subr.mxu0 0.0
    %198 = vmatpush1.msra.mxu0 0.0
    %199 = vmatprep.subr.mxu0 0.0
    %200 = vmatpush1.msra.mxu0 0.0
    %201 = vmatprep.subr.mxu0 0.0
    %202 = vmatpush1.msra.mxu0 0.0
    %203 = vmatprep.subr.mxu0 0.0
    %204 = vmatpush1.msra.mxu0 0.0
    %205 = vmatprep.subr.mxu0 0.0
    %206 = vmatpush1.msra.mxu0 0.0
    %207 = vmatprep.subr.mxu0 0.0
    %208 = vmatpush1.msra.mxu0 0.0
    %209 = vmatprep.subr.mxu0 0.0
    %210 = vmatpush1.msra.mxu0 0.0
    %211 = vmatprep.subr.mxu0 0.0
    %212 = vmatpush1.msra.mxu0 0.0
    %213 = vmatprep.subr.mxu0 0.0
    %214 = vmatpush1.msra.mxu0 0.0
    %215 = vmatprep.subr.mxu0 0.0
    %216 = vmatpush1.msra.mxu0 0.0
    %217 = vmatprep.subr.mxu0 0.0
    %218 = vmatpush1.msra.mxu0 0.0
    %219 = vmatprep.subr.mxu0 0.0
    %220 = vmatpush1.msra.mxu0 0.0
    %221 = vmatprep.subr.mxu0 0.0
    %222 = vmatpush1.msra.mxu0 0.0
    %223 = vmatprep.subr.mxu0 0.0
    %224 = vmatpush1.msra.mxu0 0.0
    %225 = vmatprep.subr.mxu0 0.0
    %226 = vmatpush1.msra.mxu0 0.0
    %227 = vmatprep.subr.mxu0 0.0
    %228 = vmatpush1.msra.mxu0 0.0
    %229 = vmatprep.subr.mxu0 0.0
    %230 = vmatpush1.msra.mxu0 0.0
    %231 = vmatprep.subr.mxu0 0.0
    %232 = vmatpush1.msra.mxu0 0.0
    %233 = vmatprep.subr.mxu0 0.0
    %234 = vmatpush1.msra.mxu0 0.0
    %235 = vmatprep.subr.mxu0 0.0
    %236 = vmatpush1.msra.mxu0 0.0
    %237 = vmatprep.subr.mxu0 0.0
    %238 = vmatpush1.msra.mxu0 0.0
    %239 = vmatprep.subr.mxu0 0.0
    %240 = vmatpush1.msra.mxu0 0.0
    %241 = vmatprep.subr.mxu0 0.0
    %242 = vmatpush1.msra.mxu0 0.0
    %243 = vmatprep.subr.mxu0 0.0
    %244 = vmatpush1.msra.mxu0 0.0
    %245 = vmatprep.subr.mxu0 0.0
    %246 = vmatpush1.msra.mxu0 0.0
    %247 = vmatprep.subr.mxu0 0.0
    %248 = vmatpush1.msra.mxu0 0.0
    %249 = vmatprep.subr.mxu0 0.0
    %250 = vmatpush1.msra.mxu0 0.0
    %251 = vmatprep.subr.mxu0 0.0
    %252 = vmatpush1.msra.mxu0 0.0
    %253 = vmatprep.mubr.f32.mxu0 0.0
    %254 = vmatmul.mubr.f32.gmra.mrb[0].mxu0 %v166
    %v255 = vpop.f32.mrb[0].mxu0
    %v256 = vadd.f32 %v162, %v255
    %v257 = vpop.f32.mrb[0].mxu0
    %258 = vmatprep.mubr.f32.mxu0 0.0
    %259 = vmatmul.mubr.f32.gmra.mrb[0].mxu0 %v169
    %v260 = vpop.f32.mrb[0].mxu0
    %v261 = vadd.f32 %v162, %v260
    %v262 = vpop.f32.mrb[0].mxu0
    %263 = vmatprep.mubr.f32.mxu0 0.0
    %264 = vmatmul.mubr.f32.gmra.mrb[0].mxu0 %v172
    %v265 = vpop.f32.mrb[0].mxu0
    %v266 = vadd.f32 %v162, %v265
    %v267 = vpop.f32.mrb[0].mxu0
    %268 = vmatprep.mubr.f32.mxu0 0.0
    %269 = vmatmul.mubr.f32.gmra.mrb[0].mxu0 %v175
    %v270 = vpop.f32.mrb[0].mxu0
    %v271 = vadd.f32 %v162, %v270
    %v272 = vpop.f32.mrb[0].mxu0
    %273 = vmatprep.mubr.f32.mxu0 0.0
    %274 = vmatmul.mubr.f32.gmra.mrb[0].mxu0 %v178
    %v275 = vpop.f32.mrb[0].mxu0
    %v276 = vadd.f32 %v162, %v275
    %v277 = vpop.f32.mrb[0].mxu0
    %278 = vmatprep.mubr.f32.mxu0 0.0
    %279 = vmatmul.mubr.f32.gmra.mrb[0].mxu0 %v181
    %v280 = vpop.f32.mrb[0].mxu0
    %v281 = vadd.f32 %v162, %v280
    %v282 = vpop.f32.mrb[0].mxu0
    %283 = vmatprep.mubr.f32.mxu0 0.0
    %284 = vmatmul.mubr.f32.gmra.mrb[0].mxu0 %v184
    %v285 = vpop.f32.mrb[0].mxu0
    %v286 = vadd.f32 %v162, %v285
    %v287 = vpop.f32.mrb[0].mxu0
    %288 = vmatprep.mubr.f32.mxu0 0.0
    %289 = vmatmul.mubr.f32.gmra.mrb[0].mxu0 %v187
    %v290 = vpop.f32.mrb[0].mxu0
    %v291 = vadd.f32 %v162, %v290
    %v292 = vpop.f32.mrb[0].mxu0
    %293 = vdwg.mxu0
    %v294 = vld [vmem:[#allocation4] sm:$0xff]
    %v295 = vld [vmem:[#allocation4 + $0x8] sm:$0xff]
    %v296 = vld [vmem:[#allocation4 + $0x10] sm:$0xff]
    %v297 = vld [vmem:[#allocation4 + $0x18] sm:$0xff]
    %v299 = vsel %vm164, 0.0, 0
    %301 = vmatprep.subr.mxu0 0.0
    %302 = vmatpush1.msra.mxu0 %v294
    %303 = vmatprep.subr.mxu0 0.0
    %304 = vmatpush1.msra.mxu0 %v295
    %305 = vmatprep.subr.mxu0 0.0
    %306 = vmatpush1.msra.mxu0 %v296
    %307 = vmatprep.subr.mxu0 0.0
    %308 = vmatpush1.msra.mxu0 %v297
    %309 = vmatprep.subr.mxu0 0.0
    %310 = vmatpush1.msra.mxu0 0.0
    %311 = vmatprep.subr.mxu0 0.0
    %312 = vmatpush1.msra.mxu0 0.0
    %313 = vmatprep.subr.mxu0 0.0
    %314 = vmatpush1.msra.mxu0 0.0
    %315 = vmatprep.subr.mxu0 0.0
    %316 = vmatpush1.msra.mxu0 0.0
    %317 = vmatprep.subr.mxu0 0.0
    %318 = vmatpush1.msra.mxu0 0.0
    %319 = vmatprep.subr.mxu0 0.0
    %320 = vmatpush1.msra.mxu0 0.0
    %321 = vmatprep.subr.mxu0 0.0
    %322 = vmatpush1.msra.mxu0 0.0
    %323 = vmatprep.subr.mxu0 0.0
    %324 = vmatpush1.msra.mxu0 0.0
    %325 = vmatprep.subr.mxu0 0.0
    %326 = vmatpush1.msra.mxu0 0.0
    %327 = vmatprep.subr.mxu0 0.0
    %328 = vmatpush1.msra.mxu0 0.0
    %329 = vmatprep.subr.mxu0 0.0
    %330 = vmatpush1.msra.mxu0 0.0
    %331 = vmatprep.subr.mxu0 0.0
    %332 = vmatpush1.msra.mxu0 0.0
    %333 = vmatprep.subr.mxu0 0.0
    %334 = vmatpush1.msra.mxu0 0.0
    %335 = vmatprep.subr.mxu0 0.0
    %336 = vmatpush1.msra.mxu0 0.0
    %337 = vmatprep.subr.mxu0 0.0
    %338 = vmatpush1.msra.mxu0 0.0
    %339 = vmatprep.subr.mxu0 0.0
    %340 = vmatpush1.msra.mxu0 0.0
    %341 = vmatprep.subr.mxu0 0.0
    %342 = vmatpush1.msra.mxu0 0.0
    %343 = vmatprep.subr.mxu0 0.0
    %344 = vmatpush1.msra.mxu0 0.0
    %345 = vmatprep.subr.mxu0 0.0
    %346 = vmatpush1.msra.mxu0 0.0
    %347 = vmatprep.subr.mxu0 0.0
    %348 = vmatpush1.msra.mxu0 0.0
    %349 = vmatprep.subr.mxu0 0.0
    %350 = vmatpush1.msra.mxu0 0.0
    %351 = vmatprep.subr.mxu0 0.0
    %352 = vmatpush1.msra.mxu0 0.0
    %353 = vmatprep.subr.mxu0 0.0
    %354 = vmatpush1.msra.mxu0 0.0
    %355 = vmatprep.subr.mxu0 0.0
    %356 = vmatpush1.msra.mxu0 0.0
    %357 = vmatprep.subr.mxu0 0.0
    %358 = vmatpush1.msra.mxu0 0.0
    %359 = vmatprep.subr.mxu0 0.0
    %360 = vmatpush1.msra.mxu0 0.0
    %361 = vmatprep.subr.mxu0 0.0
    %362 = vmatpush1.msra.mxu0 0.0
    %363 = vmatprep.subr.mxu0 0.0
    %364 = vmatpush1.msra.mxu0 0.0
    %365 = vmatprep.mubr.f32.mxu0 0.0
    %366 = vmatmul.mubr.f32.gmra.mrb[0].mxu0 %v299
    %v367 = vpop.f32.mrb[0].mxu0
    %v368 = vadd.f32 0.0, %v367
    %v369 = vpop.f32.mrb[0].mxu0
    %370 = vdwg.mxu0
    %v371 = vadd.f32 %v256, %v368
    %v372 = vxor.u32 %v371, 2147483648
    %v373 = vmul.f32 %v372, 1.442695
    %v374 = vpow.pop %v373
    %v375 = vadd.f32 %v374, 1.0
    %v376 = vrcp.pop %v375
    %v377 = vmul.f32 1.0, %v376
    %v378 = vtanh.pop %v371
    %v379 = vmul.f32 %v377, 0.0
    %381 = vrot.lane.b32.xlu0 %v378, 32
    %v382 = vpop.permute.xlu0 %381
    %v384 = vmul.f32 %v377, %v382
    %386 = vrot.lane.b32.xlu0 %v384, 32
    %v387 = vpop.permute.xlu0 %386
    %v389 = vadd.f32 %v379, %v387
    %v390 = vtanh.pop %v389
    %392 = vrot.lane.b32.xlu0 %v390, 32
    %v393 = vpop.permute.xlu0 %392
    %v395 = vmul.f32 %v377, %v393
    %vm396 = vcmp.gt.s32.totalorder %v144, 0
    %v397 = vsel %vm396, 1, 0
    %398 = vset.pattern.permute.xlu0 0
    %399 = vperm.xlu0 %398, %v397
    %v400 = vpop.permute.xlu0 %399
    %vm401 = vcmp.eq.s32.totalorder %v400, 1
    %v402 = vsel %vm401, %v395, 0.0
    %v403 = vsel %vm401, %v389, 0.0
    %405 = vrot.lane.b32.xlu0 %v402, 64
    %v406 = vpop.permute.xlu0 %405
    %v407 = vsel %vm164, %v406, 0
    %409 = vmatprep.subr.mxu0 0.0
    %410 = vmatpush1.msra.mxu0 %v294
    %411 = vmatprep.subr.mxu0 0.0
    %412 = vmatpush1.msra.mxu0 %v295
    %413 = vmatprep.subr.mxu0 0.0
    %414 = vmatpush1.msra.mxu0 %v296
    %415 = vmatprep.subr.mxu0 0.0
    %416 = vmatpush1.msra.mxu0 %v297
    %417 = vmatprep.subr.mxu0 0.0
    %418 = vmatpush1.msra.mxu0 0.0
    %419 = vmatprep.subr.mxu0 0.0
    %420 = vmatpush1.msra.mxu0 0.0
    %421 = vmatprep.subr.mxu0 0.0
    %422 = vmatpush1.msra.mxu0 0.0
    %423 = vmatprep.subr.mxu0 0.0
    %424 = vmatpush1.msra.mxu0 0.0
    %425 = vmatprep.subr.mxu0 0.0
    %426 = vmatpush1.msra.mxu0 0.0
    %427 = vmatprep.subr.mxu0 0.0
    %428 = vmatpush1.msra.mxu0 0.0
    %429 = vmatprep.subr.mxu0 0.0
    %430 = vmatpush1.msra.mxu0 0.0
    %431 = vmatprep.subr.mxu0 0.0
    %432 = vmatpush1.msra.mxu0 0.0
    %433 = vmatprep.subr.mxu0 0.0
    %434 = vmatpush1.msra.mxu0 0.0
    %435 = vmatprep.subr.mxu0 0.0
    %436 = vmatpush1.msra.mxu0 0.0
    %437 = vmatprep.subr.mxu0 0.0
    %438 = vmatpush1.msra.mxu0 0.0
    %439 = vmatprep.subr.mxu0 0.0
    %440 = vmatpush1.msra.mxu0 0.0
    %441 = vmatprep.subr.mxu0 0.0
    %442 = vmatpush1.msra.mxu0 0.0
    %443 = vmatprep.subr.mxu0 0.0
    %444 = vmatpush1.msra.mxu0 0.0
    %445 = vmatprep.subr.mxu0 0.0
    %446 = vmatpush1.msra.mxu0 0.0
    %447 = vmatprep.subr.mxu0 0.0
    %448 = vmatpush1.msra.mxu0 0.0
    %449 = vmatprep.subr.mxu0 0.0
    %450 = vmatpush1.msra.mxu0 0.0
    %451 = vmatprep.subr.mxu0 0.0
    %452 = vmatpush1.msra.mxu0 0.0
    %453 = vmatprep.subr.mxu0 0.0
    %454 = vmatpush1.msra.mxu0 0.0
    %455 = vmatprep.subr.mxu0 0.0
    %456 = vmatpush1.msra.mxu0 0.0
    %457 = vmatprep.subr.mxu0 0.0
    %458 = vmatpush1.msra.mxu0 0.0
    %459 = vmatprep.subr.mxu0 0.0
    %460 = vmatpush1.msra.mxu0 0.0
    %461 = vmatprep.subr.mxu0 0.0
    %462 = vmatpush1.msra.mxu0 0.0
    %463 = vmatprep.subr.mxu0 0.0
    %464 = vmatpush1.msra.mxu0 0.0
    %465 = vmatprep.subr.mxu0 0.0
    %466 = vmatpush1.msra.mxu0 0.0
    %467 = vmatprep.subr.mxu0 0.0
    %468 = vmatpush1.msra.mxu0 0.0
    %469 = vmatprep.subr.mxu0 0.0
    %470 = vmatpush1.msra.mxu0 0.0
    %471 = vmatprep.subr.mxu0 0.0
    %472 = vmatpush1.msra.mxu0 0.0
    %473 = vmatprep.mubr.f32.mxu0 0.0
    %474 = vmatmul.mubr.f32.gmra.mrb[0].mxu0 %v407
    %v475 = vpop.f32.mrb[0].mxu0
    %v476 = vadd.f32 0.0, %v475
    %v477 = vpop.f32.mrb[0].mxu0
    %478 = vdwg.mxu0
    %v479 = vadd.f32 %v261, %v476
    %v480 = vxor.u32 %v479, 2147483648
    %v481 = vmul.f32 %v480, 1.442695
    %v482 = vpow.pop %v481
    %v483 = vadd.f32 %v482, 1.0
    %v484 = vrcp.pop %v483
    %v485 = vmul.f32 1.0, %v484
    %v486 = vtanh.pop %v479
    %v487 = vmul.f32 %v485, %v403
    %489 = vrot.lane.b32.xlu0 %v486, 32
    %v490 = vpop.permute.xlu0 %489
    %v492 = vmul.f32 %v485, %v490
    %494 = vrot.lane.b32.xlu0 %v492, 32
    %v495 = vpop.permute.xlu0 %494
    %v497 = vadd.f32 %v487, %v495
    %v498 = vtanh.pop %v497
    %500 = vrot.lane.b32.xlu0 %v498, 32
    %v501 = vpop.permute.xlu0 %500
    %v503 = vmul.f32 %v485, %v501
    %vm504 = vcmp.gt.s32.totalorder %v144, 1
    %v505 = vsel %vm504, 1, 0
    %506 = vset.pattern.permute.xlu0 0
    %507 = vperm.xlu0 %506, %v505
    %v508 = vpop.permute.xlu0 %507
    %vm509 = vcmp.eq.s32.totalorder %v508, 1
    %v510 = vsel %vm509, %v503, %v402
    %v511 = vsel %vm509, %v497, %v403
    %513 = vrot.lane.b32.xlu0 %v510, 64
    %v514 = vpop.permute.xlu0 %513
    %v515 = vsel %vm164, %v514, 0
    %517 = vmatprep.subr.mxu0 0.0
    %518 = vmatpush1.msra.mxu0 %v294
    %519 = vmatprep.subr.mxu0 0.0
    %520 = vmatpush1.msra.mxu0 %v295
    %521 = vmatprep.subr.mxu0 0.0
    %522 = vmatpush1.msra.mxu0 %v296
    %523 = vmatprep.subr.mxu0 0.0
    %524 = vmatpush1.msra.mxu0 %v297
    %525 = vmatprep.subr.mxu0 0.0
    %526 = vmatpush1.msra.mxu0 0.0
    %527 = vmatprep.subr.mxu0 0.0
    %528 = vmatpush1.msra.mxu0 0.0
    %529 = vmatprep.subr.mxu0 0.0
    %530 = vmatpush1.msra.mxu0 0.0
    %531 = vmatprep.subr.mxu0 0.0
    %532 = vmatpush1.msra.mxu0 0.0
    %533 = vmatprep.subr.mxu0 0.0
    %534 = vmatpush1.msra.mxu0 0.0
    %535 = vmatprep.subr.mxu0 0.0
    %536 = vmatpush1.msra.mxu0 0.0
    %537 = vmatprep.subr.mxu0 0.0
    %538 = vmatpush1.msra.mxu0 0.0
    %539 = vmatprep.subr.mxu0 0.0
    %540 = vmatpush1.msra.mxu0 0.0
    %541 = vmatprep.subr.mxu0 0.0
    %542 = vmatpush1.msra.mxu0 0.0
    %543 = vmatprep.subr.mxu0 0.0
    %544 = vmatpush1.msra.mxu0 0.0
    %545 = vmatprep.subr.mxu0 0.0
    %546 = vmatpush1.msra.mxu0 0.0
    %547 = vmatprep.subr.mxu0 0.0
    %548 = vmatpush1.msra.mxu0 0.0
    %549 = vmatprep.subr.mxu0 0.0
    %550 = vmatpush1.msra.mxu0 0.0
    %551 = vmatprep.subr.mxu0 0.0
    %552 = vmatpush1.msra.mxu0 0.0
    %553 = vmatprep.subr.mxu0 0.0
    %554 = vmatpush1.msra.mxu0 0.0
    %555 = vmatprep.subr.mxu0 0.0
    %556 = vmatpush1.msra.mxu0 0.0
    %557 = vmatprep.subr.mxu0 0.0
    %558 = vmatpush1.msra.mxu0 0.0
    %559 = vmatprep.subr.mxu0 0.0
    %560 = vmatpush1.msra.mxu0 0.0
    %561 = vmatprep.subr.mxu0 0.0
    %562 = vmatpush1.msra.mxu0 0.0
    %563 = vmatprep.subr.mxu0 0.0
    %564 = vmatpush1.msra.mxu0 0.0
    %565 = vmatprep.subr.mxu0 0.0
    %566 = vmatpush1.msra.mxu0 0.0
    %567 = vmatprep.subr.mxu0 0.0
    %568 = vmatpush1.msra.mxu0 0.0
    %569 = vmatprep.subr.mxu0 0.0
    %570 = vmatpush1.msra.mxu0 0.0
    %571 = vmatprep.subr.mxu0 0.0
    %572 = vmatpush1.msra.mxu0 0.0
    %573 = vmatprep.subr.mxu0 0.0
    %574 = vmatpush1.msra.mxu0 0.0
    %575 = vmatprep.subr.mxu0 0.0
    %576 = vmatpush1.msra.mxu0 0.0
    %577 = vmatprep.subr.mxu0 0.0
    %578 = vmatpush1.msra.mxu0 0.0
    %579 = vmatprep.subr.mxu0 0.0
    %580 = vmatpush1.msra.mxu0 0.0
    %581 = vmatprep.mubr.f32.mxu0 0.0
    %582 = vmatmul.mubr.f32.gmra.mrb[0].mxu0 %v515
    %v583 = vpop.f32.mrb[0].mxu0
    %v584 = vadd.f32 0.0, %v583
    %v585 = vpop.f32.mrb[0].mxu0
    %586 = vdwg.mxu0
    %v587 = vadd.f32 %v266, %v584
    %v588 = vxor.u32 %v587, 2147483648
    %v589 = vmul.f32 %v588, 1.442695
    %v590 = vpow.pop %v589
    %v591 = vadd.f32 %v590, 1.0
    %v592 = vrcp.pop %v591
    %v593 = vmul.f32 1.0, %v592
    %v594 = vtanh.pop %v587
    %v595 = vmul.f32 %v593, %v511
    %597 = vrot.lane.b32.xlu0 %v594, 32
    %v598 = vpop.permute.xlu0 %597
    %v600 = vmul.f32 %v593, %v598
    %602 = vrot.lane.b32.xlu0 %v600, 32
    %v603 = vpop.permute.xlu0 %602
    %v605 = vadd.f32 %v595, %v603
    %v606 = vtanh.pop %v605
    %608 = vrot.lane.b32.xlu0 %v606, 32
    %v609 = vpop.permute.xlu0 %608
    %v611 = vmul.f32 %v593, %v609
    %vm612 = vcmp.gt.s32.totalorder %v144, 2
    %v613 = vsel %vm612, 1, 0
    %614 = vset.pattern.permute.xlu0 0
    %615 = vperm.xlu0 %614, %v613
    %v616 = vpop.permute.xlu0 %615
    %vm617 = vcmp.eq.s32.totalorder %v616, 1
    %v618 = vsel %vm617, %v611, %v510
    %v619 = vsel %vm617, %v605, %v511
    %621 = vrot.lane.b32.xlu0 %v618, 64
    %v622 = vpop.permute.xlu0 %621
    %v623 = vsel %vm164, %v622, 0
    %625 = vmatprep.subr.mxu0 0.0
    %626 = vmatpush1.msra.mxu0 %v294
    %627 = vmatprep.subr.mxu0 0.0
    %628 = vmatpush1.msra.mxu0 %v295
    %629 = vmatprep.subr.mxu0 0.0
    %630 = vmatpush1.msra.mxu0 %v296
    %631 = vmatprep.subr.mxu0 0.0
    %632 = vmatpush1.msra.mxu0 %v297
    %633 = vmatprep.subr.mxu0 0.0
    %634 = vmatpush1.msra.mxu0 0.0
    %635 = vmatprep.subr.mxu0 0.0
    %636 = vmatpush1.msra.mxu0 0.0
    %637 = vmatprep.subr.mxu0 0.0
    %638 = vmatpush1.msra.mxu0 0.0
    %639 = vmatprep.subr.mxu0 0.0
    %640 = vmatpush1.msra.mxu0 0.0
    %641 = vmatprep.subr.mxu0 0.0
    %642 = vmatpush1.msra.mxu0 0.0
    %643 = vmatprep.subr.mxu0 0.0
    %644 = vmatpush1.msra.mxu0 0.0
    %645 = vmatprep.subr.mxu0 0.0
    %646 = vmatpush1.msra.mxu0 0.0
    %647 = vmatprep.subr.mxu0 0.0
    %648 = vmatpush1.msra.mxu0 0.0
    %649 = vmatprep.subr.mxu0 0.0
    %650 = vmatpush1.msra.mxu0 0.0
    %651 = vmatprep.subr.mxu0 0.0
    %652 = vmatpush1.msra.mxu0 0.0
    %653 = vmatprep.subr.mxu0 0.0
    %654 = vmatpush1.msra.mxu0 0.0
    %655 = vmatprep.subr.mxu0 0.0
    %656 = vmatpush1.msra.mxu0 0.0
    %657 = vmatprep.subr.mxu0 0.0
    %658 = vmatpush1.msra.mxu0 0.0
    %659 = vmatprep.subr.mxu0 0.0
    %660 = vmatpush1.msra.mxu0 0.0
    %661 = vmatprep.subr.mxu0 0.0
    %662 = vmatpush1.msra.mxu0 0.0
    %663 = vmatprep.subr.mxu0 0.0
    %664 = vmatpush1.msra.mxu0 0.0
    %665 = vmatprep.subr.mxu0 0.0
    %666 = vmatpush1.msra.mxu0 0.0
    %667 = vmatprep.subr.mxu0 0.0
    %668 = vmatpush1.msra.mxu0 0.0
    %669 = vmatprep.subr.mxu0 0.0
    %670 = vmatpush1.msra.mxu0 0.0
    %671 = vmatprep.subr.mxu0 0.0
    %672 = vmatpush1.msra.mxu0 0.0
    %673 = vmatprep.subr.mxu0 0.0
    %674 = vmatpush1.msra.mxu0 0.0
    %675 = vmatprep.subr.mxu0 0.0
    %676 = vmatpush1.msra.mxu0 0.0
    %677 = vmatprep.subr.mxu0 0.0
    %678 = vmatpush1.msra.mxu0 0.0
    %679 = vmatprep.subr.mxu0 0.0
    %680 = vmatpush1.msra.mxu0 0.0
    %681 = vmatprep.subr.mxu0 0.0
    %682 = vmatpush1.msra.mxu0 0.0
    %683 = vmatprep.subr.mxu0 0.0
    %684 = vmatpush1.msra.mxu0 0.0
    %685 = vmatprep.subr.mxu0 0.0
    %686 = vmatpush1.msra.mxu0 0.0
    %687 = vmatprep.subr.mxu0 0.0
    %688 = vmatpush1.msra.mxu0 0.0
    %689 = vmatprep.mubr.f32.mxu0 0.0
    %690 = vmatmul.mubr.f32.gmra.mrb[0].mxu0 %v623
    %v691 = vpop.f32.mrb[0].mxu0
    %v692 = vadd.f32 0.0, %v691
    %v693 = vpop.f32.mrb[0].mxu0
    %694 = vdwg.mxu0
    %v695 = vadd.f32 %v271, %v692
    %v696 = vxor.u32 %v695, 2147483648
    %v697 = vmul.f32 %v696, 1.442695
    %v698 = vpow.pop %v697
    %v699 = vadd.f32 %v698, 1.0
    %v700 = vrcp.pop %v699
    %v701 = vmul.f32 1.0, %v700
    %v702 = vtanh.pop %v695
    %v703 = vmul.f32 %v701, %v619
    %705 = vrot.lane.b32.xlu0 %v702, 32
    %v706 = vpop.permute.xlu0 %705
    %v708 = vmul.f32 %v701, %v706
    %710 = vrot.lane.b32.xlu0 %v708, 32
    %v711 = vpop.permute.xlu0 %710
    %v713 = vadd.f32 %v703, %v711
    %v714 = vtanh.pop %v713
    %716 = vrot.lane.b32.xlu0 %v714, 32
    %v717 = vpop.permute.xlu0 %716
    %v719 = vmul.f32 %v701, %v717
    %vm720 = vcmp.gt.s32.totalorder %v144, 3
    %v721 = vsel %vm720, 1, 0
    %722 = vset.pattern.permute.xlu0 0
    %723 = vperm.xlu0 %722, %v721
    %v724 = vpop.permute.xlu0 %723
    %vm725 = vcmp.eq.s32.totalorder %v724, 1
    %v726 = vsel %vm725, %v719, %v618
    %v727 = vsel %vm725, %v713, %v619
    %729 = vrot.lane.b32.xlu0 %v726, 64
    %v730 = vpop.permute.xlu0 %729
    %v731 = vsel %vm164, %v730, 0
    %733 = vmatprep.subr.mxu0 0.0
    %734 = vmatpush1.msra.mxu0 %v294
    %735 = vmatprep.subr.mxu0 0.0
    %736 = vmatpush1.msra.mxu0 %v295
    %737 = vmatprep.subr.mxu0 0.0
    %738 = vmatpush1.msra.mxu0 %v296
    %739 = vmatprep.subr.mxu0 0.0
    %740 = vmatpush1.msra.mxu0 %v297
    %741 = vmatprep.subr.mxu0 0.0
    %742 = vmatpush1.msra.mxu0 0.0
    %743 = vmatprep.subr.mxu0 0.0
    %744 = vmatpush1.msra.mxu0 0.0
    %745 = vmatprep.subr.mxu0 0.0
    %746 = vmatpush1.msra.mxu0 0.0
    %747 = vmatprep.subr.mxu0 0.0
    %748 = vmatpush1.msra.mxu0 0.0
    %749 = vmatprep.subr.mxu0 0.0
    %750 = vmatpush1.msra.mxu0 0.0
    %751 = vmatprep.subr.mxu0 0.0
    %752 = vmatpush1.msra.mxu0 0.0
    %753 = vmatprep.subr.mxu0 0.0
    %754 = vmatpush1.msra.mxu0 0.0
    %755 = vmatprep.subr.mxu0 0.0
    %756 = vmatpush1.msra.mxu0 0.0
    %757 = vmatprep.subr.mxu0 0.0
    %758 = vmatpush1.msra.mxu0 0.0
    %759 = vmatprep.subr.mxu0 0.0
    %760 = vmatpush1.msra.mxu0 0.0
    %761 = vmatprep.subr.mxu0 0.0
    %762 = vmatpush1.msra.mxu0 0.0
    %763 = vmatprep.subr.mxu0 0.0
    %764 = vmatpush1.msra.mxu0 0.0
    %765 = vmatprep.subr.mxu0 0.0
    %766 = vmatpush1.msra.mxu0 0.0
    %767 = vmatprep.subr.mxu0 0.0
    %768 = vmatpush1.msra.mxu0 0.0
    %769 = vmatprep.subr.mxu0 0.0
    %770 = vmatpush1.msra.mxu0 0.0
    %771 = vmatprep.subr.mxu0 0.0
    %772 = vmatpush1.msra.mxu0 0.0
    %773 = vmatprep.subr.mxu0 0.0
    %774 = vmatpush1.msra.mxu0 0.0
    %775 = vmatprep.subr.mxu0 0.0
    %776 = vmatpush1.msra.mxu0 0.0
    %777 = vmatprep.subr.mxu0 0.0
    %778 = vmatpush1.msra.mxu0 0.0
    %779 = vmatprep.subr.mxu0 0.0
    %780 = vmatpush1.msra.mxu0 0.0
    %781 = vmatprep.subr.mxu0 0.0
    %782 = vmatpush1.msra.mxu0 0.0
    %783 = vmatprep.subr.mxu0 0.0
    %784 = vmatpush1.msra.mxu0 0.0
    %785 = vmatprep.subr.mxu0 0.0
    %786 = vmatpush1.msra.mxu0 0.0
    %787 = vmatprep.subr.mxu0 0.0
    %788 = vmatpush1.msra.mxu0 0.0
    %789 = vmatprep.subr.mxu0 0.0
    %790 = vmatpush1.msra.mxu0 0.0
    %791 = vmatprep.subr.mxu0 0.0
    %792 = vmatpush1.msra.mxu0 0.0
    %793 = vmatprep.subr.mxu0 0.0
    %794 = vmatpush1.msra.mxu0 0.0
    %795 = vmatprep.subr.mxu0 0.0
    %796 = vmatpush1.msra.mxu0 0.0
    %797 = vmatprep.mubr.f32.mxu0 0.0
    %798 = vmatmul.mubr.f32.gmra.mrb[0].mxu0 %v731
    %v799 = vpop.f32.mrb[0].mxu0
    %v800 = vadd.f32 0.0, %v799
    %v801 = vpop.f32.mrb[0].mxu0
    %802 = vdwg.mxu0
    %v803 = vadd.f32 %v276, %v800
    %v804 = vxor.u32 %v803, 2147483648
    %v805 = vmul.f32 %v804, 1.442695
    %v806 = vpow.pop %v805
    %v807 = vadd.f32 %v806, 1.0
    %v808 = vrcp.pop %v807
    %v809 = vmul.f32 1.0, %v808
    %v810 = vtanh.pop %v803
    %v811 = vmul.f32 %v809, %v727
    %813 = vrot.lane.b32.xlu0 %v810, 32
    %v814 = vpop.permute.xlu0 %813
    %v816 = vmul.f32 %v809, %v814
    %818 = vrot.lane.b32.xlu0 %v816, 32
    %v819 = vpop.permute.xlu0 %818
    %v821 = vadd.f32 %v811, %v819
    %v822 = vtanh.pop %v821
    %824 = vrot.lane.b32.xlu0 %v822, 32
    %v825 = vpop.permute.xlu0 %824
    %v827 = vmul.f32 %v809, %v825
    %vm828 = vcmp.gt.s32.totalorder %v144, 4
    %v829 = vsel %vm828, 1, 0
    %830 = vset.pattern.permute.xlu0 0
    %831 = vperm.xlu0 %830, %v829
    %v832 = vpop.permute.xlu0 %831
    %vm833 = vcmp.eq.s32.totalorder %v832, 1
    %v834 = vsel %vm833, %v827, %v726
    %v835 = vsel %vm833, %v821, %v727
    %837 = vrot.lane.b32.xlu0 %v834, 64
    %v838 = vpop.permute.xlu0 %837
    %v839 = vsel %vm164, %v838, 0
    %841 = vmatprep.subr.mxu0 0.0
    %842 = vmatpush1.msra.mxu0 %v294
    %843 = vmatprep.subr.mxu0 0.0
    %844 = vmatpush1.msra.mxu0 %v295
    %845 = vmatprep.subr.mxu0 0.0
    %846 = vmatpush1.msra.mxu0 %v296
    %847 = vmatprep.subr.mxu0 0.0
    %848 = vmatpush1.msra.mxu0 %v297
    %849 = vmatprep.subr.mxu0 0.0
    %850 = vmatpush1.msra.mxu0 0.0
    %851 = vmatprep.subr.mxu0 0.0
    %852 = vmatpush1.msra.mxu0 0.0
    %853 = vmatprep.subr.mxu0 0.0
    %854 = vmatpush1.msra.mxu0 0.0
    %855 = vmatprep.subr.mxu0 0.0
    %856 = vmatpush1.msra.mxu0 0.0
    %857 = vmatprep.subr.mxu0 0.0
    %858 = vmatpush1.msra.mxu0 0.0
    %859 = vmatprep.subr.mxu0 0.0
    %860 = vmatpush1.msra.mxu0 0.0
    %861 = vmatprep.subr.mxu0 0.0
    %862 = vmatpush1.msra.mxu0 0.0
    %863 = vmatprep.subr.mxu0 0.0
    %864 = vmatpush1.msra.mxu0 0.0
    %865 = vmatprep.subr.mxu0 0.0
    %866 = vmatpush1.msra.mxu0 0.0
    %867 = vmatprep.subr.mxu0 0.0
    %868 = vmatpush1.msra.mxu0 0.0
    %869 = vmatprep.subr.mxu0 0.0
    %870 = vmatpush1.msra.mxu0 0.0
    %871 = vmatprep.subr.mxu0 0.0
    %872 = vmatpush1.msra.mxu0 0.0
    %873 = vmatprep.subr.mxu0 0.0
    %874 = vmatpush1.msra.mxu0 0.0
    %875 = vmatprep.subr.mxu0 0.0
    %876 = vmatpush1.msra.mxu0 0.0
    %877 = vmatprep.subr.mxu0 0.0
    %878 = vmatpush1.msra.mxu0 0.0
    %879 = vmatprep.subr.mxu0 0.0
    %880 = vmatpush1.msra.mxu0 0.0
    %881 = vmatprep.subr.mxu0 0.0
    %882 = vmatpush1.msra.mxu0 0.0
    %883 = vmatprep.subr.mxu0 0.0
    %884 = vmatpush1.msra.mxu0 0.0
    %885 = vmatprep.subr.mxu0 0.0
    %886 = vmatpush1.msra.mxu0 0.0
    %887 = vmatprep.subr.mxu0 0.0
    %888 = vmatpush1.msra.mxu0 0.0
    %889 = vmatprep.subr.mxu0 0.0
    %890 = vmatpush1.msra.mxu0 0.0
    %891 = vmatprep.subr.mxu0 0.0
    %892 = vmatpush1.msra.mxu0 0.0
    %893 = vmatprep.subr.mxu0 0.0
    %894 = vmatpush1.msra.mxu0 0.0
    %895 = vmatprep.subr.mxu0 0.0
    %896 = vmatpush1.msra.mxu0 0.0
    %897 = vmatprep.subr.mxu0 0.0
    %898 = vmatpush1.msra.mxu0 0.0
    %899 = vmatprep.subr.mxu0 0.0
    %900 = vmatpush1.msra.mxu0 0.0
    %901 = vmatprep.subr.mxu0 0.0
    %902 = vmatpush1.msra.mxu0 0.0
    %903 = vmatprep.subr.mxu0 0.0
    %904 = vmatpush1.msra.mxu0 0.0
    %905 = vmatprep.mubr.f32.mxu0 0.0
    %906 = vmatmul.mubr.f32.gmra.mrb[0].mxu0 %v839
    %v907 = vpop.f32.mrb[0].mxu0
    %v908 = vadd.f32 0.0, %v907
    %v909 = vpop.f32.mrb[0].mxu0
    %910 = vdwg.mxu0
    %v911 = vadd.f32 %v281, %v908
    %v912 = vxor.u32 %v911, 2147483648
    %v913 = vmul.f32 %v912, 1.442695
    %v914 = vpow.pop %v913
    %v915 = vadd.f32 %v914, 1.0
    %v916 = vrcp.pop %v915
    %v917 = vmul.f32 1.0, %v916
    %v918 = vtanh.pop %v911
    %v919 = vmul.f32 %v917, %v835
    %921 = vrot.lane.b32.xlu0 %v918, 32
    %v922 = vpop.permute.xlu0 %921
    %v924 = vmul.f32 %v917, %v922
    %926 = vrot.lane.b32.xlu0 %v924, 32
    %v927 = vpop.permute.xlu0 %926
    %v929 = vadd.f32 %v919, %v927
    %v930 = vtanh.pop %v929
    %932 = vrot.lane.b32.xlu0 %v930, 32
    %v933 = vpop.permute.xlu0 %932
    %v935 = vmul.f32 %v917, %v933
    %vm936 = vcmp.gt.s32.totalorder %v144, 5
    %v937 = vsel %vm936, 1, 0
    %938 = vset.pattern.permute.xlu0 0
    %939 = vperm.xlu0 %938, %v937
    %v940 = vpop.permute.xlu0 %939
    %vm941 = vcmp.eq.s32.totalorder %v940, 1
    %v942 = vsel %vm941, %v935, %v834
    %v943 = vsel %vm941, %v929, %v835
    %945 = vrot.lane.b32.xlu0 %v942, 64
    %v946 = vpop.permute.xlu0 %945
    %v947 = vsel %vm164, %v946, 0
    %949 = vmatprep.subr.mxu0 0.0
    %950 = vmatpush1.msra.mxu0 %v294
    %951 = vmatprep.subr.mxu0 0.0
    %952 = vmatpush1.msra.mxu0 %v295
    %953 = vmatprep.subr.mxu0 0.0
    %954 = vmatpush1.msra.mxu0 %v296
    %955 = vmatprep.subr.mxu0 0.0
    %956 = vmatpush1.msra.mxu0 %v297
    %957 = vmatprep.subr.mxu0 0.0
    %958 = vmatpush1.msra.mxu0 0.0
    %959 = vmatprep.subr.mxu0 0.0
    %960 = vmatpush1.msra.mxu0 0.0
    %961 = vmatprep.subr.mxu0 0.0
    %962 = vmatpush1.msra.mxu0 0.0
    %963 = vmatprep.subr.mxu0 0.0
    %964 = vmatpush1.msra.mxu0 0.0
    %965 = vmatprep.subr.mxu0 0.0
    %966 = vmatpush1.msra.mxu0 0.0
    %967 = vmatprep.subr.mxu0 0.0
    %968 = vmatpush1.msra.mxu0 0.0
    %969 = vmatprep.subr.mxu0 0.0
    %970 = vmatpush1.msra.mxu0 0.0
    %971 = vmatprep.subr.mxu0 0.0
    %972 = vmatpush1.msra.mxu0 0.0
    %973 = vmatprep.subr.mxu0 0.0
    %974 = vmatpush1.msra.mxu0 0.0
    %975 = vmatprep.subr.mxu0 0.0
    %976 = vmatpush1.msra.mxu0 0.0
    %977 = vmatprep.subr.mxu0 0.0
    %978 = vmatpush1.msra.mxu0 0.0
    %979 = vmatprep.subr.mxu0 0.0
    %980 = vmatpush1.msra.mxu0 0.0
    %981 = vmatprep.subr.mxu0 0.0
    %982 = vmatpush1.msra.mxu0 0.0
    %983 = vmatprep.subr.mxu0 0.0
    %984 = vmatpush1.msra.mxu0 0.0
    %985 = vmatprep.subr.mxu0 0.0
    %986 = vmatpush1.msra.mxu0 0.0
    %987 = vmatprep.subr.mxu0 0.0
    %988 = vmatpush1.msra.mxu0 0.0
    %989 = vmatprep.subr.mxu0 0.0
    %990 = vmatpush1.msra.mxu0 0.0
    %991 = vmatprep.subr.mxu0 0.0
    %992 = vmatpush1.msra.mxu0 0.0
    %993 = vmatprep.subr.mxu0 0.0
    %994 = vmatpush1.msra.mxu0 0.0
    %995 = vmatprep.subr.mxu0 0.0
    %996 = vmatpush1.msra.mxu0 0.0
    %997 = vmatprep.subr.mxu0 0.0
    %998 = vmatpush1.msra.mxu0 0.0
    %999 = vmatprep.subr.mxu0 0.0
    %1000 = vmatpush1.msra.mxu0 0.0
    %1001 = vmatprep.subr.mxu0 0.0
    %1002 = vmatpush1.msra.mxu0 0.0
    %1003 = vmatprep.subr.mxu0 0.0
    %1004 = vmatpush1.msra.mxu0 0.0
    %1005 = vmatprep.subr.mxu0 0.0
    %1006 = vmatpush1.msra.mxu0 0.0
    %1007 = vmatprep.subr.mxu0 0.0
    %1008 = vmatpush1.msra.mxu0 0.0
    %1009 = vmatprep.subr.mxu0 0.0
    %1010 = vmatpush1.msra.mxu0 0.0
    %1011 = vmatprep.subr.mxu0 0.0
    %1012 = vmatpush1.msra.mxu0 0.0
    %1013 = vmatprep.mubr.f32.mxu0 0.0
    %1014 = vmatmul.mubr.f32.gmra.mrb[0].mxu0 %v947
    %v1015 = vpop.f32.mrb[0].mxu0
    %v1016 = vadd.f32 0.0, %v1015
    %v1017 = vpop.f32.mrb[0].mxu0
    %1018 = vdwg.mxu0
    %v1019 = vadd.f32 %v286, %v1016
    %v1020 = vxor.u32 %v1019, 2147483648
    %v1021 = vmul.f32 %v1020, 1.442695
    %v1022 = vpow.pop %v1021
    %v1023 = vadd.f32 %v1022, 1.0
    %v1024 = vrcp.pop %v1023
    %v1025 = vmul.f32 1.0, %v1024
    %v1026 = vtanh.pop %v1019
    %v1027 = vmul.f32 %v1025, %v943
    %1029 = vrot.lane.b32.xlu0 %v1026, 32
    %v1030 = vpop.permute.xlu0 %1029
    %v1032 = vmul.f32 %v1025, %v1030
    %1034 = vrot.lane.b32.xlu0 %v1032, 32
    %v1035 = vpop.permute.xlu0 %1034
    %v1037 = vadd.f32 %v1027, %v1035
    %v1038 = vtanh.pop %v1037
    %1040 = vrot.lane.b32.xlu0 %v1038, 32
    %v1041 = vpop.permute.xlu0 %1040
    %v1043 = vmul.f32 %v1025, %v1041
    %vm1044 = vcmp.gt.s32.totalorder %v144, 6
    %v1045 = vsel %vm1044, 1, 0
    %1046 = vset.pattern.permute.xlu0 0
    %1047 = vperm.xlu0 %1046, %v1045
    %v1048 = vpop.permute.xlu0 %1047
    %vm1049 = vcmp.eq.s32.totalorder %v1048, 1
    %v1050 = vsel %vm1049, %v1043, %v942
    %v1051 = vsel %vm1049, %v1037, %v943
    %1053 = vrot.lane.b32.xlu0 %v1050, 64
    %v1054 = vpop.permute.xlu0 %1053
    %v1055 = vsel %vm164, %v1054, 0
    %1057 = vmatprep.subr.mxu0 0.0
    %1058 = vmatpush1.msra.mxu0 %v294
    %1059 = vmatprep.subr.mxu0 0.0
    %1060 = vmatpush1.msra.mxu0 %v295
    %1061 = vmatprep.subr.mxu0 0.0
    %1062 = vmatpush1.msra.mxu0 %v296
    %1063 = vmatprep.subr.mxu0 0.0
    %1064 = vmatpush1.msra.mxu0 %v297
    %1065 = vmatprep.subr.mxu0 0.0
    %1066 = vmatpush1.msra.mxu0 0.0
    %1067 = vmatprep.subr.mxu0 0.0
    %1068 = vmatpush1.msra.mxu0 0.0
    %1069 = vmatprep.subr.mxu0 0.0
    %1070 = vmatpush1.msra.mxu0 0.0
    %1071 = vmatprep.subr.mxu0 0.0
    %1072 = vmatpush1.msra.mxu0 0.0
    %1073 = vmatprep.subr.mxu0 0.0
    %1074 = vmatpush1.msra.mxu0 0.0
    %1075 = vmatprep.subr.mxu0 0.0
    %1076 = vmatpush1.msra.mxu0 0.0
    %1077 = vmatprep.subr.mxu0 0.0
    %1078 = vmatpush1.msra.mxu0 0.0
    %1079 = vmatprep.subr.mxu0 0.0
    %1080 = vmatpush1.msra.mxu0 0.0
    %1081 = vmatprep.subr.mxu0 0.0
    %1082 = vmatpush1.msra.mxu0 0.0
    %1083 = vmatprep.subr.mxu0 0.0
    %1084 = vmatpush1.msra.mxu0 0.0
    %1085 = vmatprep.subr.mxu0 0.0
    %1086 = vmatpush1.msra.mxu0 0.0
    %1087 = vmatprep.subr.mxu0 0.0
    %1088 = vmatpush1.msra.mxu0 0.0
    %1089 = vmatprep.subr.mxu0 0.0
    %1090 = vmatpush1.msra.mxu0 0.0
    %1091 = vmatprep.subr.mxu0 0.0
    %1092 = vmatpush1.msra.mxu0 0.0
    %1093 = vmatprep.subr.mxu0 0.0
    %1094 = vmatpush1.msra.mxu0 0.0
    %1095 = vmatprep.subr.mxu0 0.0
    %1096 = vmatpush1.msra.mxu0 0.0
    %1097 = vmatprep.subr.mxu0 0.0
    %1098 = vmatpush1.msra.mxu0 0.0
    %1099 = vmatprep.subr.mxu0 0.0
    %1100 = vmatpush1.msra.mxu0 0.0
    %1101 = vmatprep.subr.mxu0 0.0
    %1102 = vmatpush1.msra.mxu0 0.0
    %1103 = vmatprep.subr.mxu0 0.0
    %1104 = vmatpush1.msra.mxu0 0.0
    %1105 = vmatprep.subr.mxu0 0.0
    %1106 = vmatpush1.msra.mxu0 0.0
    %1107 = vmatprep.subr.mxu0 0.0
    %1108 = vmatpush1.msra.mxu0 0.0
    %1109 = vmatprep.subr.mxu0 0.0
    %1110 = vmatpush1.msra.mxu0 0.0
    %1111 = vmatprep.subr.mxu0 0.0
    %1112 = vmatpush1.msra.mxu0 0.0
    %1113 = vmatprep.subr.mxu0 0.0
    %1114 = vmatpush1.msra.mxu0 0.0
    %1115 = vmatprep.subr.mxu0 0.0
    %1116 = vmatpush1.msra.mxu0 0.0
    %1117 = vmatprep.subr.mxu0 0.0
    %1118 = vmatpush1.msra.mxu0 0.0
    %1119 = vmatprep.subr.mxu0 0.0
    %1120 = vmatpush1.msra.mxu0 0.0
    %1121 = vmatprep.mubr.f32.mxu0 0.0
    %1122 = vmatmul.mubr.f32.gmra.mrb[0].mxu0 %v1055
    %v1123 = vpop.f32.mrb[0].mxu0
    %v1124 = vadd.f32 0.0, %v1123
    %v1125 = vpop.f32.mrb[0].mxu0
    %1126 = vdwg.mxu0
    %v1127 = vadd.f32 %v291, %v1124
    %v1128 = vxor.u32 %v1127, 2147483648
    %v1129 = vmul.f32 %v1128, 1.442695
    %v1130 = vpow.pop %v1129
    %v1131 = vadd.f32 %v1130, 1.0
    %v1132 = vrcp.pop %v1131
    %v1133 = vmul.f32 1.0, %v1132
    %v1134 = vtanh.pop %v1127
    %v1135 = vmul.f32 %v1133, %v1051
    %1137 = vrot.lane.b32.xlu0 %v1134, 32
    %v1138 = vpop.permute.xlu0 %1137
    %v1140 = vmul.f32 %v1133, %v1138
    %1142 = vrot.lane.b32.xlu0 %v1140, 32
    %v1143 = vpop.permute.xlu0 %1142
    %v1145 = vadd.f32 %v1135, %v1143
    %v1146 = vtanh.pop %v1145
    %1148 = vrot.lane.b32.xlu0 %v1146, 32
    %v1149 = vpop.permute.xlu0 %1148
    %v1151 = vmul.f32 %v1133, %v1149
    %vm1152 = vcmp.gt.s32.totalorder %v144, 7
    %v1153 = vsel %vm1152, 1, 0
    %1154 = vset.pattern.permute.xlu0 0
    %1155 = vperm.xlu0 %1154, %v1153
    %v1156 = vpop.permute.xlu0 %1155
    %vm1157 = vcmp.eq.s32.totalorder %v1156, 1
    %v1158 = vsel %vm1157, %v1151, %v1050
    %v1159 = vsel %vm1157, %v1145, %v1051
    %v1160 = vld [vmem:[%s5] sm:$0xff]
    %v1161 = vld [vmem:[%s5 + $0x8] sm:$0xff]
    %v1162 = vld [vmem:[%s5 + $0x10] sm:$0xff]
    %v1163 = vld [vmem:[%s5 + $0x18] sm:$0xff]
    %v1164 = vld [vmem:[%s5 + $0x20] sm:$0xff]
    %v1165 = vld [vmem:[%s5 + $0x28] sm:$0xff]
    %v1166 = vld [vmem:[%s5 + $0x30] sm:$0xff]
    %v1167 = vld [vmem:[%s5 + $0x38] sm:$0xff]
    %v1168 = vld [vmem:[%s5 + $0x40] sm:$0xff]
    %v1169 = vld [vmem:[%s5 + $0x48] sm:$0xff]
    %v1170 = vld [vmem:[%s5 + $0x50] sm:$0xff]
    %v1171 = vld [vmem:[%s5 + $0x58] sm:$0xff]
    %v1172 = vld [vmem:[%s5 + $0x60] sm:$0xff]
    %v1173 = vld [vmem:[%s5 + $0x68] sm:$0xff]
    %v1174 = vld [vmem:[%s5 + $0x70] sm:$0xff]
    %v1175 = vld [vmem:[%s5 + $0x78] sm:$0xff]
    %v1176 = vld [vmem:[%s5 + $0x80] sm:$0xff]
    %v1177 = vld [vmem:[%s5 + $0x88] sm:$0xff]
    %v1178 = vld [vmem:[%s5 + $0x90] sm:$0xff]
    %v1179 = vld [vmem:[%s5 + $0x98] sm:$0xff]
    %v1180 = vld [vmem:[%s5 + $0xa0] sm:$0xff]
    %v1181 = vld [vmem:[%s5 + $0xa8] sm:$0xff]
    %v1182 = vld [vmem:[%s5 + $0xb0] sm:$0xff]
    %v1183 = vld [vmem:[%s5 + $0xb8] sm:$0xff]
    %v1184 = vld [vmem:[%s5 + $0xc0] sm:$0xff]
    %v1185 = vld [vmem:[%s5 + $0xc8] sm:$0xff]
    %v1186 = vld [vmem:[%s5 + $0xd0] sm:$0xff]
    %v1187 = vld [vmem:[%s5 + $0xd8] sm:$0xff]
    %v1188 = vld [vmem:[%s5 + $0xe0] sm:$0xff]
    %v1189 = vld [vmem:[%s5 + $0xe8] sm:$0xff]
    %v1190 = vld [vmem:[%s5 + $0xf0] sm:$0xff]
    %v1191 = vld [vmem:[%s5 + $0xf8] sm:$0xff]
    %v1192 = vld [vmem:[%s5 + $0x100] sm:$0xff]
    %v1193 = vld [vmem:[%s5 + $0x108] sm:$0xff]
    %v1194 = vld [vmem:[%s5 + $0x110] sm:$0xff]
    %v1195 = vld [vmem:[%s5 + $0x118] sm:$0xff]
    %v1196 = vld [vmem:[%s5 + $0x120] sm:$0xff]
    %v1197 = vld [vmem:[%s5 + $0x128] sm:$0xff]
    %v1198 = vld [vmem:[%s5 + $0x130] sm:$0xff]
    %v1199 = vld [vmem:[%s5 + $0x138] sm:$0xff]
    %v1200 = vld [vmem:[%s5 + $0x140] sm:$0xff]
    %v1201 = vld [vmem:[%s5 + $0x148] sm:$0xff]
    %v1202 = vld [vmem:[%s5 + $0x150] sm:$0xff]
    %v1203 = vld [vmem:[%s5 + $0x158] sm:$0xff]
    %v1204 = vld [vmem:[%s5 + $0x160] sm:$0xff]
    %v1205 = vld [vmem:[%s5 + $0x168] sm:$0xff]
    %v1206 = vld [vmem:[%s5 + $0x170] sm:$0xff]
    %v1207 = vld [vmem:[%s5 + $0x178] sm:$0xff]
    %v1208 = vld [vmem:[%s5 + $0x180] sm:$0xff]
    %v1209 = vld [vmem:[%s5 + $0x188] sm:$0xff]
    %v1210 = vld [vmem:[%s5 + $0x190] sm:$0xff]
    %v1211 = vld [vmem:[%s5 + $0x198] sm:$0xff]
    %v1212 = vld [vmem:[%s5 + $0x1a0] sm:$0xff]
    %v1213 = vld [vmem:[%s5 + $0x1a8] sm:$0xff]
    %v1214 = vld [vmem:[%s5 + $0x1b0] sm:$0xff]
    %v1215 = vld [vmem:[%s5 + $0x1b8] sm:$0xff]
    %v1216 = vld [vmem:[%s5 + $0x1c0] sm:$0xff]
    %v1217 = vld [vmem:[%s5 + $0x1c8] sm:$0xff]
    %v1218 = vld [vmem:[%s5 + $0x1d0] sm:$0xff]
    %v1219 = vld [vmem:[%s5 + $0x1d8] sm:$0xff]
    %v1220 = vld [vmem:[%s5 + $0x1e0] sm:$0xff]
    %v1221 = vld [vmem:[%s5 + $0x1e8] sm:$0xff]
    %v1222 = vld [vmem:[%s5 + $0x1f0] sm:$0xff]
    %v1223 = vld [vmem:[%s5 + $0x1f8] sm:$0xff]
    %v1224 = vld [vmem:[%s5 + $0x200] sm:$0xff]
    %v1225 = vld [vmem:[%s5 + $0x208] sm:$0xff]
    %v1226 = vld [vmem:[%s5 + $0x210] sm:$0xff]
    %v1227 = vld [vmem:[%s5 + $0x218] sm:$0xff]
    %v1228 = vld [vmem:[%s5 + $0x220] sm:$0xff]
    %v1229 = vld [vmem:[%s5 + $0x228] sm:$0xff]
    %v1230 = vld [vmem:[%s5 + $0x230] sm:$0xff]
    %v1231 = vld [vmem:[%s5 + $0x238] sm:$0xff]
    %v1232 = vld [vmem:[#allocation7] sm:$0xff]
    %v1233 = vld [vmem:[#allocation7 + $0x8] sm:$0xff]
    %v1234 = vld [vmem:[#allocation7 + $0x10] sm:$0xff]
    %v1235 = vld [vmem:[#allocation7 + $0x18] sm:$0xff]
    %v1236 = vld [vmem:[#allocation7 + $0x20] sm:$0xff]
    %v1237 = vld [vmem:[#allocation7 + $0x28] sm:$0xff]
    %v1238 = vld [vmem:[#allocation7 + $0x30] sm:$0xff]
    %v1239 = vld [vmem:[#allocation7 + $0x38] sm:$0xff]
    %v1240 = vld [vmem:[#allocation7 + $0x40] sm:$0xff]
    %v1241 = vld [vmem:[#allocation7 + $0x48] sm:$0xff]
    %v1242 = vld [vmem:[#allocation7 + $0x50] sm:$0xff]
    %v1243 = vld [vmem:[#allocation7 + $0x58] sm:$0xff]
    %v1244 = vld [vmem:[#allocation7 + $0x60] sm:$0xff]
    %v1245 = vld [vmem:[#allocation7 + $0x68] sm:$0xff]
    %v1246 = vld [vmem:[#allocation7 + $0x70] sm:$0xff]
    %v1247 = vld [vmem:[#allocation7 + $0x78] sm:$0xff]
    %v1248 = vld [vmem:[#allocation7 + $0x80] sm:$0xff]
    %v1249 = vld [vmem:[#allocation7 + $0x88] sm:$0xff]
    %v1250 = vld [vmem:[#allocation7 + $0x90] sm:$0xff]
    %v1251 = vld [vmem:[#allocation7 + $0x98] sm:$0xff]
    %v1252 = vld [vmem:[#allocation7 + $0xa0] sm:$0xff]
    %v1253 = vld [vmem:[#allocation7 + $0xa8] sm:$0xff]
    %v1254 = vld [vmem:[#allocation7 + $0xb0] sm:$0xff]
    %v1255 = vld [vmem:[#allocation7 + $0xb8] sm:$0xff]
    %v1256 = vld [vmem:[#allocation7 + $0xc0] sm:$0xff]
    %v1257 = vld [vmem:[#allocation7 + $0xc8] sm:$0xff]
    %v1258 = vld [vmem:[#allocation7 + $0xd0] sm:$0xff]
    %v1259 = vld [vmem:[#allocation7 + $0xd8] sm:$0xff]
    %v1260 = vld [vmem:[#allocation7 + $0xe0] sm:$0xff]
    %v1261 = vld [vmem:[#allocation7 + $0xe8] sm:$0xff]
    %v1262 = vld [vmem:[#allocation7 + $0xf0] sm:$0xff]
    %v1263 = vld [vmem:[#allocation7 + $0xf8] sm:$0xff]
    %v1264 = vld [vmem:[#allocation7 + $0x100] sm:$0xff]
    %v1265 = vld [vmem:[#allocation7 + $0x108] sm:$0xff]
    %v1266 = vld [vmem:[#allocation7 + $0x110] sm:$0xff]
    %v1267 = vld [vmem:[#allocation7 + $0x118] sm:$0xff]
    %v1268 = vld [vmem:[#allocation7 + $0x120] sm:$0xff]
    %v1269 = vld [vmem:[#allocation7 + $0x128] sm:$0xff]
    %v1270 = vld [vmem:[#allocation7 + $0x130] sm:$0xff]
    %v1271 = vld [vmem:[#allocation7 + $0x138] sm:$0xff]
    %v1272 = vld [vmem:[#allocation7 + $0x140] sm:$0xff]
    %v1273 = vld [vmem:[#allocation7 + $0x148] sm:$0xff]
    %v1274 = vld [vmem:[#allocation7 + $0x150] sm:$0xff]
    %v1275 = vld [vmem:[#allocation7 + $0x158] sm:$0xff]
    %v1276 = vld [vmem:[#allocation7 + $0x160] sm:$0xff]
    %v1277 = vld [vmem:[#allocation7 + $0x168] sm:$0xff]
    %v1278 = vld [vmem:[#allocation7 + $0x170] sm:$0xff]
    %v1279 = vld [vmem:[#allocation7 + $0x178] sm:$0xff]
    %v1280 = vld [vmem:[#allocation7 + $0x180] sm:$0xff]
    %v1281 = vld [vmem:[#allocation7 + $0x188] sm:$0xff]
    %v1282 = vld [vmem:[#allocation7 + $0x190] sm:$0xff]
    %v1283 = vld [vmem:[#allocation7 + $0x198] sm:$0xff]
    %v1284 = vld [vmem:[#allocation7 + $0x1a0] sm:$0xff]
    %v1285 = vld [vmem:[#allocation7 + $0x1a8] sm:$0xff]
    %v1286 = vld [vmem:[#allocation7 + $0x1b0] sm:$0xff]
    %v1287 = vld [vmem:[#allocation7 + $0x1b8] sm:$0xff]
    %v1288 = vld [vmem:[#allocation7 + $0x1c0] sm:$0xff]
    %v1289 = vld [vmem:[#allocation7 + $0x1c8] sm:$0xff]
    %v1290 = vld [vmem:[#allocation7 + $0x1d0] sm:$0xff]
    %v1291 = vld [vmem:[#allocation7 + $0x1d8] sm:$0xff]
    %v1292 = vld [vmem:[#allocation7 + $0x1e0] sm:$0xff]
    %v1293 = vld [vmem:[#allocation7 + $0x1e8] sm:$0xff]
    %v1294 = vld [vmem:[#allocation7 + $0x1f0] sm:$0xff]
    %v1295 = vld [vmem:[#allocation7 + $0x1f8] sm:$0xff]
    %v1296 = vld [vmem:[#allocation7 + $0x200] sm:$0xff]
    %v1297 = vld [vmem:[#allocation7 + $0x208] sm:$0xff]
    %v1298 = vld [vmem:[#allocation7 + $0x210] sm:$0xff]
    %v1299 = vld [vmem:[#allocation7 + $0x218] sm:$0xff]
    %v1300 = vld [vmem:[#allocation7 + $0x220] sm:$0xff]
    %v1301 = vld [vmem:[#allocation7 + $0x228] sm:$0xff]
    %v1302 = vld [vmem:[#allocation7 + $0x230] sm:$0xff]
    %v1303 = vld [vmem:[#allocation7 + $0x238] sm:$0xff]
    %v1304 = vld [vmem:[#allocation7 + $0x240] sm:$0xff]
    %v1305 = vld [vmem:[#allocation7 + $0x248] sm:$0xff]
    %v1306 = vld [vmem:[#allocation7 + $0x250] sm:$0xff]
    %v1307 = vld [vmem:[#allocation7 + $0x258] sm:$0xff]
    %v1308 = vld [vmem:[#allocation7 + $0x260] sm:$0xff]
    %v1309 = vld [vmem:[#allocation7 + $0x268] sm:$0xff]
    %v1310 = vld [vmem:[#allocation7 + $0x270] sm:$0xff]
    %v1311 = vld [vmem:[#allocation7 + $0x278] sm:$0xff]
    %v1312 = vld [vmem:[#allocation7 + $0x280] sm:$0xff]
    %v1313 = vld [vmem:[#allocation7 + $0x288] sm:$0xff]
    %v1314 = vld [vmem:[#allocation7 + $0x290] sm:$0xff]
    %v1315 = vld [vmem:[#allocation7 + $0x298] sm:$0xff]
    %v1316 = vld [vmem:[#allocation7 + $0x2a0] sm:$0xff]
    %v1317 = vld [vmem:[#allocation7 + $0x2a8] sm:$0xff]
    %v1318 = vld [vmem:[#allocation7 + $0x2b0] sm:$0xff]
    %v1319 = vld [vmem:[#allocation7 + $0x2b8] sm:$0xff]
    %v1320 = vld [vmem:[#allocation7 + $0x2c0] sm:$0xff]
    %v1321 = vld [vmem:[#allocation7 + $0x2c8] sm:$0xff]
    %v1322 = vld [vmem:[#allocation7 + $0x2d0] sm:$0xff]
    %v1323 = vld [vmem:[#allocation7 + $0x2d8] sm:$0xff]
    %v1324 = vld [vmem:[#allocation7 + $0x2e0] sm:$0xff]
    %v1325 = vld [vmem:[#allocation7 + $0x2e8] sm:$0xff]
    %v1326 = vld [vmem:[#allocation7 + $0x2f0] sm:$0xff]
    %v1327 = vld [vmem:[#allocation7 + $0x2f8] sm:$0xff]
    %v1328 = vld [vmem:[#allocation7 + $0x300] sm:$0xff]
    %v1329 = vld [vmem:[#allocation7 + $0x308] sm:$0xff]
    %v1330 = vld [vmem:[#allocation7 + $0x310] sm:$0xff]
    %v1331 = vld [vmem:[#allocation7 + $0x318] sm:$0xff]
    %v1332 = vld [vmem:[#allocation7 + $0x320] sm:$0xff]
    %v1333 = vld [vmem:[#allocation7 + $0x328] sm:$0xff]
    %v1334 = vld [vmem:[#allocation7 + $0x330] sm:$0xff]
    %v1335 = vld [vmem:[#allocation7 + $0x338] sm:$0xff]
    %v1336 = vld [vmem:[#allocation7 + $0x340] sm:$0xff]
    %v1337 = vld [vmem:[#allocation7 + $0x348] sm:$0xff]
    %v1338 = vld [vmem:[#allocation7 + $0x350] sm:$0xff]
    %v1339 = vld [vmem:[#allocation7 + $0x358] sm:$0xff]
    %v1340 = vld [vmem:[#allocation7 + $0x360] sm:$0xff]
    %v1341 = vld [vmem:[#allocation7 + $0x368] sm:$0xff]
    %v1342 = vld [vmem:[#allocation7 + $0x370] sm:$0xff]
    %v1343 = vld [vmem:[#allocation7 + $0x378] sm:$0xff]
    %v1344 = vld [vmem:[#allocation7 + $0x380] sm:$0xff]
    %v1345 = vld [vmem:[#allocation7 + $0x388] sm:$0xff]
    %v1346 = vld [vmem:[#allocation7 + $0x390] sm:$0xff]
    %v1347 = vld [vmem:[#allocation7 + $0x398] sm:$0xff]
    %v1348 = vld [vmem:[#allocation7 + $0x3a0] sm:$0xff]
    %v1349 = vld [vmem:[#allocation7 + $0x3a8] sm:$0xff]
    %v1350 = vld [vmem:[#allocation7 + $0x3b0] sm:$0xff]
    %v1351 = vld [vmem:[#allocation7 + $0x3b8] sm:$0xff]
    %v1352 = vld [vmem:[#allocation7 + $0x3c0] sm:$0xff]
    %v1353 = vld [vmem:[#allocation7 + $0x3c8] sm:$0xff]
    %v1354 = vld [vmem:[#allocation7 + $0x3d0] sm:$0xff]
    %v1355 = vld [vmem:[#allocation7 + $0x3d8] sm:$0xff]
    %v1356 = vld [vmem:[#allocation7 + $0x3e0] sm:$0xff]
    %v1357 = vld [vmem:[#allocation7 + $0x3e8] sm:$0xff]
    %v1358 = vld [vmem:[#allocation7 + $0x3f0] sm:$0xff]
    %v1359 = vld [vmem:[#allocation7 + $0x3f8] sm:$0xff]
    %v1360 = vld [vmem:[#allocation9] sm:$0x1]
    %v1362 = vlaneseq
    %v1363 = vshrl.u32 %v1362, 7
    %v1364 = vsub.s32 0, %v1363
    %v1365 = vrot.slane %v1360, %v1364
    %1367 = vmatprep.subr.mxu0 0.0
    %1368 = vmatpush1.msra.mxu0 %v1232
    %1369 = vmatprep.subr.mxu0 0.0
    %1370 = vmatpush1.msra.mxu0 %v1233
    %1371 = vmatprep.subr.mxu0 0.0
    %1372 = vmatpush1.msra.mxu0 %v1234
    %1373 = vmatprep.subr.mxu0 0.0
    %1374 = vmatpush1.msra.mxu0 %v1235
    %1375 = vmatprep.subr.mxu0 0.0
    %1376 = vmatpush1.msra.mxu0 %v1236
    %1377 = vmatprep.subr.mxu0 0.0
    %1378 = vmatpush1.msra.mxu0 %v1237
    %1379 = vmatprep.subr.mxu0 0.0
    %1380 = vmatpush1.msra.mxu0 %v1238
    %1381 = vmatprep.subr.mxu0 0.0
    %1382 = vmatpush1.msra.mxu0 %v1239
    %1383 = vmatprep.subr.mxu0 0.0
    %1384 = vmatpush1.msra.mxu0 %v1240
    %1385 = vmatprep.subr.mxu0 0.0
    %1386 = vmatpush1.msra.mxu0 %v1241
    %1387 = vmatprep.subr.mxu0 0.0
    %1388 = vmatpush1.msra.mxu0 %v1242
    %1389 = vmatprep.subr.mxu0 0.0
    %1390 = vmatpush1.msra.mxu0 %v1243
    %1391 = vmatprep.subr.mxu0 0.0
    %1392 = vmatpush1.msra.mxu0 %v1244
    %1393 = vmatprep.subr.mxu0 0.0
    %1394 = vmatpush1.msra.mxu0 %v1245
    %1395 = vmatprep.subr.mxu0 0.0
    %1396 = vmatpush1.msra.mxu0 %v1246
    %1397 = vmatprep.subr.mxu0 0.0
    %1398 = vmatpush1.msra.mxu0 %v1247
    %1399 = vmatprep.subr.mxu0 0.0
    %1400 = vmatpush1.msra.mxu0 %v1248
    %1401 = vmatprep.subr.mxu0 0.0
    %1402 = vmatpush1.msra.mxu0 %v1249
    %1403 = vmatprep.subr.mxu0 0.0
    %1404 = vmatpush1.msra.mxu0 %v1250
    %1405 = vmatprep.subr.mxu0 0.0
    %1406 = vmatpush1.msra.mxu0 %v1251
    %1407 = vmatprep.subr.mxu0 0.0
    %1408 = vmatpush1.msra.mxu0 %v1252
    %1409 = vmatprep.subr.mxu0 0.0
    %1410 = vmatpush1.msra.mxu0 %v1253
    %1411 = vmatprep.subr.mxu0 0.0
    %1412 = vmatpush1.msra.mxu0 %v1254
    %1413 = vmatprep.subr.mxu0 0.0
    %1414 = vmatpush1.msra.mxu0 %v1255
    %1415 = vmatprep.subr.mxu0 0.0
    %1416 = vmatpush1.msra.mxu0 %v1256
    %1417 = vmatprep.subr.mxu0 0.0
    %1418 = vmatpush1.msra.mxu0 %v1257
    %1419 = vmatprep.subr.mxu0 0.0
    %1420 = vmatpush1.msra.mxu0 %v1258
    %1421 = vmatprep.subr.mxu0 0.0
    %1422 = vmatpush1.msra.mxu0 %v1259
    %1423 = vmatprep.subr.mxu0 0.0
    %1424 = vmatpush1.msra.mxu0 %v1260
    %1425 = vmatprep.subr.mxu0 0.0
    %1426 = vmatpush1.msra.mxu0 %v1261
    %1427 = vmatprep.subr.mxu0 0.0
    %1428 = vmatpush1.msra.mxu0 %v1262
    %1429 = vmatprep.subr.mxu0 0.0
    %1430 = vmatpush1.msra.mxu0 %v1263
    %1431 = vmatprep.mubr.f32.mxu0 %v1161
    %1432 = vmatmul.mubr.f32.gmra.mrb[0].mxu0 %v1160
    %v1433 = vpop.f32.mrb[0].mxu0
    %v1434 = vadd.f32 %v1365, %v1433
    %v1435 = vpop.f32.mrb[0].mxu0
    %1436 = vmatprep.mubr.f32.mxu0 %v1169
    %1437 = vmatmul.mubr.f32.gmra.mrb[0].mxu0 %v1168
    %v1438 = vpop.f32.mrb[0].mxu0
    %v1439 = vadd.f32 %v1365, %v1438
    %v1440 = vpop.f32.mrb[0].mxu0
    %1441 = vmatprep.mubr.f32.mxu0 %v1177
    %1442 = vmatmul.mubr.f32.gmra.mrb[0].mxu0 %v1176
    %v1443 = vpop.f32.mrb[0].mxu0
    %v1444 = vadd.f32 %v1365, %v1443
    %v1445 = vpop.f32.mrb[0].mxu0
    %1446 = vmatprep.mubr.f32.mxu0 %v1185
    %1447 = vmatmul.mubr.f32.gmra.mrb[0].mxu0 %v1184
    %v1448 = vpop.f32.mrb[0].mxu0
    %v1449 = vadd.f32 %v1365, %v1448
    %v1450 = vpop.f32.mrb[0].mxu0
    %1451 = vmatprep.mubr.f32.mxu0 %v1193
    %1452 = vmatmul.mubr.f32.gmra.mrb[0].mxu0 %v1192
    %v1453 = vpop.f32.mrb[0].mxu0
    %v1454 = vadd.f32 %v1365, %v1453
    %v1455 = vpop.f32.mrb[0].mxu0
    %1456 = vmatprep.mubr.f32.mxu0 %v1201
    %1457 = vmatmul.mubr.f32.gmra.mrb[0].mxu0 %v1200
    %v1458 = vpop.f32.mrb[0].mxu0
    %v1459 = vadd.f32 %v1365, %v1458
    %v1460 = vpop.f32.mrb[0].mxu0
    %1461 = vmatprep.mubr.f32.mxu0 %v1209
    %1462 = vmatmul.mubr.f32.gmra.mrb[0].mxu0 %v1208
    %v1463 = vpop.f32.mrb[0].mxu0
    %v1464 = vadd.f32 %v1365, %v1463
    %v1465 = vpop.f32.mrb[0].mxu0
    %1466 = vmatprep.mubr.f32.mxu0 %v1217
    %1467 = vmatmul.mubr.f32.gmra.mrb[0].mxu0 %v1216
    %v1468 = vpop.f32.mrb[0].mxu0
    %v1469 = vadd.f32 %v1365, %v1468
    %v1470 = vpop.f32.mrb[0].mxu0
    %1471 = vmatprep.mubr.f32.mxu0 %v1225
    %1472 = vmatmul.mubr.f32.gmra.mrb[0].mxu0 %v1224
    %v1473 = vpop.f32.mrb[0].mxu0
    %v1474 = vadd.f32 %v1365, %v1473
    %v1475 = vpop.f32.mrb[0].mxu0
    %1476 = vdwg.mxu0
    %1477 = vmatprep.subr.mxu0 0.0
    %1478 = vmatpush1.msra.mxu0 %v1264
    %1479 = vmatprep.subr.mxu0 0.0
    %1480 = vmatpush1.msra.mxu0 %v1265
    %1481 = vmatprep.subr.mxu0 0.0
    %1482 = vmatpush1.msra.mxu0 %v1266
    %1483 = vmatprep.subr.mxu0 0.0
    %1484 = vmatpush1.msra.mxu0 %v1267
    %1485 = vmatprep.subr.mxu0 0.0
    %1486 = vmatpush1.msra.mxu0 %v1268
    %1487 = vmatprep.subr.mxu0 0.0
    %1488 = vmatpush1.msra.mxu0 %v1269
    %1489 = vmatprep.subr.mxu0 0.0
    %1490 = vmatpush1.msra.mxu0 %v1270
    %1491 = vmatprep.subr.mxu0 0.0
    %1492 = vmatpush1.msra.mxu0 %v1271
    %1493 = vmatprep.subr.mxu0 0.0
    %1494 = vmatpush1.msra.mxu0 %v1272
    %1495 = vmatprep.subr.mxu0 0.0
    %1496 = vmatpush1.msra.mxu0 %v1273
    %1497 = vmatprep.subr.mxu0 0.0
    %1498 = vmatpush1.msra.mxu0 %v1274
    %1499 = vmatprep.subr.mxu0 0.0
    %1500 = vmatpush1.msra.mxu0 %v1275
    %1501 = vmatprep.subr.mxu0 0.0
    %1502 = vmatpush1.msra.mxu0 %v1276
    %1503 = vmatprep.subr.mxu0 0.0
    %1504 = vmatpush1.msra.mxu0 %v1277
    %1505 = vmatprep.subr.mxu0 0.0
    %1506 = vmatpush1.msra.mxu0 %v1278
    %1507 = vmatprep.subr.mxu0 0.0
    %1508 = vmatpush1.msra.mxu0 %v1279
    %1509 = vmatprep.subr.mxu0 0.0
    %1510 = vmatpush1.msra.mxu0 %v1280
    %1511 = vmatprep.subr.mxu0 0.0
    %1512 = vmatpush1.msra.mxu0 %v1281
    %1513 = vmatprep.subr.mxu0 0.0
    %1514 = vmatpush1.msra.mxu0 %v1282
    %1515 = vmatprep.subr.mxu0 0.0
    %1516 = vmatpush1.msra.mxu0 %v1283
    %1517 = vmatprep.subr.mxu0 0.0
    %1518 = vmatpush1.msra.mxu0 %v1284
    %1519 = vmatprep.subr.mxu0 0.0
    %1520 = vmatpush1.msra.mxu0 %v1285
    %1521 = vmatprep.subr.mxu0 0.0
    %1522 = vmatpush1.msra.mxu0 %v1286
    %1523 = vmatprep.subr.mxu0 0.0
    %1524 = vmatpush1.msra.mxu0 %v1287
    %1525 = vmatprep.subr.mxu0 0.0
    %1526 = vmatpush1.msra.mxu0 %v1288
    %1527 = vmatprep.subr.mxu0 0.0
    %1528 = vmatpush1.msra.mxu0 %v1289
    %1529 = vmatprep.subr.mxu0 0.0
    %1530 = vmatpush1.msra.mxu0 %v1290
    %1531 = vmatprep.subr.mxu0 0.0
    %1532 = vmatpush1.msra.mxu0 %v1291
    %1533 = vmatprep.subr.mxu0 0.0
    %1534 = vmatpush1.msra.mxu0 %v1292
    %1535 = vmatprep.subr.mxu0 0.0
    %1536 = vmatpush1.msra.mxu0 %v1293
    %1537 = vmatprep.subr.mxu0 0.0
    %1538 = vmatpush1.msra.mxu0 %v1294
    %1539 = vmatprep.subr.mxu0 0.0
    %1540 = vmatpush1.msra.mxu0 %v1295
    %1541 = vmatprep.mubr.f32.mxu0 %v1163
    %1542 = vmatmul.mubr.f32.gmra.mrb[0].mxu0 %v1162
    %v1543 = vpop.f32.mrb[0].mxu0
    %v1544 = vadd.f32 %v1434, %v1543
    %v1545 = vpop.f32.mrb[0].mxu0
    %1546 = vmatprep.mubr.f32.mxu0 %v1171
    %1547 = vmatmul.mubr.f32.gmra.mrb[0].mxu0 %v1170
    %v1548 = vpop.f32.mrb[0].mxu0
    %v1549 = vadd.f32 %v1439, %v1548
    %v1550 = vpop.f32.mrb[0].mxu0
    %1551 = vmatprep.mubr.f32.mxu0 %v1179
    %1552 = vmatmul.mubr.f32.gmra.mrb[0].mxu0 %v1178
    %v1553 = vpop.f32.mrb[0].mxu0
    %v1554 = vadd.f32 %v1444, %v1553
    %v1555 = vpop.f32.mrb[0].mxu0
    %1556 = vmatprep.mubr.f32.mxu0 %v1187
    %1557 = vmatmul.mubr.f32.gmra.mrb[0].mxu0 %v1186
    %v1558 = vpop.f32.mrb[0].mxu0
    %v1559 = vadd.f32 %v1449, %v1558
    %v1560 = vpop.f32.mrb[0].mxu0
    %1561 = vmatprep.mubr.f32.mxu0 %v1195
    %1562 = vmatmul.mubr.f32.gmra.mrb[0].mxu0 %v1194
    %v1563 = vpop.f32.mrb[0].mxu0
    %v1564 = vadd.f32 %v1454, %v1563
    %v1565 = vpop.f32.mrb[0].mxu0
    %1566 = vmatprep.mubr.f32.mxu0 %v1203
    %1567 = vmatmul.mubr.f32.gmra.mrb[0].mxu0 %v1202
    %v1568 = vpop.f32.mrb[0].mxu0
    %v1569 = vadd.f32 %v1459, %v1568
    %v1570 = vpop.f32.mrb[0].mxu0
    %1571 = vmatprep.mubr.f32.mxu0 %v1211
    %1572 = vmatmul.mubr.f32.gmra.mrb[0].mxu0 %v1210
    %v1573 = vpop.f32.mrb[0].mxu0
    %v1574 = vadd.f32 %v1464, %v1573
    %v1575 = vpop.f32.mrb[0].mxu0
    %1576 = vmatprep.mubr.f32.mxu0 %v1219
    %1577 = vmatmul.mubr.f32.gmra.mrb[0].mxu0 %v1218
    %v1578 = vpop.f32.mrb[0].mxu0
    %v1579 = vadd.f32 %v1469, %v1578
    %v1580 = vpop.f32.mrb[0].mxu0
    %1581 = vmatprep.mubr.f32.mxu0 %v1227
    %1582 = vmatmul.mubr.f32.gmra.mrb[0].mxu0 %v1226
    %v1583 = vpop.f32.mrb[0].mxu0
    %v1584 = vadd.f32 %v1474, %v1583
    %v1585 = vpop.f32.mrb[0].mxu0
    %1586 = vdwg.mxu0
    %1587 = vmatprep.subr.mxu0 0.0
    %1588 = vmatpush1.msra.mxu0 %v1296
    %1589 = vmatprep.subr.mxu0 0.0
    %1590 = vmatpush1.msra.mxu0 %v1297
    %1591 = vmatprep.subr.mxu0 0.0
    %1592 = vmatpush1.msra.mxu0 %v1298
    %1593 = vmatprep.subr.mxu0 0.0
    %1594 = vmatpush1.msra.mxu0 %v1299
    %1595 = vmatprep.subr.mxu0 0.0
    %1596 = vmatpush1.msra.mxu0 %v1300
    %1597 = vmatprep.subr.mxu0 0.0
    %1598 = vmatpush1.msra.mxu0 %v1301
    %1599 = vmatprep.subr.mxu0 0.0
    %1600 = vmatpush1.msra.mxu0 %v1302
    %1601 = vmatprep.subr.mxu0 0.0
    %1602 = vmatpush1.msra.mxu0 %v1303
    %1603 = vmatprep.subr.mxu0 0.0
    %1604 = vmatpush1.msra.mxu0 %v1304
    %1605 = vmatprep.subr.mxu0 0.0
    %1606 = vmatpush1.msra.mxu0 %v1305
    %1607 = vmatprep.subr.mxu0 0.0
    %1608 = vmatpush1.msra.mxu0 %v1306
    %1609 = vmatprep.subr.mxu0 0.0
    %1610 = vmatpush1.msra.mxu0 %v1307
    %1611 = vmatprep.subr.mxu0 0.0
    %1612 = vmatpush1.msra.mxu0 %v1308
    %1613 = vmatprep.subr.mxu0 0.0
    %1614 = vmatpush1.msra.mxu0 %v1309
    %1615 = vmatprep.subr.mxu0 0.0
    %1616 = vmatpush1.msra.mxu0 %v1310
    %1617 = vmatprep.subr.mxu0 0.0
    %1618 = vmatpush1.msra.mxu0 %v1311
    %1619 = vmatprep.subr.mxu0 0.0
    %1620 = vmatpush1.msra.mxu0 %v1312
    %1621 = vmatprep.subr.mxu0 0.0
    %1622 = vmatpush1.msra.mxu0 %v1313
    %1623 = vmatprep.subr.mxu0 0.0
    %1624 = vmatpush1.msra.mxu0 %v1314
    %1625 = vmatprep.subr.mxu0 0.0
    %1626 = vmatpush1.msra.mxu0 %v1315
    %1627 = vmatprep.subr.mxu0 0.0
    %1628 = vmatpush1.msra.mxu0 %v1316
    %1629 = vmatprep.subr.mxu0 0.0
    %1630 = vmatpush1.msra.mxu0 %v1317
    %1631 = vmatprep.subr.mxu0 0.0
    %1632 = vmatpush1.msra.mxu0 %v1318
    %1633 = vmatprep.subr.mxu0 0.0
    %1634 = vmatpush1.msra.mxu0 %v1319
    %1635 = vmatprep.subr.mxu0 0.0
    %1636 = vmatpush1.msra.mxu0 %v1320
    %1637 = vmatprep.subr.mxu0 0.0
    %1638 = vmatpush1.msra.mxu0 %v1321
    %1639 = vmatprep.subr.mxu0 0.0
    %1640 = vmatpush1.msra.mxu0 %v1322
    %1641 = vmatprep.subr.mxu0 0.0
    %1642 = vmatpush1.msra.mxu0 %v1323
    %1643 = vmatprep.subr.mxu0 0.0
    %1644 = vmatpush1.msra.mxu0 %v1324
    %1645 = vmatprep.subr.mxu0 0.0
    %1646 = vmatpush1.msra.mxu0 %v1325
    %1647 = vmatprep.subr.mxu0 0.0
    %1648 = vmatpush1.msra.mxu0 %v1326
    %1649 = vmatprep.subr.mxu0 0.0
    %1650 = vmatpush1.msra.mxu0 %v1327
    %1651 = vmatprep.mubr.f32.mxu0 %v1165
    %1652 = vmatmul.mubr.f32.gmra.mrb[0].mxu0 %v1164
    %v1653 = vpop.f32.mrb[0].mxu0
    %v1654 = vadd.f32 %v1544, %v1653
    %v1655 = vpop.f32.mrb[0].mxu0
    %1656 = vmatprep.mubr.f32.mxu0 %v1173
    %1657 = vmatmul.mubr.f32.gmra.mrb[0].mxu0 %v1172
    %v1658 = vpop.f32.mrb[0].mxu0
    %v1659 = vadd.f32 %v1549, %v1658
    %v1660 = vpop.f32.mrb[0].mxu0
    %1661 = vmatprep.mubr.f32.mxu0 %v1181
    %1662 = vmatmul.mubr.f32.gmra.mrb[0].mxu0 %v1180
    %v1663 = vpop.f32.mrb[0].mxu0
    %v1664 = vadd.f32 %v1554, %v1663
    %v1665 = vpop.f32.mrb[0].mxu0
    %1666 = vmatprep.mubr.f32.mxu0 %v1189
    %1667 = vmatmul.mubr.f32.gmra.mrb[0].mxu0 %v1188
    %v1668 = vpop.f32.mrb[0].mxu0
    %v1669 = vadd.f32 %v1559, %v1668
    %v1670 = vpop.f32.mrb[0].mxu0
    %1671 = vmatprep.mubr.f32.mxu0 %v1197
    %1672 = vmatmul.mubr.f32.gmra.mrb[0].mxu0 %v1196
    %v1673 = vpop.f32.mrb[0].mxu0
    %v1674 = vadd.f32 %v1564, %v1673
    %v1675 = vpop.f32.mrb[0].mxu0
    %1676 = vmatprep.mubr.f32.mxu0 %v1205
    %1677 = vmatmul.mubr.f32.gmra.mrb[0].mxu0 %v1204
    %v1678 = vpop.f32.mrb[0].mxu0
    %v1679 = vadd.f32 %v1569, %v1678
    %v1680 = vpop.f32.mrb[0].mxu0
    %1681 = vmatprep.mubr.f32.mxu0 %v1213
    %1682 = vmatmul.mubr.f32.gmra.mrb[0].mxu0 %v1212
    %v1683 = vpop.f32.mrb[0].mxu0
    %v1684 = vadd.f32 %v1574, %v1683
    %v1685 = vpop.f32.mrb[0].mxu0
    %1686 = vmatprep.mubr.f32.mxu0 %v1221
    %1687 = vmatmul.mubr.f32.gmra.mrb[0].mxu0 %v1220
    %v1688 = vpop.f32.mrb[0].mxu0
    %v1689 = vadd.f32 %v1579, %v1688
    %v1690 = vpop.f32.mrb[0].mxu0
    %1691 = vmatprep.mubr.f32.mxu0 %v1229
    %1692 = vmatmul.mubr.f32.gmra.mrb[0].mxu0 %v1228
    %v1693 = vpop.f32.mrb[0].mxu0
    %v1694 = vadd.f32 %v1584, %v1693
    %v1695 = vpop.f32.mrb[0].mxu0
    %1696 = vdwg.mxu0
    %1697 = vmatprep.subr.mxu0 0.0
    %1698 = vmatpush1.msra.mxu0 %v1328
    %1699 = vmatprep.subr.mxu0 0.0
    %1700 = vmatpush1.msra.mxu0 %v1329
    %1701 = vmatprep.subr.mxu0 0.0
    %1702 = vmatpush1.msra.mxu0 %v1330
    %1703 = vmatprep.subr.mxu0 0.0
    %1704 = vmatpush1.msra.mxu0 %v1331
    %1705 = vmatprep.subr.mxu0 0.0
    %1706 = vmatpush1.msra.mxu0 %v1332
    %1707 = vmatprep.subr.mxu0 0.0
    %1708 = vmatpush1.msra.mxu0 %v1333
    %1709 = vmatprep.subr.mxu0 0.0
    %1710 = vmatpush1.msra.mxu0 %v1334
    %1711 = vmatprep.subr.mxu0 0.0
    %1712 = vmatpush1.msra.mxu0 %v1335
    %1713 = vmatprep.subr.mxu0 0.0
    %1714 = vmatpush1.msra.mxu0 %v1336
    %1715 = vmatprep.subr.mxu0 0.0
    %1716 = vmatpush1.msra.mxu0 %v1337
    %1717 = vmatprep.subr.mxu0 0.0
    %1718 = vmatpush1.msra.mxu0 %v1338
    %1719 = vmatprep.subr.mxu0 0.0
    %1720 = vmatpush1.msra.mxu0 %v1339
    %1721 = vmatprep.subr.mxu0 0.0
    %1722 = vmatpush1.msra.mxu0 %v1340
    %1723 = vmatprep.subr.mxu0 0.0
    %1724 = vmatpush1.msra.mxu0 %v1341
    %1725 = vmatprep.subr.mxu0 0.0
    %1726 = vmatpush1.msra.mxu0 %v1342
    %1727 = vmatprep.subr.mxu0 0.0
    %1728 = vmatpush1.msra.mxu0 %v1343
    %1729 = vmatprep.subr.mxu0 0.0
    %1730 = vmatpush1.msra.mxu0 %v1344
    %1731 = vmatprep.subr.mxu0 0.0
    %1732 = vmatpush1.msra.mxu0 %v1345
    %1733 = vmatprep.subr.mxu0 0.0
    %1734 = vmatpush1.msra.mxu0 %v1346
    %1735 = vmatprep.subr.mxu0 0.0
    %1736 = vmatpush1.msra.mxu0 %v1347
    %1737 = vmatprep.subr.mxu0 0.0
    %1738 = vmatpush1.msra.mxu0 %v1348
    %1739 = vmatprep.subr.mxu0 0.0
    %1740 = vmatpush1.msra.mxu0 %v1349
    %1741 = vmatprep.subr.mxu0 0.0
    %1742 = vmatpush1.msra.mxu0 %v1350
    %1743 = vmatprep.subr.mxu0 0.0
    %1744 = vmatpush1.msra.mxu0 %v1351
    %1745 = vmatprep.subr.mxu0 0.0
    %1746 = vmatpush1.msra.mxu0 %v1352
    %1747 = vmatprep.subr.mxu0 0.0
    %1748 = vmatpush1.msra.mxu0 %v1353
    %1749 = vmatprep.subr.mxu0 0.0
    %1750 = vmatpush1.msra.mxu0 %v1354
    %1751 = vmatprep.subr.mxu0 0.0
    %1752 = vmatpush1.msra.mxu0 %v1355
    %1753 = vmatprep.subr.mxu0 0.0
    %1754 = vmatpush1.msra.mxu0 %v1356
    %1755 = vmatprep.subr.mxu0 0.0
    %1756 = vmatpush1.msra.mxu0 %v1357
    %1757 = vmatprep.subr.mxu0 0.0
    %1758 = vmatpush1.msra.mxu0 %v1358
    %1759 = vmatprep.subr.mxu0 0.0
    %1760 = vmatpush1.msra.mxu0 %v1359
    %1761 = vmatprep.mubr.f32.mxu0 %v1167
    %1762 = vmatmul.mubr.f32.gmra.mrb[0].mxu0 %v1166
    %v1763 = vpop.f32.mrb[0].mxu0
    %v1764 = vadd.f32 %v1654, %v1763
    %v1765 = vpop.f32.mrb[0].mxu0
    %1766 = vmatprep.mubr.f32.mxu0 %v1175
    %1767 = vmatmul.mubr.f32.gmra.mrb[0].mxu0 %v1174
    %v1768 = vpop.f32.mrb[0].mxu0
    %v1769 = vadd.f32 %v1659, %v1768
    %v1770 = vpop.f32.mrb[0].mxu0
    %1771 = vmatprep.mubr.f32.mxu0 %v1183
    %1772 = vmatmul.mubr.f32.gmra.mrb[0].mxu0 %v1182
    %v1773 = vpop.f32.mrb[0].mxu0
    %v1774 = vadd.f32 %v1664, %v1773
    %v1775 = vpop.f32.mrb[0].mxu0
    %1776 = vmatprep.mubr.f32.mxu0 %v1191
    %1777 = vmatmul.mubr.f32.gmra.mrb[0].mxu0 %v1190
    %v1778 = vpop.f32.mrb[0].mxu0
    %v1779 = vadd.f32 %v1669, %v1778
    %v1780 = vpop.f32.mrb[0].mxu0
    %1781 = vmatprep.mubr.f32.mxu0 %v1199
    %1782 = vmatmul.mubr.f32.gmra.mrb[0].mxu0 %v1198
    %v1783 = vpop.f32.mrb[0].mxu0
    %v1784 = vadd.f32 %v1674, %v1783
    %v1785 = vpop.f32.mrb[0].mxu0
    %1786 = vmatprep.mubr.f32.mxu0 %v1207
    %1787 = vmatmul.mubr.f32.gmra.mrb[0].mxu0 %v1206
    %v1788 = vpop.f32.mrb[0].mxu0
    %v1789 = vadd.f32 %v1679, %v1788
    %v1790 = vpop.f32.mrb[0].mxu0
    %1791 = vmatprep.mubr.f32.mxu0 %v1215
    %1792 = vmatmul.mubr.f32.gmra.mrb[0].mxu0 %v1214
    %v1793 = vpop.f32.mrb[0].mxu0
    %v1794 = vadd.f32 %v1684, %v1793
    %v1795 = vpop.f32.mrb[0].mxu0
    %1796 = vmatprep.mubr.f32.mxu0 %v1223
    %1797 = vmatmul.mubr.f32.gmra.mrb[0].mxu0 %v1222
    %v1798 = vpop.f32.mrb[0].mxu0
    %v1799 = vadd.f32 %v1689, %v1798
    %v1800 = vpop.f32.mrb[0].mxu0
    %1801 = vmatprep.mubr.f32.mxu0 %v1231
    %1802 = vmatmul.mubr.f32.gmra.mrb[0].mxu0 %v1230
    %v1803 = vpop.f32.mrb[0].mxu0
    %v1804 = vadd.f32 %v1694, %v1803
    %v1805 = vpop.f32.mrb[0].mxu0
    %1806 = vdwg.mxu0
    %v1807 = vmax.f32 %v1764, 0.0
    %v1808 = vmax.f32 %v1769, 0.0
    %v1809 = vmax.f32 %v1774, 0.0
    %v1810 = vmax.f32 %v1779, 0.0
    %v1811 = vmax.f32 %v1784, 0.0
    %v1812 = vmax.f32 %v1789, 0.0
    %v1813 = vmax.f32 %v1794, 0.0
    %v1814 = vmax.f32 %v1799, 0.0
    %v1815 = vmax.f32 %v1804, 0.0
    %v1816 = vld [vmem:[#allocation12] sm:$0xff]
    %v1817 = vld [vmem:[#allocation12 + $0x8] sm:$0xff]
    %v1818 = vld [vmem:[#allocation12 + $0x10] sm:$0xff]
    %v1819 = vld [vmem:[#allocation12 + $0x18] sm:$0xff]
    %v1820 = vld [vmem:[#allocation10] sm:$0xff]
    %v1821 = vld [vmem:[#allocation10 + $0x8] sm:$0xff]
    %v1822 = vld [vmem:[#allocation10 + $0x10] sm:$0xff]
    %v1823 = vld [vmem:[#allocation10 + $0x18] sm:$0xff]
    %v1824 = vld [vmem:[#allocation10 + $0x20] sm:$0xff]
    %v1825 = vld [vmem:[#allocation10 + $0x28] sm:$0xff]
    %v1826 = vld [vmem:[#allocation10 + $0x30] sm:$0xff]
    %v1827 = vld [vmem:[#allocation10 + $0x38] sm:$0xff]
    %v1828 = vld [vmem:[#allocation10 + $0x40] sm:$0xff]
    %v1829 = vld [vmem:[#allocation13] sm:$0x1]
    %v1831 = vlaneseq
    %v1832 = vshrl.u32 %v1831, 7
    %v1833 = vsub.s32 0, %v1832
    %v1834 = vrot.slane %v1829, %v1833
    %1837 = vrot.lane.b32.xlu0 %v1158, 64
    %v1838 = vpop.permute.xlu0 %1837
    %v1839 = vsel %vm164, %v1838, 0
    %1841 = vmatprep.subr.mxu0 0.0
    %1842 = vmatpush1.msra.mxu0 %v1816
    %1843 = vmatprep.subr.mxu0 0.0
    %1844 = vmatpush1.msra.mxu0 %v1817
    %1845 = vmatprep.subr.mxu0 0.0
    %1846 = vmatpush1.msra.mxu0 %v1818
    %1847 = vmatprep.subr.mxu0 0.0
    %1848 = vmatpush1.msra.mxu0 %v1819
    %1849 = vmatprep.subr.mxu0 0.0
    %1850 = vmatpush1.msra.mxu0 0.0
    %1851 = vmatprep.subr.mxu0 0.0
    %1852 = vmatpush1.msra.mxu0 0.0
    %1853 = vmatprep.subr.mxu0 0.0
    %1854 = vmatpush1.msra.mxu0 0.0
    %1855 = vmatprep.subr.mxu0 0.0
    %1856 = vmatpush1.msra.mxu0 0.0
    %1857 = vmatprep.subr.mxu0 0.0
    %1858 = vmatpush1.msra.mxu0 0.0
    %1859 = vmatprep.subr.mxu0 0.0
    %1860 = vmatpush1.msra.mxu0 0.0
    %1861 = vmatprep.subr.mxu0 0.0
    %1862 = vmatpush1.msra.mxu0 0.0
    %1863 = vmatprep.subr.mxu0 0.0
    %1864 = vmatpush1.msra.mxu0 0.0
    %1865 = vmatprep.subr.mxu0 0.0
    %1866 = vmatpush1.msra.mxu0 0.0
    %1867 = vmatprep.subr.mxu0 0.0
    %1868 = vmatpush1.msra.mxu0 0.0
    %1869 = vmatprep.subr.mxu0 0.0
    %1870 = vmatpush1.msra.mxu0 0.0
    %1871 = vmatprep.subr.mxu0 0.0
    %1872 = vmatpush1.msra.mxu0 0.0
    %1873 = vmatprep.subr.mxu0 0.0
    %1874 = vmatpush1.msra.mxu0 0.0
    %1875 = vmatprep.subr.mxu0 0.0
    %1876 = vmatpush1.msra.mxu0 0.0
    %1877 = vmatprep.subr.mxu0 0.0
    %1878 = vmatpush1.msra.mxu0 0.0
    %1879 = vmatprep.subr.mxu0 0.0
    %1880 = vmatpush1.msra.mxu0 0.0
    %1881 = vmatprep.subr.mxu0 0.0
    %1882 = vmatpush1.msra.mxu0 0.0
    %1883 = vmatprep.subr.mxu0 0.0
    %1884 = vmatpush1.msra.mxu0 0.0
    %1885 = vmatprep.subr.mxu0 0.0
    %1886 = vmatpush1.msra.mxu0 0.0
    %1887 = vmatprep.subr.mxu0 0.0
    %1888 = vmatpush1.msra.mxu0 0.0
    %1889 = vmatprep.subr.mxu0 0.0
    %1890 = vmatpush1.msra.mxu0 0.0
    %1891 = vmatprep.subr.mxu0 0.0
    %1892 = vmatpush1.msra.mxu0 0.0
    %1893 = vmatprep.subr.mxu0 0.0
    %1894 = vmatpush1.msra.mxu0 0.0
    %1895 = vmatprep.subr.mxu0 0.0
    %1896 = vmatpush1.msra.mxu0 0.0
    %1897 = vmatprep.subr.mxu0 0.0
    %1898 = vmatpush1.msra.mxu0 0.0
    %1899 = vmatprep.subr.mxu0 0.0
    %1900 = vmatpush1.msra.mxu0 0.0
    %1901 = vmatprep.subr.mxu0 0.0
    %1902 = vmatpush1.msra.mxu0 0.0
    %1903 = vmatprep.subr.mxu0 0.0
    %1904 = vmatpush1.msra.mxu0 0.0
    %1905 = vmatprep.mubr.f32.mxu0 0.0
    %1906 = vmatmul.mubr.f32.gmra.mrb[0].mxu0 %v1839
    %v1907 = vpop.f32.mrb[0].mxu0
    %v1908 = vadd.f32 %v1834, %v1907
    %v1909 = vpop.f32.mrb[0].mxu0
    %1910 = vdwg.mxu0
    %vm1911 = vcmask 64512
    %v1913 = vsel %vm1911, %v1807, 0
    %1915 = vmatprep.subr.mxu0 0.0
    %1916 = vmatpush1.msra.mxu0 %v1820
    %1917 = vmatprep.subr.mxu0 0.0
    %1918 = vmatpush1.msra.mxu0 0.0
    %1919 = vmatprep.subr.mxu0 0.0
    %1920 = vmatpush1.msra.mxu0 0.0
    %1921 = vmatprep.subr.mxu0 0.0
    %1922 = vmatpush1.msra.mxu0 0.0
    %1923 = vmatprep.subr.mxu0 0.0
    %1924 = vmatpush1.msra.mxu0 0.0
    %1925 = vmatprep.subr.mxu0 0.0
    %1926 = vmatpush1.msra.mxu0 0.0
    %1927 = vmatprep.subr.mxu0 0.0
    %1928 = vmatpush1.msra.mxu0 0.0
    %1929 = vmatprep.subr.mxu0 0.0
    %1930 = vmatpush1.msra.mxu0 0.0
    %1931 = vmatprep.subr.mxu0 0.0
    %1932 = vmatpush1.msra.mxu0 0.0
    %1933 = vmatprep.subr.mxu0 0.0
    %1934 = vmatpush1.msra.mxu0 0.0
    %1935 = vmatprep.subr.mxu0 0.0
    %1936 = vmatpush1.msra.mxu0 0.0
    %1937 = vmatprep.subr.mxu0 0.0
    %1938 = vmatpush1.msra.mxu0 0.0
    %1939 = vmatprep.subr.mxu0 0.0
    %1940 = vmatpush1.msra.mxu0 0.0
    %1941 = vmatprep.subr.mxu0 0.0
    %1942 = vmatpush1.msra.mxu0 0.0
    %1943 = vmatprep.subr.mxu0 0.0
    %1944 = vmatpush1.msra.mxu0 0.0
    %1945 = vmatprep.subr.mxu0 0.0
    %1946 = vmatpush1.msra.mxu0 0.0
    %1947 = vmatprep.subr.mxu0 0.0
    %1948 = vmatpush1.msra.mxu0 0.0
    %1949 = vmatprep.subr.mxu0 0.0
    %1950 = vmatpush1.msra.mxu0 0.0
    %1951 = vmatprep.subr.mxu0 0.0
    %1952 = vmatpush1.msra.mxu0 0.0
    %1953 = vmatprep.subr.mxu0 0.0
    %1954 = vmatpush1.msra.mxu0 0.0
    %1955 = vmatprep.subr.mxu0 0.0
    %1956 = vmatpush1.msra.mxu0 0.0
    %1957 = vmatprep.subr.mxu0 0.0
    %1958 = vmatpush1.msra.mxu0 0.0
    %1959 = vmatprep.subr.mxu0 0.0
    %1960 = vmatpush1.msra.mxu0 0.0
    %1961 = vmatprep.subr.mxu0 0.0
    %1962 = vmatpush1.msra.mxu0 0.0
    %1963 = vmatprep.subr.mxu0 0.0
    %1964 = vmatpush1.msra.mxu0 0.0
    %1965 = vmatprep.subr.mxu0 0.0
    %1966 = vmatpush1.msra.mxu0 0.0
    %1967 = vmatprep.subr.mxu0 0.0
    %1968 = vmatpush1.msra.mxu0 0.0
    %1969 = vmatprep.subr.mxu0 0.0
    %1970 = vmatpush1.msra.mxu0 0.0
    %1971 = vmatprep.subr.mxu0 0.0
    %1972 = vmatpush1.msra.mxu0 0.0
    %1973 = vmatprep.subr.mxu0 0.0
    %1974 = vmatpush1.msra.mxu0 0.0
    %1975 = vmatprep.subr.mxu0 0.0
    %1976 = vmatpush1.msra.mxu0 0.0
    %1977 = vmatprep.subr.mxu0 0.0
    %1978 = vmatpush1.msra.mxu0 0.0
    %1979 = vmatprep.mubr.f32.mxu0 0.0
    %1980 = vmatmul.mubr.f32.gmra.mrb[0].mxu0 %v1913
    %v1981 = vpop.f32.mrb[0].mxu0
    %v1982 = vadd.f32 0.0, %v1981
    %v1983 = vpop.f32.mrb[0].mxu0
    %1984 = vdwg.mxu0
    %v1985 = vadd.f32 %v1908, %v1982
    %v1987 = vsel %vm1911, %v1808, 0
    %1989 = vmatprep.subr.mxu0 0.0
    %1990 = vmatpush1.msra.mxu0 %v1821
    %1991 = vmatprep.subr.mxu0 0.0
    %1992 = vmatpush1.msra.mxu0 0.0
    %1993 = vmatprep.subr.mxu0 0.0
    %1994 = vmatpush1.msra.mxu0 0.0
    %1995 = vmatprep.subr.mxu0 0.0
    %1996 = vmatpush1.msra.mxu0 0.0
    %1997 = vmatprep.subr.mxu0 0.0
    %1998 = vmatpush1.msra.mxu0 0.0
    %1999 = vmatprep.subr.mxu0 0.0
    %2000 = vmatpush1.msra.mxu0 0.0
    %2001 = vmatprep.subr.mxu0 0.0
    %2002 = vmatpush1.msra.mxu0 0.0
    %2003 = vmatprep.subr.mxu0 0.0
    %2004 = vmatpush1.msra.mxu0 0.0
    %2005 = vmatprep.subr.mxu0 0.0
    %2006 = vmatpush1.msra.mxu0 0.0
    %2007 = vmatprep.subr.mxu0 0.0
    %2008 = vmatpush1.msra.mxu0 0.0
    %2009 = vmatprep.subr.mxu0 0.0
    %2010 = vmatpush1.msra.mxu0 0.0
    %2011 = vmatprep.subr.mxu0 0.0
    %2012 = vmatpush1.msra.mxu0 0.0
    %2013 = vmatprep.subr.mxu0 0.0
    %2014 = vmatpush1.msra.mxu0 0.0
    %2015 = vmatprep.subr.mxu0 0.0
    %2016 = vmatpush1.msra.mxu0 0.0
    %2017 = vmatprep.subr.mxu0 0.0
    %2018 = vmatpush1.msra.mxu0 0.0
    %2019 = vmatprep.subr.mxu0 0.0
    %2020 = vmatpush1.msra.mxu0 0.0
    %2021 = vmatprep.subr.mxu0 0.0
    %2022 = vmatpush1.msra.mxu0 0.0
    %2023 = vmatprep.subr.mxu0 0.0
    %2024 = vmatpush1.msra.mxu0 0.0
    %2025 = vmatprep.subr.mxu0 0.0
    %2026 = vmatpush1.msra.mxu0 0.0
    %2027 = vmatprep.subr.mxu0 0.0
    %2028 = vmatpush1.msra.mxu0 0.0
    %2029 = vmatprep.subr.mxu0 0.0
    %2030 = vmatpush1.msra.mxu0 0.0
    %2031 = vmatprep.subr.mxu0 0.0
    %2032 = vmatpush1.msra.mxu0 0.0
    %2033 = vmatprep.subr.mxu0 0.0
    %2034 = vmatpush1.msra.mxu0 0.0
    %2035 = vmatprep.subr.mxu0 0.0
    %2036 = vmatpush1.msra.mxu0 0.0
    %2037 = vmatprep.subr.mxu0 0.0
    %2038 = vmatpush1.msra.mxu0 0.0
    %2039 = vmatprep.subr.mxu0 0.0
    %2040 = vmatpush1.msra.mxu0 0.0
    %2041 = vmatprep.subr.mxu0 0.0
    %2042 = vmatpush1.msra.mxu0 0.0
    %2043 = vmatprep.subr.mxu0 0.0
    %2044 = vmatpush1.msra.mxu0 0.0
    %2045 = vmatprep.subr.mxu0 0.0
    %2046 = vmatpush1.msra.mxu0 0.0
    %2047 = vmatprep.subr.mxu0 0.0
    %2048 = vmatpush1.msra.mxu0 0.0
    %2049 = vmatprep.subr.mxu0 0.0
    %2050 = vmatpush1.msra.mxu0 0.0
    %2051 = vmatprep.subr.mxu0 0.0
    %2052 = vmatpush1.msra.mxu0 0.0
    %2053 = vmatprep.mubr.f32.mxu0 0.0
    %2054 = vmatmul.mubr.f32.gmra.mrb[0].mxu0 %v1987
    %v2055 = vpop.f32.mrb[0].mxu0
    %v2056 = vadd.f32 0.0, %v2055
    %v2057 = vpop.f32.mrb[0].mxu0
    %2058 = vdwg.mxu0
    %v2059 = vadd.f32 %v1985, %v2056
    %v2061 = vsel %vm1911, %v1809, 0
    %2063 = vmatprep.subr.mxu0 0.0
    %2064 = vmatpush1.msra.mxu0 %v1822
    %2065 = vmatprep.subr.mxu0 0.0
    %2066 = vmatpush1.msra.mxu0 0.0
    %2067 = vmatprep.subr.mxu0 0.0
    %2068 = vmatpush1.msra.mxu0 0.0
    %2069 = vmatprep.subr.mxu0 0.0
    %2070 = vmatpush1.msra.mxu0 0.0
    %2071 = vmatprep.subr.mxu0 0.0
    %2072 = vmatpush1.msra.mxu0 0.0
    %2073 = vmatprep.subr.mxu0 0.0
    %2074 = vmatpush1.msra.mxu0 0.0
    %2075 = vmatprep.subr.mxu0 0.0
    %2076 = vmatpush1.msra.mxu0 0.0
    %2077 = vmatprep.subr.mxu0 0.0
    %2078 = vmatpush1.msra.mxu0 0.0
    %2079 = vmatprep.subr.mxu0 0.0
    %2080 = vmatpush1.msra.mxu0 0.0
    %2081 = vmatprep.subr.mxu0 0.0
    %2082 = vmatpush1.msra.mxu0 0.0
    %2083 = vmatprep.subr.mxu0 0.0
    %2084 = vmatpush1.msra.mxu0 0.0
    %2085 = vmatprep.subr.mxu0 0.0
    %2086 = vmatpush1.msra.mxu0 0.0
    %2087 = vmatprep.subr.mxu0 0.0
    %2088 = vmatpush1.msra.mxu0 0.0
    %2089 = vmatprep.subr.mxu0 0.0
    %2090 = vmatpush1.msra.mxu0 0.0
    %2091 = vmatprep.subr.mxu0 0.0
    %2092 = vmatpush1.msra.mxu0 0.0
    %2093 = vmatprep.subr.mxu0 0.0
    %2094 = vmatpush1.msra.mxu0 0.0
    %2095 = vmatprep.subr.mxu0 0.0
    %2096 = vmatpush1.msra.mxu0 0.0
    %2097 = vmatprep.subr.mxu0 0.0
    %2098 = vmatpush1.msra.mxu0 0.0
    %2099 = vmatprep.subr.mxu0 0.0
    %2100 = vmatpush1.msra.mxu0 0.0
    %2101 = vmatprep.subr.mxu0 0.0
    %2102 = vmatpush1.msra.mxu0 0.0
    %2103 = vmatprep.subr.mxu0 0.0
    %2104 = vmatpush1.msra.mxu0 0.0
    %2105 = vmatprep.subr.mxu0 0.0
    %2106 = vmatpush1.msra.mxu0 0.0
    %2107 = vmatprep.subr.mxu0 0.0
    %2108 = vmatpush1.msra.mxu0 0.0
    %2109 = vmatprep.subr.mxu0 0.0
    %2110 = vmatpush1.msra.mxu0 0.0
    %2111 = vmatprep.subr.mxu0 0.0
    %2112 = vmatpush1.msra.mxu0 0.0
    %2113 = vmatprep.subr.mxu0 0.0
    %2114 = vmatpush1.msra.mxu0 0.0
    %2115 = vmatprep.subr.mxu0 0.0
    %2116 = vmatpush1.msra.mxu0 0.0
    %2117 = vmatprep.subr.mxu0 0.0
    %2118 = vmatpush1.msra.mxu0 0.0
    %2119 = vmatprep.subr.mxu0 0.0
    %2120 = vmatpush1.msra.mxu0 0.0
    %2121 = vmatprep.subr.mxu0 0.0
    %2122 = vmatpush1.msra.mxu0 0.0
    %2123 = vmatprep.subr.mxu0 0.0
    %2124 = vmatpush1.msra.mxu0 0.0
    %2125 = vmatprep.subr.mxu0 0.0
    %2126 = vmatpush1.msra.mxu0 0.0
    %2127 = vmatprep.mubr.f32.mxu0 0.0
    %2128 = vmatmul.mubr.f32.gmra.mrb[0].mxu0 %v2061
    %v2129 = vpop.f32.mrb[0].mxu0
    %v2130 = vadd.f32 0.0, %v2129
    %v2131 = vpop.f32.mrb[0].mxu0
    %2132 = vdwg.mxu0
    %v2133 = vadd.f32 %v2059, %v2130
    %v2135 = vsel %vm1911, %v1810, 0
    %2137 = vmatprep.subr.mxu0 0.0
    %2138 = vmatpush1.msra.mxu0 %v1823
    %2139 = vmatprep.subr.mxu0 0.0
    %2140 = vmatpush1.msra.mxu0 0.0
    %2141 = vmatprep.subr.mxu0 0.0
    %2142 = vmatpush1.msra.mxu0 0.0
    %2143 = vmatprep.subr.mxu0 0.0
    %2144 = vmatpush1.msra.mxu0 0.0
    %2145 = vmatprep.subr.mxu0 0.0
    %2146 = vmatpush1.msra.mxu0 0.0
    %2147 = vmatprep.subr.mxu0 0.0
    %2148 = vmatpush1.msra.mxu0 0.0
    %2149 = vmatprep.subr.mxu0 0.0
    %2150 = vmatpush1.msra.mxu0 0.0
    %2151 = vmatprep.subr.mxu0 0.0
    %2152 = vmatpush1.msra.mxu0 0.0
    %2153 = vmatprep.subr.mxu0 0.0
    %2154 = vmatpush1.msra.mxu0 0.0
    %2155 = vmatprep.subr.mxu0 0.0
    %2156 = vmatpush1.msra.mxu0 0.0
    %2157 = vmatprep.subr.mxu0 0.0
    %2158 = vmatpush1.msra.mxu0 0.0
    %2159 = vmatprep.subr.mxu0 0.0
    %2160 = vmatpush1.msra.mxu0 0.0
    %2161 = vmatprep.subr.mxu0 0.0
    %2162 = vmatpush1.msra.mxu0 0.0
    %2163 = vmatprep.subr.mxu0 0.0
    %2164 = vmatpush1.msra.mxu0 0.0
    %2165 = vmatprep.subr.mxu0 0.0
    %2166 = vmatpush1.msra.mxu0 0.0
    %2167 = vmatprep.subr.mxu0 0.0
    %2168 = vmatpush1.msra.mxu0 0.0
    %2169 = vmatprep.subr.mxu0 0.0
    %2170 = vmatpush1.msra.mxu0 0.0
    %2171 = vmatprep.subr.mxu0 0.0
    %2172 = vmatpush1.msra.mxu0 0.0
    %2173 = vmatprep.subr.mxu0 0.0
    %2174 = vmatpush1.msra.mxu0 0.0
    %2175 = vmatprep.subr.mxu0 0.0
    %2176 = vmatpush1.msra.mxu0 0.0
    %2177 = vmatprep.subr.mxu0 0.0
    %2178 = vmatpush1.msra.mxu0 0.0
    %2179 = vmatprep.subr.mxu0 0.0
    %2180 = vmatpush1.msra.mxu0 0.0
    %2181 = vmatprep.subr.mxu0 0.0
    %2182 = vmatpush1.msra.mxu0 0.0
    %2183 = vmatprep.subr.mxu0 0.0
    %2184 = vmatpush1.msra.mxu0 0.0
    %2185 = vmatprep.subr.mxu0 0.0
    %2186 = vmatpush1.msra.mxu0 0.0
    %2187 = vmatprep.subr.mxu0 0.0
    %2188 = vmatpush1.msra.mxu0 0.0
    %2189 = vmatprep.subr.mxu0 0.0
    %2190 = vmatpush1.msra.mxu0 0.0
    %2191 = vmatprep.subr.mxu0 0.0
    %2192 = vmatpush1.msra.mxu0 0.0
    %2193 = vmatprep.subr.mxu0 0.0
    %2194 = vmatpush1.msra.mxu0 0.0
    %2195 = vmatprep.subr.mxu0 0.0
    %2196 = vmatpush1.msra.mxu0 0.0
    %2197 = vmatprep.subr.mxu0 0.0
    %2198 = vmatpush1.msra.mxu0 0.0
    %2199 = vmatprep.subr.mxu0 0.0
    %2200 = vmatpush1.msra.mxu0 0.0
    %2201 = vmatprep.mubr.f32.mxu0 0.0
    %2202 = vmatmul.mubr.f32.gmra.mrb[0].mxu0 %v2135
    %v2203 = vpop.f32.mrb[0].mxu0
    %v2204 = vadd.f32 0.0, %v2203
    %v2205 = vpop.f32.mrb[0].mxu0
    %2206 = vdwg.mxu0
    %v2207 = vadd.f32 %v2133, %v2204
    %v2209 = vsel %vm1911, %v1811, 0
    %2211 = vmatprep.subr.mxu0 0.0
    %2212 = vmatpush1.msra.mxu0 %v1824
    %2213 = vmatprep.subr.mxu0 0.0
    %2214 = vmatpush1.msra.mxu0 0.0
    %2215 = vmatprep.subr.mxu0 0.0
    %2216 = vmatpush1.msra.mxu0 0.0
    %2217 = vmatprep.subr.mxu0 0.0
    %2218 = vmatpush1.msra.mxu0 0.0
    %2219 = vmatprep.subr.mxu0 0.0
    %2220 = vmatpush1.msra.mxu0 0.0
    %2221 = vmatprep.subr.mxu0 0.0
    %2222 = vmatpush1.msra.mxu0 0.0
    %2223 = vmatprep.subr.mxu0 0.0
    %2224 = vmatpush1.msra.mxu0 0.0
    %2225 = vmatprep.subr.mxu0 0.0
    %2226 = vmatpush1.msra.mxu0 0.0
    %2227 = vmatprep.subr.mxu0 0.0
    %2228 = vmatpush1.msra.mxu0 0.0
    %2229 = vmatprep.subr.mxu0 0.0
    %2230 = vmatpush1.msra.mxu0 0.0
    %2231 = vmatprep.subr.mxu0 0.0
    %2232 = vmatpush1.msra.mxu0 0.0
    %2233 = vmatprep.subr.mxu0 0.0
    %2234 = vmatpush1.msra.mxu0 0.0
    %2235 = vmatprep.subr.mxu0 0.0
    %2236 = vmatpush1.msra.mxu0 0.0
    %2237 = vmatprep.subr.mxu0 0.0
    %2238 = vmatpush1.msra.mxu0 0.0
    %2239 = vmatprep.subr.mxu0 0.0
    %2240 = vmatpush1.msra.mxu0 0.0
    %2241 = vmatprep.subr.mxu0 0.0
    %2242 = vmatpush1.msra.mxu0 0.0
    %2243 = vmatprep.subr.mxu0 0.0
    %2244 = vmatpush1.msra.mxu0 0.0
    %2245 = vmatprep.subr.mxu0 0.0
    %2246 = vmatpush1.msra.mxu0 0.0
    %2247 = vmatprep.subr.mxu0 0.0
    %2248 = vmatpush1.msra.mxu0 0.0
    %2249 = vmatprep.subr.mxu0 0.0
    %2250 = vmatpush1.msra.mxu0 0.0
    %2251 = vmatprep.subr.mxu0 0.0
    %2252 = vmatpush1.msra.mxu0 0.0
    %2253 = vmatprep.subr.mxu0 0.0
    %2254 = vmatpush1.msra.mxu0 0.0
    %2255 = vmatprep.subr.mxu0 0.0
    %2256 = vmatpush1.msra.mxu0 0.0
    %2257 = vmatprep.subr.mxu0 0.0
    %2258 = vmatpush1.msra.mxu0 0.0
    %2259 = vmatprep.subr.mxu0 0.0
    %2260 = vmatpush1.msra.mxu0 0.0
    %2261 = vmatprep.subr.mxu0 0.0
    %2262 = vmatpush1.msra.mxu0 0.0
    %2263 = vmatprep.subr.mxu0 0.0
    %2264 = vmatpush1.msra.mxu0 0.0
    %2265 = vmatprep.subr.mxu0 0.0
    %2266 = vmatpush1.msra.mxu0 0.0
    %2267 = vmatprep.subr.mxu0 0.0
    %2268 = vmatpush1.msra.mxu0 0.0
    %2269 = vmatprep.subr.mxu0 0.0
    %2270 = vmatpush1.msra.mxu0 0.0
    %2271 = vmatprep.subr.mxu0 0.0
    %2272 = vmatpush1.msra.mxu0 0.0
    %2273 = vmatprep.subr.mxu0 0.0
    %2274 = vmatpush1.msra.mxu0 0.0
    %2275 = vmatprep.mubr.f32.mxu0 0.0
    %2276 = vmatmul.mubr.f32.gmra.mrb[0].mxu0 %v2209
    %v2277 = vpop.f32.mrb[0].mxu0
    %v2278 = vadd.f32 0.0, %v2277
    %v2279 = vpop.f32.mrb[0].mxu0
    %2280 = vdwg.mxu0
    %v2281 = vadd.f32 %v2207, %v2278
    %v2283 = vsel %vm1911, %v1812, 0
    %2285 = vmatprep.subr.mxu0 0.0
    %2286 = vmatpush1.msra.mxu0 %v1825
    %2287 = vmatprep.subr.mxu0 0.0
    %2288 = vmatpush1.msra.mxu0 0.0
    %2289 = vmatprep.subr.mxu0 0.0
    %2290 = vmatpush1.msra.mxu0 0.0
    %2291 = vmatprep.subr.mxu0 0.0
    %2292 = vmatpush1.msra.mxu0 0.0
    %2293 = vmatprep.subr.mxu0 0.0
    %2294 = vmatpush1.msra.mxu0 0.0
    %2295 = vmatprep.subr.mxu0 0.0
    %2296 = vmatpush1.msra.mxu0 0.0
    %2297 = vmatprep.subr.mxu0 0.0
    %2298 = vmatpush1.msra.mxu0 0.0
    %2299 = vmatprep.subr.mxu0 0.0
    %2300 = vmatpush1.msra.mxu0 0.0
    %2301 = vmatprep.subr.mxu0 0.0
    %2302 = vmatpush1.msra.mxu0 0.0
    %2303 = vmatprep.subr.mxu0 0.0
    %2304 = vmatpush1.msra.mxu0 0.0
    %2305 = vmatprep.subr.mxu0 0.0
    %2306 = vmatpush1.msra.mxu0 0.0
    %2307 = vmatprep.subr.mxu0 0.0
    %2308 = vmatpush1.msra.mxu0 0.0
    %2309 = vmatprep.subr.mxu0 0.0
    %2310 = vmatpush1.msra.mxu0 0.0
    %2311 = vmatprep.subr.mxu0 0.0
    %2312 = vmatpush1.msra.mxu0 0.0
    %2313 = vmatprep.subr.mxu0 0.0
    %2314 = vmatpush1.msra.mxu0 0.0
    %2315 = vmatprep.subr.mxu0 0.0
    %2316 = vmatpush1.msra.mxu0 0.0
    %2317 = vmatprep.subr.mxu0 0.0
    %2318 = vmatpush1.msra.mxu0 0.0
    %2319 = vmatprep.subr.mxu0 0.0
    %2320 = vmatpush1.msra.mxu0 0.0
    %2321 = vmatprep.subr.mxu0 0.0
    %2322 = vmatpush1.msra.mxu0 0.0
    %2323 = vmatprep.subr.mxu0 0.0
    %2324 = vmatpush1.msra.mxu0 0.0
    %2325 = vmatprep.subr.mxu0 0.0
    %2326 = vmatpush1.msra.mxu0 0.0
    %2327 = vmatprep.subr.mxu0 0.0
    %2328 = vmatpush1.msra.mxu0 0.0
    %2329 = vmatprep.subr.mxu0 0.0
    %2330 = vmatpush1.msra.mxu0 0.0
    %2331 = vmatprep.subr.mxu0 0.0
    %2332 = vmatpush1.msra.mxu0 0.0
    %2333 = vmatprep.subr.mxu0 0.0
    %2334 = vmatpush1.msra.mxu0 0.0
    %2335 = vmatprep.subr.mxu0 0.0
    %2336 = vmatpush1.msra.mxu0 0.0
    %2337 = vmatprep.subr.mxu0 0.0
    %2338 = vmatpush1.msra.mxu0 0.0
    %2339 = vmatprep.subr.mxu0 0.0
    %2340 = vmatpush1.msra.mxu0 0.0
    %2341 = vmatprep.subr.mxu0 0.0
    %2342 = vmatpush1.msra.mxu0 0.0
    %2343 = vmatprep.subr.mxu0 0.0
    %2344 = vmatpush1.msra.mxu0 0.0
    %2345 = vmatprep.subr.mxu0 0.0
    %2346 = vmatpush1.msra.mxu0 0.0
    %2347 = vmatprep.subr.mxu0 0.0
    %2348 = vmatpush1.msra.mxu0 0.0
    %2349 = vmatprep.mubr.f32.mxu0 0.0
    %2350 = vmatmul.mubr.f32.gmra.mrb[0].mxu0 %v2283
    %v2351 = vpop.f32.mrb[0].mxu0
    %v2352 = vadd.f32 0.0, %v2351
    %v2353 = vpop.f32.mrb[0].mxu0
    %2354 = vdwg.mxu0
    %v2355 = vadd.f32 %v2281, %v2352
    %v2357 = vsel %vm1911, %v1813, 0
    %2359 = vmatprep.subr.mxu0 0.0
    %2360 = vmatpush1.msra.mxu0 %v1826
    %2361 = vmatprep.subr.mxu0 0.0
    %2362 = vmatpush1.msra.mxu0 0.0
    %2363 = vmatprep.subr.mxu0 0.0
    %2364 = vmatpush1.msra.mxu0 0.0
    %2365 = vmatprep.subr.mxu0 0.0
    %2366 = vmatpush1.msra.mxu0 0.0
    %2367 = vmatprep.subr.mxu0 0.0
    %2368 = vmatpush1.msra.mxu0 0.0
    %2369 = vmatprep.subr.mxu0 0.0
    %2370 = vmatpush1.msra.mxu0 0.0
    %2371 = vmatprep.subr.mxu0 0.0
    %2372 = vmatpush1.msra.mxu0 0.0
    %2373 = vmatprep.subr.mxu0 0.0
    %2374 = vmatpush1.msra.mxu0 0.0
    %2375 = vmatprep.subr.mxu0 0.0
    %2376 = vmatpush1.msra.mxu0 0.0
    %2377 = vmatprep.subr.mxu0 0.0
    %2378 = vmatpush1.msra.mxu0 0.0
    %2379 = vmatprep.subr.mxu0 0.0
    %2380 = vmatpush1.msra.mxu0 0.0
    %2381 = vmatprep.subr.mxu0 0.0
    %2382 = vmatpush1.msra.mxu0 0.0
    %2383 = vmatprep.subr.mxu0 0.0
    %2384 = vmatpush1.msra.mxu0 0.0
    %2385 = vmatprep.subr.mxu0 0.0
    %2386 = vmatpush1.msra.mxu0 0.0
    %2387 = vmatprep.subr.mxu0 0.0
    %2388 = vmatpush1.msra.mxu0 0.0
    %2389 = vmatprep.subr.mxu0 0.0
    %2390 = vmatpush1.msra.mxu0 0.0
    %2391 = vmatprep.subr.mxu0 0.0
    %2392 = vmatpush1.msra.mxu0 0.0
    %2393 = vmatprep.subr.mxu0 0.0
    %2394 = vmatpush1.msra.mxu0 0.0
    %2395 = vmatprep.subr.mxu0 0.0
    %2396 = vmatpush1.msra.mxu0 0.0
    %2397 = vmatprep.subr.mxu0 0.0
    %2398 = vmatpush1.msra.mxu0 0.0
    %2399 = vmatprep.subr.mxu0 0.0
    %2400 = vmatpush1.msra.mxu0 0.0
    %2401 = vmatprep.subr.mxu0 0.0
    %2402 = vmatpush1.msra.mxu0 0.0
    %2403 = vmatprep.subr.mxu0 0.0
    %2404 = vmatpush1.msra.mxu0 0.0
    %2405 = vmatprep.subr.mxu0 0.0
    %2406 = vmatpush1.msra.mxu0 0.0
    %2407 = vmatprep.subr.mxu0 0.0
    %2408 = vmatpush1.msra.mxu0 0.0
    %2409 = vmatprep.subr.mxu0 0.0
    %2410 = vmatpush1.msra.mxu0 0.0
    %2411 = vmatprep.subr.mxu0 0.0
    %2412 = vmatpush1.msra.mxu0 0.0
    %2413 = vmatprep.subr.mxu0 0.0
    %2414 = vmatpush1.msra.mxu0 0.0
    %2415 = vmatprep.subr.mxu0 0.0
    %2416 = vmatpush1.msra.mxu0 0.0
    %2417 = vmatprep.subr.mxu0 0.0
    %2418 = vmatpush1.msra.mxu0 0.0
    %2419 = vmatprep.subr.mxu0 0.0
    %2420 = vmatpush1.msra.mxu0 0.0
    %2421 = vmatprep.subr.mxu0 0.0
    %2422 = vmatpush1.msra.mxu0 0.0
    %2423 = vmatprep.mubr.f32.mxu0 0.0
    %2424 = vmatmul.mubr.f32.gmra.mrb[0].mxu0 %v2357
    %v2425 = vpop.f32.mrb[0].mxu0
    %v2426 = vadd.f32 0.0, %v2425
    %v2427 = vpop.f32.mrb[0].mxu0
    %2428 = vdwg.mxu0
    %v2429 = vadd.f32 %v2355, %v2426
    %v2431 = vsel %vm1911, %v1814, 0
    %2433 = vmatprep.subr.mxu0 0.0
    %2434 = vmatpush1.msra.mxu0 %v1827
    %2435 = vmatprep.subr.mxu0 0.0
    %2436 = vmatpush1.msra.mxu0 0.0
    %2437 = vmatprep.subr.mxu0 0.0
    %2438 = vmatpush1.msra.mxu0 0.0
    %2439 = vmatprep.subr.mxu0 0.0
    %2440 = vmatpush1.msra.mxu0 0.0
    %2441 = vmatprep.subr.mxu0 0.0
    %2442 = vmatpush1.msra.mxu0 0.0
    %2443 = vmatprep.subr.mxu0 0.0
    %2444 = vmatpush1.msra.mxu0 0.0
    %2445 = vmatprep.subr.mxu0 0.0
    %2446 = vmatpush1.msra.mxu0 0.0
    %2447 = vmatprep.subr.mxu0 0.0
    %2448 = vmatpush1.msra.mxu0 0.0
    %2449 = vmatprep.subr.mxu0 0.0
    %2450 = vmatpush1.msra.mxu0 0.0
    %2451 = vmatprep.subr.mxu0 0.0
    %2452 = vmatpush1.msra.mxu0 0.0
    %2453 = vmatprep.subr.mxu0 0.0
    %2454 = vmatpush1.msra.mxu0 0.0
    %2455 = vmatprep.subr.mxu0 0.0
    %2456 = vmatpush1.msra.mxu0 0.0
    %2457 = vmatprep.subr.mxu0 0.0
    %2458 = vmatpush1.msra.mxu0 0.0
    %2459 = vmatprep.subr.mxu0 0.0
    %2460 = vmatpush1.msra.mxu0 0.0
    %2461 = vmatprep.subr.mxu0 0.0
    %2462 = vmatpush1.msra.mxu0 0.0
    %2463 = vmatprep.subr.mxu0 0.0
    %2464 = vmatpush1.msra.mxu0 0.0
    %2465 = vmatprep.subr.mxu0 0.0
    %2466 = vmatpush1.msra.mxu0 0.0
    %2467 = vmatprep.subr.mxu0 0.0
    %2468 = vmatpush1.msra.mxu0 0.0
    %2469 = vmatprep.subr.mxu0 0.0
    %2470 = vmatpush1.msra.mxu0 0.0
    %2471 = vmatprep.subr.mxu0 0.0
    %2472 = vmatpush1.msra.mxu0 0.0
    %2473 = vmatprep.subr.mxu0 0.0
    %2474 = vmatpush1.msra.mxu0 0.0
    %2475 = vmatprep.subr.mxu0 0.0
    %2476 = vmatpush1.msra.mxu0 0.0
    %2477 = vmatprep.subr.mxu0 0.0
    %2478 = vmatpush1.msra.mxu0 0.0
    %2479 = vmatprep.subr.mxu0 0.0
    %2480 = vmatpush1.msra.mxu0 0.0
    %2481 = vmatprep.subr.mxu0 0.0
    %2482 = vmatpush1.msra.mxu0 0.0
    %2483 = vmatprep.subr.mxu0 0.0
    %2484 = vmatpush1.msra.mxu0 0.0
    %2485 = vmatprep.subr.mxu0 0.0
    %2486 = vmatpush1.msra.mxu0 0.0
    %2487 = vmatprep.subr.mxu0 0.0
    %2488 = vmatpush1.msra.mxu0 0.0
    %2489 = vmatprep.subr.mxu0 0.0
    %2490 = vmatpush1.msra.mxu0 0.0
    %2491 = vmatprep.subr.mxu0 0.0
    %2492 = vmatpush1.msra.mxu0 0.0
    %2493 = vmatprep.subr.mxu0 0.0
    %2494 = vmatpush1.msra.mxu0 0.0
    %2495 = vmatprep.subr.mxu0 0.0
    %2496 = vmatpush1.msra.mxu0 0.0
    %2497 = vmatprep.mubr.f32.mxu0 0.0
    %2498 = vmatmul.mubr.f32.gmra.mrb[0].mxu0 %v2431
    %v2499 = vpop.f32.mrb[0].mxu0
    %v2500 = vadd.f32 0.0, %v2499
    %v2501 = vpop.f32.mrb[0].mxu0
    %2502 = vdwg.mxu0
    %v2503 = vadd.f32 %v2429, %v2500
    %v2505 = vsel %vm1911, %v1815, 0
    %2507 = vmatprep.subr.mxu0 0.0
    %2508 = vmatpush1.msra.mxu0 %v1828
    %2509 = vmatprep.subr.mxu0 0.0
    %2510 = vmatpush1.msra.mxu0 0.0
    %2511 = vmatprep.subr.mxu0 0.0
    %2512 = vmatpush1.msra.mxu0 0.0
    %2513 = vmatprep.subr.mxu0 0.0
    %2514 = vmatpush1.msra.mxu0 0.0
    %2515 = vmatprep.subr.mxu0 0.0
    %2516 = vmatpush1.msra.mxu0 0.0
    %2517 = vmatprep.subr.mxu0 0.0
    %2518 = vmatpush1.msra.mxu0 0.0
    %2519 = vmatprep.subr.mxu0 0.0
    %2520 = vmatpush1.msra.mxu0 0.0
    %2521 = vmatprep.subr.mxu0 0.0
    %2522 = vmatpush1.msra.mxu0 0.0
    %2523 = vmatprep.subr.mxu0 0.0
    %2524 = vmatpush1.msra.mxu0 0.0
    %2525 = vmatprep.subr.mxu0 0.0
    %2526 = vmatpush1.msra.mxu0 0.0
    %2527 = vmatprep.subr.mxu0 0.0
    %2528 = vmatpush1.msra.mxu0 0.0
    %2529 = vmatprep.subr.mxu0 0.0
    %2530 = vmatpush1.msra.mxu0 0.0
    %2531 = vmatprep.subr.mxu0 0.0
    %2532 = vmatpush1.msra.mxu0 0.0
    %2533 = vmatprep.subr.mxu0 0.0
    %2534 = vmatpush1.msra.mxu0 0.0
    %2535 = vmatprep.subr.mxu0 0.0
    %2536 = vmatpush1.msra.mxu0 0.0
    %2537 = vmatprep.subr.mxu0 0.0
    %2538 = vmatpush1.msra.mxu0 0.0
    %2539 = vmatprep.subr.mxu0 0.0
    %2540 = vmatpush1.msra.mxu0 0.0
    %2541 = vmatprep.subr.mxu0 0.0
    %2542 = vmatpush1.msra.mxu0 0.0
    %2543 = vmatprep.subr.mxu0 0.0
    %2544 = vmatpush1.msra.mxu0 0.0
    %2545 = vmatprep.subr.mxu0 0.0
    %2546 = vmatpush1.msra.mxu0 0.0
    %2547 = vmatprep.subr.mxu0 0.0
    %2548 = vmatpush1.msra.mxu0 0.0
    %2549 = vmatprep.subr.mxu0 0.0
    %2550 = vmatpush1.msra.mxu0 0.0
    %2551 = vmatprep.subr.mxu0 0.0
    %2552 = vmatpush1.msra.mxu0 0.0
    %2553 = vmatprep.subr.mxu0 0.0
    %2554 = vmatpush1.msra.mxu0 0.0
    %2555 = vmatprep.subr.mxu0 0.0
    %2556 = vmatpush1.msra.mxu0 0.0
    %2557 = vmatprep.subr.mxu0 0.0
    %2558 = vmatpush1.msra.mxu0 0.0
    %2559 = vmatprep.subr.mxu0 0.0
    %2560 = vmatpush1.msra.mxu0 0.0
    %2561 = vmatprep.subr.mxu0 0.0
    %2562 = vmatpush1.msra.mxu0 0.0
    %2563 = vmatprep.subr.mxu0 0.0
    %2564 = vmatpush1.msra.mxu0 0.0
    %2565 = vmatprep.subr.mxu0 0.0
    %2566 = vmatpush1.msra.mxu0 0.0
    %2567 = vmatprep.subr.mxu0 0.0
    %2568 = vmatpush1.msra.mxu0 0.0
    %2569 = vmatprep.subr.mxu0 0.0
    %2570 = vmatpush1.msra.mxu0 0.0
    %2571 = vmatprep.mubr.f32.mxu0 0.0
    %2572 = vmatmul.mubr.f32.gmra.mrb[0].mxu0 %v2505
    %v2573 = vpop.f32.mrb[0].mxu0
    %v2574 = vadd.f32 0.0, %v2573
    %v2575 = vpop.f32.mrb[0].mxu0
    %2576 = vdwg.mxu0
    %v2577 = vadd.f32 %v2503, %v2574
    %2578 = vst [vmem:[%s11] sm:$0xff] %v2577
    %2580 = vst.msk [vmem:[%s12] sm:$0xff] %vm164, %v1838
    %2582 = vrot.lane.b32.xlu0 %v1159, 96
    %v2583 = vpop.permute.xlu0 %2582
    %2585 = vst.msk [vmem:[%s13] sm:$0xff] %vm164, %v2583
    // Predicated region
    $region78: #{_forward_impl.1} parent=1 // pred_check
      _
    $region79: #{_forward_impl.1} parent=1 // pred_check_branch
      %2587 = sbr.rel (0) target = $region81
    $region80: #{_forward_impl.1} parent=1 // pred_region
      _
    $region81: #{_forward_impl.1} parent=1 // pred_fallthru
      _
    // Predicated region
    $region82: #{_forward_impl.1} parent=1 // pred_check
      _
    $region83: #{_forward_impl.1} parent=1 // pred_check_branch
      %2589 = sbr.rel (0) target = $region85
    $region84: #{_forward_impl.1} parent=1 // pred_region
      _
    $region85: #{_forward_impl.1} parent=1 // pred_fallthru
      _
    // Predicated region
    $region86: #{_forward_impl.1} parent=1 // pred_check
      _
    $region87: #{_forward_impl.1} parent=1 // pred_check_branch
      %2591 = sbr.rel (0) target = $region89
    $region88: #{_forward_impl.1} parent=1 // pred_region
      _
    $region89: #{_forward_impl.1} parent=1 // pred_fallthru
      _
    // Predicated region
    $region90: #{_forward_impl.1} parent=1 // pred_check
      _
    $region91: #{_forward_impl.1} parent=1 // pred_check_branch
      %2593 = sbr.rel (0) target = $region93
    $region92: #{_forward_impl.1} parent=1 // pred_region
      _
    $region93: #{_forward_impl.1} parent=1 // pred_fallthru
      _
    // Predicated region
    $region94: #{_forward_impl.1} parent=1 // pred_check
      _
    $region95: #{_forward_impl.1} parent=1 // pred_check_branch
      %2595 = sbr.rel (0) target = $region97
    $region96: #{_forward_impl.1} parent=1 // pred_region
      _
    $region97: #{_forward_impl.1} parent=1 // pred_fallthru
      _
    // Predicated region
    $region98: #{_forward_impl.1} parent=1 // pred_check
      _
    $region99: #{_forward_impl.1} parent=1 // pred_check_branch
      %2597 = sbr.rel (0) target = $region101
    $region100: #{_forward_impl.1} parent=1 // pred_region
      _
    $region101: #{_forward_impl.1} parent=1 // pred_fallthru
      _
    %2598 = vsyncpa [#allocation3], 1
    %2599 = vsyncpa [#allocation5], 1
    %2600 = vsyncpa [#allocation8], 1
    %2601 = vsyncpa [#allocation11], 1
    %2602 = vsyncpa [#allocation14], 1

</llo_original>
